<compile_context>
chip_gen: v7x
topology: tpu7x:2x2x1
jax: 0.10.0
libtpu: 0.0.40
codegen_flags: <defaults>
</compile_context>

<pallas_src>
import functools
import math

import jax
import jax.numpy as jnp
import numpy as np
from jax import lax
from jax.experimental import pallas as pl
from jax.experimental.pallas import tpu as pltpu


# Per-layer parameters, stacked along a leading (n_layers,) axis.
LAYER_KEYS = (
    "ffn1_ln_g", "ffn1_ln_b", "ffn1_w1", "ffn1_b1", "ffn1_w2", "ffn1_b2",
    "attn_ln_g", "attn_ln_b", "attn_in_w", "attn_in_b", "attn_out_w", "attn_out_b",
    "conv_ln_g", "conv_ln_b", "conv_pw1_w", "conv_pw1_b", "conv_dw_w", "conv_dw_b",
    "conv_bn_scale", "conv_bn_shift", "conv_pw2_w", "conv_pw2_b",
    "ffn2_ln_g", "ffn2_ln_b", "ffn2_w1", "ffn2_b1", "ffn2_w2", "ffn2_b2",
    "final_ln_g", "final_ln_b",
)
# Network-global parameters (resident in VMEM for the whole grid).
GLOBAL_KEYS = ("prenet_w", "prenet_b", "sap_w", "sap_b", "pred_w_eff", "pred_b_eff")


# ----------------------------------------------------------------------------
# In-kernel helpers
# ----------------------------------------------------------------------------

def _sigmoid(x):
    # exp on the EUP; approx reciprocal also on the EUP -> keeps VALU slots free.
    return pl.reciprocal(1.0 + jnp.exp(-x), approx=True)


def _silu(x):
    return x * _sigmoid(x)


def _ln(x, gamma, beta, eps=1e-5):
    mean = jnp.mean(x, axis=-1, keepdims=True)
    c = x - mean
    var = jnp.mean(c * c, axis=-1, keepdims=True)
    return c * lax.rsqrt(var + eps) * gamma + beta


def _mm(x, w):
    # MXU matmul: cast activation to the weight dtype (bf16 for big weights),
    # accumulate in f32.
    return jnp.dot(x.astype(w.dtype), w, preferred_element_type=jnp.float32)


# ----------------------------------------------------------------------------
# Fused kernel: one grid step = (batch element b, conformer layer l)
# ----------------------------------------------------------------------------

def _classifier_kernel(*refs, n_heads, ksize, d_model):
    n_in = 1 + len(GLOBAL_KEYS) + len(LAYER_KEYS)
    mels_ref = refs[0]
    g = dict(zip(GLOBAL_KEYS, refs[1:1 + len(GLOBAL_KEYS)]))
    lr = dict(zip(LAYER_KEYS, refs[1 + len(GLOBAL_KEYS):n_in]))
    out_ref = refs[n_in]          # (1, 1, n_spks) block
    x_ref = refs[n_in + 1]        # (T, D) f32 VMEM scratch (persists across layers)

    T, D = x_ref.shape
    dh = d_model // n_heads
    scale = 1.0 / math.sqrt(dh)
    pad = (ksize - 1) // 2
    l = pl.program_id(1)

    def lp(name):                 # per-layer param, leading layer axis squeezed
        return lr[name][0]

    # ---- prenet: Linear(40 -> D), only on the first layer step of this batch ----
    @pl.when(l == 0)
    def _():
        x_ref[...] = _mm(mels_ref[0], g["prenet_w"][...]) + g["prenet_b"][...]

    x = x_ref[...]                                            # (T, D) f32

    # ---- FFN1 (half-step residual) ----
    h = _ln(x, lp("ffn1_ln_g"), lp("ffn1_ln_b"))
    h = _silu(_mm(h, lp("ffn1_w1")) + lp("ffn1_b1"))
    h = _mm(h, lp("ffn1_w2")) + lp("ffn1_b2")
    x = x + 0.5 * h

    # ---- multi-head self attention (all intermediates stay in VMEM/vregs) ----
    h = _ln(x, lp("attn_ln_g"), lp("attn_ln_b"))
    qkv = _mm(h, lp("attn_in_w")) + lp("attn_in_b")           # (T, 3D)
    heads = []
    for hh in range(n_heads):
        o = hh * dh
        q = qkv[:, o:o + dh] * scale
        k = qkv[:, D + o:D + o + dh]
        v = qkv[:, 2 * D + o:2 * D + o + dh]
        s = lax.dot_general(q, k, (((1,), (1,)), ((), ())),
                            preferred_element_type=jnp.float32)   # (T, T)
        s = s - jnp.max(s, axis=-1, keepdims=True)
        p = jnp.exp(s)
        p = p * pl.reciprocal(jnp.sum(p, axis=-1, keepdims=True), approx=True)
        heads.append(jnp.dot(p, v, preferred_element_type=jnp.float32))
    attn = jnp.concatenate(heads, axis=-1)                    # head merge, (T, D)
    x = x + _mm(attn, lp("attn_out_w")) + lp("attn_out_b")    # fused out-projection

    # ---- convolution module ----
    h = _ln(x, lp("conv_ln_g"), lp("conv_ln_b"))
    h = _mm(h, lp("conv_pw1_w")) + lp("conv_pw1_b")           # 1x1 conv -> (T, 2D)
    u = h[:, :D] * _sigmoid(h[:, D:])                         # GLU over channels
    # depthwise conv over time ("same" padding, odd ksize) via XLU rolls + masks
    t_idx = lax.broadcasted_iota(jnp.int32, (T, 1), 0)
    acc = jnp.zeros((T, D), jnp.float32)
    for kk in range(ksize):                                   # static tap loop
        sft = pad - kk
        rolled = pltpu.roll(u, shift=sft % T, axis=0)         # sublane rotate
        valid = (t_idx >= sft) & (t_idx < T + sft)            # zero-padding mask
        acc = acc + jnp.where(valid, rolled, 0.0) * lr["conv_dw_w"][0, kk]
    y = acc + lp("conv_dw_b")
    y = y * lp("conv_bn_scale") + lp("conv_bn_shift")         # eval BatchNorm1d folded
    y = _silu(y)
    x = x + _mm(y, lp("conv_pw2_w")) + lp("conv_pw2_b")       # 1x1 conv

    # ---- FFN2 (half-step residual) + final layer norm ----
    h = _ln(x, lp("ffn2_ln_g"), lp("ffn2_ln_b"))
    h = _silu(_mm(h, lp("ffn2_w1")) + lp("ffn2_b1"))
    h = _mm(h, lp("ffn2_w2")) + lp("ffn2_b2")
    x = x + 0.5 * h
    x = _ln(x, lp("final_ln_g"), lp("final_ln_b"))
    x_ref[...] = x

    # ---- self-attention pooling + pred head (after the last layer) ----
    @pl.when(l == pl.num_programs(1) - 1)
    def _():
        s = jnp.dot(x, g["sap_w"][...],
                    preferred_element_type=jnp.float32) + g["sap_b"][...]   # (T, 1)
        s = s - jnp.max(s, axis=0, keepdims=True)
        p = jnp.exp(s)
        p = p * pl.reciprocal(jnp.sum(p, axis=0, keepdims=True), approx=True)
        stats = jnp.sum(x * p, axis=0, keepdims=True)                        # (1, D)
        logits = jnp.dot(stats, g["pred_w_eff"][...],
                         preferred_element_type=jnp.float32) + g["pred_b_eff"][...]
        out_ref[...] = jnp.maximum(logits, 0.0)[None]                        # ReLU


# ----------------------------------------------------------------------------
# Wrapper
# ----------------------------------------------------------------------------

def classifier_forward(params, mels, n_heads=4, ksize=9):
    assert ksize % 2 == 1, "depthwise_kernel_size must be odd for 'SAME' padding"
    B, T, feat = mels.shape
    D = params["prenet_w"].shape[1]
    n_layers = params["ffn1_w1"].shape[0]
    n_spks = params["pred_w"].shape[1]
    assert D % n_heads == 0

    # pred_layer: eval-mode BatchNorm1d folded into the final Linear.
    w_eff = params["pred_w"] * params["pred_bn_scale"][:, None]
    b_eff = params["pred_b"] + (params["pred_bn_shift"] @ params["pred_w"])[None, :]

    gvals = {"prenet_w": params["prenet_w"], "prenet_b": params["prenet_b"],
             "sap_w": params["sap_w"], "sap_b": params["sap_b"],
             "pred_w_eff": w_eff, "pred_b_eff": b_eff}

    def const_spec(a):            # whole array, VMEM-resident across the grid
        nd = a.ndim
        return pl.BlockSpec(a.shape, lambda b, l, _n=nd: (0,) * _n)

    def layer_spec(a):            # one layer's slab per grid step (auto double-buffered)
        nd = a.ndim
        return pl.BlockSpec((1,) + a.shape[1:],
                            lambda b, l, _n=nd: (l,) + (0,) * (_n - 1))

    in_specs = ([pl.BlockSpec((1, T, feat), lambda b, l: (b, 0, 0))]
                + [const_spec(gvals[k]) for k in GLOBAL_KEYS]
                + [layer_spec(params[k]) for k in LAYER_KEYS])

    out = pl.pallas_call(
        functools.partial(_classifier_kernel,
                          n_heads=n_heads, ksize=ksize, d_model=D),
        out_shape=jax.ShapeDtypeStruct((B, 1, n_spks), jnp.float32),
        grid_spec=pltpu.PrefetchScalarGridSpec(
            num_scalar_prefetch=0,
            grid=(B, n_layers),                   # batch (parallel) x layer (sequential)
            in_specs=in_specs,
            out_specs=pl.BlockSpec((1, 1, n_spks), lambda b, l: (b, 0, 0)),
            scratch_shapes=[pltpu.VMEM((T, D), jnp.float32)],
        ),
        compiler_params=pltpu.CompilerParams(
            dimension_semantics=("parallel", "arbitrary")),
    )(mels, *[gvals[k] for k in GLOBAL_KEYS], *[params[k] for k in LAYER_KEYS])
    return out.reshape(B, n_spks)


# ----------------------------------------------------------------------------
# Parameter construction (deterministic, synthetic)
# ----------------------------------------------------------------------------

def init_params(key, d_model, n_spks, ffn_dim, n_layers, ksize, feat_dim=40):
    D, F, L, K = d_model, ffn_dim, n_layers, ksize
    ks = iter(jax.random.split(key, 32))
    f32 = jnp.float32

    def mat(fi, fo):              # stacked per-layer matmul weights, bf16 for the MXU
        w = jax.random.normal(next(ks), (L, fi, fo), f32) / np.sqrt(fi)
        return w.astype(jnp.bfloat16)

    zeros = lambda w: jnp.zeros((L, 1, w), f32)
    ones = lambda w: jnp.ones((L, 1, w), f32)

    return {
        # prenet / pooling / prediction head
        "prenet_w": jax.random.normal(next(ks), (feat_dim, D), f32) / np.sqrt(feat_dim),
        "prenet_b": jnp.zeros((1, D), f32),
        "sap_w": jax.random.normal(next(ks), (D, 1), f32) / np.sqrt(D),
        "sap_b": jnp.zeros((1, 1), f32),
        "pred_bn_scale": jnp.ones((D,), f32),     # eval BatchNorm1d (running stats)
        "pred_bn_shift": jnp.zeros((D,), f32),
        "pred_w": jax.random.normal(next(ks), (D, n_spks), f32) / np.sqrt(D),
        "pred_b": jnp.zeros((1, n_spks), f32),
        # conformer layers, stacked along a leading (n_layers,) axis
        "ffn1_ln_g": ones(D), "ffn1_ln_b": zeros(D),
        "ffn1_w1": mat(D, F), "ffn1_b1": zeros(F),
        "ffn1_w2": mat(F, D), "ffn1_b2": zeros(D),
        "attn_ln_g": ones(D), "attn_ln_b": zeros(D),
        "attn_in_w": mat(D, 3 * D), "attn_in_b": zeros(3 * D),
        "attn_out_w": mat(D, D), "attn_out_b": zeros(D),
        "conv_ln_g": ones(D), "conv_ln_b": zeros(D),
        "conv_pw1_w": mat(D, 2 * D), "conv_pw1_b": zeros(2 * D),
        "conv_dw_w": jax.random.normal(next(ks), (L, K, 1, D), f32) / np.sqrt(K),
        "conv_dw_b": zeros(D),
        "conv_bn_scale": ones(D), "conv_bn_shift": zeros(D),   # eval BatchNorm1d folded
        "conv_pw2_w": mat(D, D), "conv_pw2_b": zeros(D),
        "ffn2_ln_g": ones(D), "ffn2_ln_b": zeros(D),
        "ffn2_w1": mat(D, F), "ffn2_b1": zeros(F),
        "ffn2_w2": mat(F, D), "ffn2_b2": zeros(D),
        "final_ln_g": ones(D), "final_ln_b": zeros(D),
    }


# ----------------------------------------------------------------------------

if __name__ == "__main__":
    D_MODEL, FFN_DIM, N_LAYERS, N_HEADS, KSIZE, N_SPKS = 128, 256, 5, 4, 9, 64
    B, T = 2, 16

    key = jax.random.PRNGKey(0)
    k_param, k_in = jax.random.split(key)
    params = init_params(k_param, D_MODEL, N_SPKS, FFN_DIM, N_LAYERS, KSIZE)
    mels = jax.random.normal(k_in, (B, T, 40), jnp.float32)

    fwd = jax.jit(functools.partial(classifier_forward, n_heads=N_HEADS, ksize=KSIZE))
    out = jax.block_until_ready(fwd(params, mels))

    assert out.shape == (B, N_SPKS), out.shape
    assert bool(jnp.all(jnp.isfinite(out)))
    print("KERNEL_OK")
</pallas_src>

<mosaic_0001>
module attributes {stable_mosaic.version = 11 : i64} {
  func.func @_classifier_kernel(%arg0: i32, %arg1: i32, %arg2: memref<1x16x40xf32, #tpu.memory_space<vmem>>, %arg3: memref<40x128xf32, #tpu.memory_space<vmem>>, %arg4: memref<1x128xf32, #tpu.memory_space<vmem>>, %arg5: memref<128x1xf32, #tpu.memory_space<vmem>>, %arg6: memref<1x1xf32, #tpu.memory_space<vmem>>, %arg7: memref<128x64xf32, #tpu.memory_space<vmem>>, %arg8: memref<1x64xf32, #tpu.memory_space<vmem>>, %arg9: memref<1x1x128xf32, #tpu.memory_space<vmem>>, %arg10: memref<1x1x128xf32, #tpu.memory_space<vmem>>, %arg11: memref<1x128x256xbf16, #tpu.memory_space<vmem>>, %arg12: memref<1x1x256xf32, #tpu.memory_space<vmem>>, %arg13: memref<1x256x128xbf16, #tpu.memory_space<vmem>>, %arg14: memref<1x1x128xf32, #tpu.memory_space<vmem>>, %arg15: memref<1x1x128xf32, #tpu.memory_space<vmem>>, %arg16: memref<1x1x128xf32, #tpu.memory_space<vmem>>, %arg17: memref<1x128x384xbf16, #tpu.memory_space<vmem>>, %arg18: memref<1x1x384xf32, #tpu.memory_space<vmem>>, %arg19: memref<1x128x128xbf16, #tpu.memory_space<vmem>>, %arg20: memref<1x1x128xf32, #tpu.memory_space<vmem>>, %arg21: memref<1x1x128xf32, #tpu.memory_space<vmem>>, %arg22: memref<1x1x128xf32, #tpu.memory_space<vmem>>, %arg23: memref<1x128x256xbf16, #tpu.memory_space<vmem>>, %arg24: memref<1x1x256xf32, #tpu.memory_space<vmem>>, %arg25: memref<1x9x1x128xf32, #tpu.memory_space<vmem>>, %arg26: memref<1x1x128xf32, #tpu.memory_space<vmem>>, %arg27: memref<1x1x128xf32, #tpu.memory_space<vmem>>, %arg28: memref<1x1x128xf32, #tpu.memory_space<vmem>>, %arg29: memref<1x128x128xbf16, #tpu.memory_space<vmem>>, %arg30: memref<1x1x128xf32, #tpu.memory_space<vmem>>, %arg31: memref<1x1x128xf32, #tpu.memory_space<vmem>>, %arg32: memref<1x1x128xf32, #tpu.memory_space<vmem>>, %arg33: memref<1x128x256xbf16, #tpu.memory_space<vmem>>, %arg34: memref<1x1x256xf32, #tpu.memory_space<vmem>>, %arg35: memref<1x256x128xbf16, #tpu.memory_space<vmem>>, %arg36: memref<1x1x128xf32, #tpu.memory_space<vmem>>, %arg37: memref<1x1x128xf32, #tpu.memory_space<vmem>>, %arg38: memref<1x1x128xf32, #tpu.memory_space<vmem>>, %arg39: memref<1x1x64xf32, #tpu.memory_space<vmem>>, %arg40: memref<16x128xf32, #tpu.memory_space<vmem>>) attributes {dimension_semantics = [#tpu.dimension_semantics<parallel>, #tpu.dimension_semantics<arbitrary>], iteration_bounds = array<i64: 2, 5>, scalar_prefetch = 0 : i64, scratch_operands = 1 : i64, tpu.core_type = #tpu.core_type<tc>, window_params = [{transform_indices = @transform_0, window_bounds = array<i64: 1, 16, 40>}, {pipeline_mode = #tpu.pipeline_mode<synchronous>, transform_indices = @transform_1, window_bounds = array<i64: 40, 128>}, {pipeline_mode = #tpu.pipeline_mode<synchronous>, transform_indices = @transform_2, window_bounds = array<i64: 1, 128>}, {pipeline_mode = #tpu.pipeline_mode<synchronous>, transform_indices = @transform_3, window_bounds = array<i64: 128, 1>}, {pipeline_mode = #tpu.pipeline_mode<synchronous>, transform_indices = @transform_4, window_bounds = array<i64: 1, 1>}, {pipeline_mode = #tpu.pipeline_mode<synchronous>, transform_indices = @transform_5, window_bounds = array<i64: 128, 64>}, {pipeline_mode = #tpu.pipeline_mode<synchronous>, transform_indices = @transform_6, window_bounds = array<i64: 1, 64>}, {transform_indices = @transform_7, window_bounds = array<i64: 1, 1, 128>}, {transform_indices = @transform_8, window_bounds = array<i64: 1, 1, 128>}, {transform_indices = @transform_9, window_bounds = array<i64: 1, 128, 256>}, {transform_indices = @transform_10, window_bounds = array<i64: 1, 1, 256>}, {transform_indices = @transform_11, window_bounds = array<i64: 1, 256, 128>}, {transform_indices = @transform_12, window_bounds = array<i64: 1, 1, 128>}, {transform_indices = @transform_13, window_bounds = array<i64: 1, 1, 128>}, {transform_indices = @transform_14, window_bounds = array<i64: 1, 1, 128>}, {transform_indices = @transform_15, window_bounds = array<i64: 1, 128, 384>}, {transform_indices = @transform_16, window_bounds = array<i64: 1, 1, 384>}, {transform_indices = @transform_17, window_bounds = array<i64: 1, 128, 128>}, {transform_indices = @transform_18, window_bounds = array<i64: 1, 1, 128>}, {transform_indices = @transform_19, window_bounds = array<i64: 1, 1, 128>}, {transform_indices = @transform_20, window_bounds = array<i64: 1, 1, 128>}, {transform_indices = @transform_21, window_bounds = array<i64: 1, 128, 256>}, {transform_indices = @transform_22, window_bounds = array<i64: 1, 1, 256>}, {transform_indices = @transform_23, window_bounds = array<i64: 1, 9, 1, 128>}, {transform_indices = @transform_24, window_bounds = array<i64: 1, 1, 128>}, {transform_indices = @transform_25, window_bounds = array<i64: 1, 1, 128>}, {transform_indices = @transform_26, window_bounds = array<i64: 1, 1, 128>}, {transform_indices = @transform_27, window_bounds = array<i64: 1, 128, 128>}, {transform_indices = @transform_28, window_bounds = array<i64: 1, 1, 128>}, {transform_indices = @transform_29, window_bounds = array<i64: 1, 1, 128>}, {transform_indices = @transform_30, window_bounds = array<i64: 1, 1, 128>}, {transform_indices = @transform_31, window_bounds = array<i64: 1, 128, 256>}, {transform_indices = @transform_32, window_bounds = array<i64: 1, 1, 256>}, {transform_indices = @transform_33, window_bounds = array<i64: 1, 256, 128>}, {transform_indices = @transform_34, window_bounds = array<i64: 1, 1, 128>}, {transform_indices = @transform_35, window_bounds = array<i64: 1, 1, 128>}, {transform_indices = @transform_36, window_bounds = array<i64: 1, 1, 128>}, {transform_indices = @transform_37, window_bounds = array<i64: 1, 1, 64>}]} {
    %c0_i32 = arith.constant 0 : i32
    %0 = arith.cmpi eq, %arg1, %c0_i32 : i32
    %1 = arith.extui %0 : i1 to i32
    %c0_i32_0 = arith.constant 0 : i32
    %2 = arith.cmpi ne, %1, %c0_i32_0 : i32
    scf.if %2 {
      %c0_203 = arith.constant 0 : index
      %c0_204 = arith.constant 0 : index
      %c0_205 = arith.constant 0 : index
      %448 = vector.load %arg2[%c0_203, %c0_204, %c0_205] : memref<1x16x40xf32, #tpu.memory_space<vmem>>, vector<1x16x40xf32>
      %449 = vector.shape_cast %448 : vector<1x16x40xf32> to vector<16x40xf32>
      %c0_206 = arith.constant 0 : index
      %c0_207 = arith.constant 0 : index
      %450 = vector.load %arg3[%c0_206, %c0_207] : memref<40x128xf32, #tpu.memory_space<vmem>>, vector<40x128xf32>
      %cst_208 = arith.constant dense<0.000000e+00> : vector<16x128xf32>
      %451 = tpu.matmul %449, %450, %cst_208 {dimension_numbers = #tpu.dot_dimension_numbers<[1], [0], [0], [1], [0, 0, 1, 1], [], []>} : vector<16x40xf32>, vector<40x128xf32>, vector<16x128xf32> -> vector<16x128xf32>
      %c0_209 = arith.constant 0 : index
      %c0_210 = arith.constant 0 : index
      %452 = vector.load %arg4[%c0_209, %c0_210] : memref<1x128xf32, #tpu.memory_space<vmem>>, vector<1x128xf32>
      %453 = vector.broadcast %452 : vector<1x128xf32> to vector<16x128xf32>
      %454 = arith.addf %451, %453 : vector<16x128xf32>
      %c0_211 = arith.constant 0 : index
      %c0_212 = arith.constant 0 : index
      %455 = vector.load %arg40[%c0_211, %c0_212] : memref<16x128xf32, #tpu.memory_space<vmem>>, vector<16x128xf32>
      tpu.vector_store %arg40[%c0_211, %c0_212], %454 {strides = array<i32>} : memref<16x128xf32, #tpu.memory_space<vmem>>, vector<16x128xf32>,
    } else {
    }
    %c0 = arith.constant 0 : index
    %c0_1 = arith.constant 0 : index
    %3 = vector.load %arg40[%c0, %c0_1] : memref<16x128xf32, #tpu.memory_space<vmem>>, vector<16x128xf32>
    %c0_2 = arith.constant 0 : index
    %c0_3 = arith.constant 0 : index
    %c0_4 = arith.constant 0 : index
    %4 = vector.load %arg9[%c0_2, %c0_3, %c0_4] : memref<1x1x128xf32, #tpu.memory_space<vmem>>, vector<1x1x128xf32>
    %5 = vector.shape_cast %4 : vector<1x1x128xf32> to vector<1x128xf32>
    %c0_5 = arith.constant 0 : index
    %c0_6 = arith.constant 0 : index
    %c0_7 = arith.constant 0 : index
    %6 = vector.load %arg10[%c0_5, %c0_6, %c0_7] : memref<1x1x128xf32, #tpu.memory_space<vmem>>, vector<1x1x128xf32>
    %7 = vector.shape_cast %6 : vector<1x1x128xf32> to vector<1x128xf32>
    %cst = arith.constant dense<0.000000e+00> : vector<16xf32>
    %8 = vector.multi_reduction <add>, %3, %cst [1] : vector<16x128xf32> to vector<16xf32>
    %9 = vector.shape_cast %8 : vector<16xf32> to vector<16x1xf32>
    %cst_8 = arith.constant 1.280000e+02 : f32
    %10 = vector.broadcast %cst_8 : f32 to vector<16x1xf32>
    %11 = arith.divf %9, %10 : vector<16x1xf32>
    %12 = vector.broadcast %11 : vector<16x1xf32> to vector<16x128xf32>
    %13 = arith.subf %3, %12 : vector<16x128xf32>
    %14 = arith.mulf %13, %13 : vector<16x128xf32>
    %cst_9 = arith.constant dense<0.000000e+00> : vector<16xf32>
    %15 = vector.multi_reduction <add>, %14, %cst_9 [1] : vector<16x128xf32> to vector<16xf32>
    %16 = vector.shape_cast %15 : vector<16xf32> to vector<16x1xf32>
    %cst_10 = arith.constant 1.280000e+02 : f32
    %17 = vector.broadcast %cst_10 : f32 to vector<16x1xf32>
    %18 = arith.divf %16, %17 : vector<16x1xf32>
    %cst_11 = arith.constant 9.99999974E-6 : f32
    %19 = vector.broadcast %cst_11 : f32 to vector<16x1xf32>
    %20 = arith.addf %18, %19 : vector<16x1xf32>
    %21 = math.rsqrt %20 : vector<16x1xf32>
    %22 = vector.broadcast %21 : vector<16x1xf32> to vector<16x128xf32>
    %23 = arith.mulf %13, %22 : vector<16x128xf32>
    %24 = vector.broadcast %5 : vector<1x128xf32> to vector<16x128xf32>
    %25 = arith.mulf %23, %24 : vector<16x128xf32>
    %26 = vector.broadcast %7 : vector<1x128xf32> to vector<16x128xf32>
    %27 = arith.addf %25, %26 : vector<16x128xf32>
    %c0_12 = arith.constant 0 : index
    %c0_13 = arith.constant 0 : index
    %c0_14 = arith.constant 0 : index
    %28 = vector.load %arg11[%c0_12, %c0_13, %c0_14] : memref<1x128x256xbf16, #tpu.memory_space<vmem>>, vector<1x128x256xbf16>
    %29 = vector.shape_cast %28 : vector<1x128x256xbf16> to vector<128x256xbf16>
    %30 = arith.truncf %27 : vector<16x128xf32> to vector<16x128xbf16>
    %cst_15 = arith.constant dense<0.000000e+00> : vector<16x256xf32>
    %31 = tpu.matmul %30, %29, %cst_15 {dimension_numbers = #tpu.dot_dimension_numbers<[1], [0], [0], [1], [0, 0, 1, 1], [], []>} : vector<16x128xbf16>, vector<128x256xbf16>, vector<16x256xf32> -> vector<16x256xf32>
    %c0_16 = arith.constant 0 : index
    %c0_17 = arith.constant 0 : index
    %c0_18 = arith.constant 0 : index
    %32 = vector.load %arg12[%c0_16, %c0_17, %c0_18] : memref<1x1x256xf32, #tpu.memory_space<vmem>>, vector<1x1x256xf32>
    %33 = vector.shape_cast %32 : vector<1x1x256xf32> to vector<1x256xf32>
    %34 = vector.broadcast %33 : vector<1x256xf32> to vector<16x256xf32>
    %35 = arith.addf %31, %34 : vector<16x256xf32>
    %cst_19 = arith.constant 0.000000e+00 : f32
    %36 = vector.broadcast %cst_19 : f32 to vector<16x256xf32>
    %37 = arith.subf %36, %35 : vector<16x256xf32>
    %38 = math.exp %37 : vector<16x256xf32>
    %cst_20 = arith.constant 1.000000e+00 : f32
    %39 = vector.broadcast %cst_20 : f32 to vector<16x256xf32>
    %40 = arith.addf %39, %38 : vector<16x256xf32>
    %41 = tpu.reciprocal %40 {approx = true} : vector<16x256xf32> -> vector<16x256xf32>
    %42 = arith.mulf %35, %41 : vector<16x256xf32>
    %c0_21 = arith.constant 0 : index
    %c0_22 = arith.constant 0 : index
    %c0_23 = arith.constant 0 : index
    %43 = vector.load %arg13[%c0_21, %c0_22, %c0_23] : memref<1x256x128xbf16, #tpu.memory_space<vmem>>, vector<1x256x128xbf16>
    %44 = vector.shape_cast %43 : vector<1x256x128xbf16> to vector<256x128xbf16>
    %45 = arith.truncf %42 : vector<16x256xf32> to vector<16x256xbf16>
    %cst_24 = arith.constant dense<0.000000e+00> : vector<16x128xf32>
    %46 = tpu.matmul %45, %44, %cst_24 {dimension_numbers = #tpu.dot_dimension_numbers<[1], [0], [0], [1], [0, 0, 1, 1], [], []>} : vector<16x256xbf16>, vector<256x128xbf16>, vector<16x128xf32> -> vector<16x128xf32>
    %c0_25 = arith.constant 0 : index
    %c0_26 = arith.constant 0 : index
    %c0_27 = arith.constant 0 : index
    %47 = vector.load %arg14[%c0_25, %c0_26, %c0_27] : memref<1x1x128xf32, #tpu.memory_space<vmem>>, vector<1x1x128xf32>
    %48 = vector.shape_cast %47 : vector<1x1x128xf32> to vector<1x128xf32>
    %49 = vector.broadcast %48 : vector<1x128xf32> to vector<16x128xf32>
    %50 = arith.addf %46, %49 : vector<16x128xf32>
    %cst_28 = arith.constant 5.000000e-01 : f32
    %51 = vector.broadcast %cst_28 : f32 to vector<16x128xf32>
    %52 = arith.mulf %51, %50 : vector<16x128xf32>
    %53 = arith.addf %3, %52 : vector<16x128xf32>
    %c0_29 = arith.constant 0 : index
    %c0_30 = arith.constant 0 : index
    %c0_31 = arith.constant 0 : index
    %54 = vector.load %arg15[%c0_29, %c0_30, %c0_31] : memref<1x1x128xf32, #tpu.memory_space<vmem>>, vector<1x1x128xf32>
    %55 = vector.shape_cast %54 : vector<1x1x128xf32> to vector<1x128xf32>
    %c0_32 = arith.constant 0 : index
    %c0_33 = arith.constant 0 : index
    %c0_34 = arith.constant 0 : index
    %56 = vector.load %arg16[%c0_32, %c0_33, %c0_34] : memref<1x1x128xf32, #tpu.memory_space<vmem>>, vector<1x1x128xf32>
    %57 = vector.shape_cast %56 : vector<1x1x128xf32> to vector<1x128xf32>
    %cst_35 = arith.constant dense<0.000000e+00> : vector<16xf32>
    %58 = vector.multi_reduction <add>, %53, %cst_35 [1] : vector<16x128xf32> to vector<16xf32>
    %59 = vector.shape_cast %58 : vector<16xf32> to vector<16x1xf32>
    %cst_36 = arith.constant 1.280000e+02 : f32
    %60 = vector.broadcast %cst_36 : f32 to vector<16x1xf32>
    %61 = arith.divf %59, %60 : vector<16x1xf32>
    %62 = vector.broadcast %61 : vector<16x1xf32> to vector<16x128xf32>
    %63 = arith.subf %53, %62 : vector<16x128xf32>
    %64 = arith.mulf %63, %63 : vector<16x128xf32>
    %cst_37 = arith.constant dense<0.000000e+00> : vector<16xf32>
    %65 = vector.multi_reduction <add>, %64, %cst_37 [1] : vector<16x128xf32> to vector<16xf32>
    %66 = vector.shape_cast %65 : vector<16xf32> to vector<16x1xf32>
    %cst_38 = arith.constant 1.280000e+02 : f32
    %67 = vector.broadcast %cst_38 : f32 to vector<16x1xf32>
    %68 = arith.divf %66, %67 : vector<16x1xf32>
    %cst_39 = arith.constant 9.99999974E-6 : f32
    %69 = vector.broadcast %cst_39 : f32 to vector<16x1xf32>
    %70 = arith.addf %68, %69 : vector<16x1xf32>
    %71 = math.rsqrt %70 : vector<16x1xf32>
    %72 = vector.broadcast %71 : vector<16x1xf32> to vector<16x128xf32>
    %73 = arith.mulf %63, %72 : vector<16x128xf32>
    %74 = vector.broadcast %55 : vector<1x128xf32> to vector<16x128xf32>
    %75 = arith.mulf %73, %74 : vector<16x128xf32>
    %76 = vector.broadcast %57 : vector<1x128xf32> to vector<16x128xf32>
    %77 = arith.addf %75, %76 : vector<16x128xf32>
    %c0_40 = arith.constant 0 : index
    %c0_41 = arith.constant 0 : index
    %c0_42 = arith.constant 0 : index
    %78 = vector.load %arg17[%c0_40, %c0_41, %c0_42] : memref<1x128x384xbf16, #tpu.memory_space<vmem>>, vector<1x128x384xbf16>
    %79 = vector.shape_cast %78 : vector<1x128x384xbf16> to vector<128x384xbf16>
    %80 = arith.truncf %77 : vector<16x128xf32> to vector<16x128xbf16>
    %cst_43 = arith.constant dense<0.000000e+00> : vector<16x384xf32>
    %81 = tpu.matmul %80, %79, %cst_43 {dimension_numbers = #tpu.dot_dimension_numbers<[1], [0], [0], [1], [0, 0, 1, 1], [], []>} : vector<16x128xbf16>, vector<128x384xbf16>, vector<16x384xf32> -> vector<16x384xf32>
    %c0_44 = arith.constant 0 : index
    %c0_45 = arith.constant 0 : index
    %c0_46 = arith.constant 0 : index
    %82 = vector.load %arg18[%c0_44, %c0_45, %c0_46] : memref<1x1x384xf32, #tpu.memory_space<vmem>>, vector<1x1x384xf32>
    %83 = vector.shape_cast %82 : vector<1x1x384xf32> to vector<1x384xf32>
    %84 = vector.broadcast %83 : vector<1x384xf32> to vector<16x384xf32>
    %85 = arith.addf %81, %84 : vector<16x384xf32>
    %86 = vector.extract_strided_slice %85 {offsets = [0, 0], sizes = [16, 32], strides = [1, 1]} : vector<16x384xf32> to vector<16x32xf32>
    %cst_47 = arith.constant 0.176776692 : f32
    %87 = vector.broadcast %cst_47 : f32 to vector<16x32xf32>
    %88 = arith.mulf %86, %87 : vector<16x32xf32>
    %89 = vector.extract_strided_slice %85 {offsets = [0, 128], sizes = [16, 32], strides = [1, 1]} : vector<16x384xf32> to vector<16x32xf32>
    %90 = vector.extract_strided_slice %85 {offsets = [0, 256], sizes = [16, 32], strides = [1, 1]} : vector<16x384xf32> to vector<16x32xf32>
    %cst_48 = arith.constant dense<0.000000e+00> : vector<16x16xf32>
    %91 = tpu.matmul %88, %89, %cst_48 {dimension_numbers = #tpu.dot_dimension_numbers<[1], [1], [0], [0], [0, 0, 1, 0], [], []>} : vector<16x32xf32>, vector<16x32xf32>, vector<16x16xf32> -> vector<16x16xf32>
    %cst_49 = arith.constant dense<0xFF800000> : vector<16xf32>
    %92 = vector.multi_reduction <maximumf>, %91, %cst_49 [1] : vector<16x16xf32> to vector<16xf32>
    %93 = vector.shape_cast %92 : vector<16xf32> to vector<16x1xf32>
    %94 = vector.broadcast %93 : vector<16x1xf32> to vector<16x16xf32>
    %95 = arith.subf %91, %94 : vector<16x16xf32>
    %96 = math.exp %95 : vector<16x16xf32>
    %cst_50 = arith.constant dense<0.000000e+00> : vector<16xf32>
    %97 = vector.multi_reduction <add>, %96, %cst_50 [1] : vector<16x16xf32> to vector<16xf32>
    %98 = vector.shape_cast %97 : vector<16xf32> to vector<16x1xf32>
    %99 = tpu.reciprocal %98 {approx = true} : vector<16x1xf32> -> vector<16x1xf32>
    %100 = vector.broadcast %99 : vector<16x1xf32> to vector<16x16xf32>
    %101 = arith.mulf %96, %100 : vector<16x16xf32>
    %cst_51 = arith.constant dense<0.000000e+00> : vector<16x32xf32>
    %102 = tpu.matmul %101, %90, %cst_51 {dimension_numbers = #tpu.dot_dimension_numbers<[1], [0], [0], [1], [0, 0, 1, 1], [], []>} : vector<16x16xf32>, vector<16x32xf32>, vector<16x32xf32> -> vector<16x32xf32>
    %103 = vector.extract_strided_slice %85 {offsets = [0, 32], sizes = [16, 32], strides = [1, 1]} : vector<16x384xf32> to vector<16x32xf32>
    %cst_52 = arith.constant 0.176776692 : f32
    %104 = vector.broadcast %cst_52 : f32 to vector<16x32xf32>
    %105 = arith.mulf %103, %104 : vector<16x32xf32>
    %106 = vector.extract_strided_slice %85 {offsets = [0, 160], sizes = [16, 32], strides = [1, 1]} : vector<16x384xf32> to vector<16x32xf32>
    %107 = vector.extract_strided_slice %85 {offsets = [0, 288], sizes = [16, 32], strides = [1, 1]} : vector<16x384xf32> to vector<16x32xf32>
    %cst_53 = arith.constant dense<0.000000e+00> : vector<16x16xf32>
    %108 = tpu.matmul %105, %106, %cst_53 {dimension_numbers = #tpu.dot_dimension_numbers<[1], [1], [0], [0], [0, 0, 1, 0], [], []>} : vector<16x32xf32>, vector<16x32xf32>, vector<16x16xf32> -> vector<16x16xf32>
    %cst_54 = arith.constant dense<0xFF800000> : vector<16xf32>
    %109 = vector.multi_reduction <maximumf>, %108, %cst_54 [1] : vector<16x16xf32> to vector<16xf32>
    %110 = vector.shape_cast %109 : vector<16xf32> to vector<16x1xf32>
    %111 = vector.broadcast %110 : vector<16x1xf32> to vector<16x16xf32>
    %112 = arith.subf %108, %111 : vector<16x16xf32>
    %113 = math.exp %112 : vector<16x16xf32>
    %cst_55 = arith.constant dense<0.000000e+00> : vector<16xf32>
    %114 = vector.multi_reduction <add>, %113, %cst_55 [1] : vector<16x16xf32> to vector<16xf32>
    %115 = vector.shape_cast %114 : vector<16xf32> to vector<16x1xf32>
    %116 = tpu.reciprocal %115 {approx = true} : vector<16x1xf32> -> vector<16x1xf32>
    %117 = vector.broadcast %116 : vector<16x1xf32> to vector<16x16xf32>
    %118 = arith.mulf %113, %117 : vector<16x16xf32>
    %cst_56 = arith.constant dense<0.000000e+00> : vector<16x32xf32>
    %119 = tpu.matmul %118, %107, %cst_56 {dimension_numbers = #tpu.dot_dimension_numbers<[1], [0], [0], [1], [0, 0, 1, 1], [], []>} : vector<16x16xf32>, vector<16x32xf32>, vector<16x32xf32> -> vector<16x32xf32>
    %120 = vector.extract_strided_slice %85 {offsets = [0, 64], sizes = [16, 32], strides = [1, 1]} : vector<16x384xf32> to vector<16x32xf32>
    %cst_57 = arith.constant 0.176776692 : f32
    %121 = vector.broadcast %cst_57 : f32 to vector<16x32xf32>
    %122 = arith.mulf %120, %121 : vector<16x32xf32>
    %123 = vector.extract_strided_slice %85 {offsets = [0, 192], sizes = [16, 32], strides = [1, 1]} : vector<16x384xf32> to vector<16x32xf32>
    %124 = vector.extract_strided_slice %85 {offsets = [0, 320], sizes = [16, 32], strides = [1, 1]} : vector<16x384xf32> to vector<16x32xf32>
    %cst_58 = arith.constant dense<0.000000e+00> : vector<16x16xf32>
    %125 = tpu.matmul %122, %123, %cst_58 {dimension_numbers = #tpu.dot_dimension_numbers<[1], [1], [0], [0], [0, 0, 1, 0], [], []>} : vector<16x32xf32>, vector<16x32xf32>, vector<16x16xf32> -> vector<16x16xf32>
    %cst_59 = arith.constant dense<0xFF800000> : vector<16xf32>
    %126 = vector.multi_reduction <maximumf>, %125, %cst_59 [1] : vector<16x16xf32> to vector<16xf32>
    %127 = vector.shape_cast %126 : vector<16xf32> to vector<16x1xf32>
    %128 = vector.broadcast %127 : vector<16x1xf32> to vector<16x16xf32>
    %129 = arith.subf %125, %128 : vector<16x16xf32>
    %130 = math.exp %129 : vector<16x16xf32>
    %cst_60 = arith.constant dense<0.000000e+00> : vector<16xf32>
    %131 = vector.multi_reduction <add>, %130, %cst_60 [1] : vector<16x16xf32> to vector<16xf32>
    %132 = vector.shape_cast %131 : vector<16xf32> to vector<16x1xf32>
    %133 = tpu.reciprocal %132 {approx = true} : vector<16x1xf32> -> vector<16x1xf32>
    %134 = vector.broadcast %133 : vector<16x1xf32> to vector<16x16xf32>
    %135 = arith.mulf %130, %134 : vector<16x16xf32>
    %cst_61 = arith.constant dense<0.000000e+00> : vector<16x32xf32>
    %136 = tpu.matmul %135, %124, %cst_61 {dimension_numbers = #tpu.dot_dimension_numbers<[1], [0], [0], [1], [0, 0, 1, 1], [], []>} : vector<16x16xf32>, vector<16x32xf32>, vector<16x32xf32> -> vector<16x32xf32>
    %137 = vector.extract_strided_slice %85 {offsets = [0, 96], sizes = [16, 32], strides = [1, 1]} : vector<16x384xf32> to vector<16x32xf32>
    %cst_62 = arith.constant 0.176776692 : f32
    %138 = vector.broadcast %cst_62 : f32 to vector<16x32xf32>
    %139 = arith.mulf %137, %138 : vector<16x32xf32>
    %140 = vector.extract_strided_slice %85 {offsets = [0, 224], sizes = [16, 32], strides = [1, 1]} : vector<16x384xf32> to vector<16x32xf32>
    %141 = vector.extract_strided_slice %85 {offsets = [0, 352], sizes = [16, 32], strides = [1, 1]} : vector<16x384xf32> to vector<16x32xf32>
    %cst_63 = arith.constant dense<0.000000e+00> : vector<16x16xf32>
    %142 = tpu.matmul %139, %140, %cst_63 {dimension_numbers = #tpu.dot_dimension_numbers<[1], [1], [0], [0], [0, 0, 1, 0], [], []>} : vector<16x32xf32>, vector<16x32xf32>, vector<16x16xf32> -> vector<16x16xf32>
    %cst_64 = arith.constant dense<0xFF800000> : vector<16xf32>
    %143 = vector.multi_reduction <maximumf>, %142, %cst_64 [1] : vector<16x16xf32> to vector<16xf32>
    %144 = vector.shape_cast %143 : vector<16xf32> to vector<16x1xf32>
    %145 = vector.broadcast %144 : vector<16x1xf32> to vector<16x16xf32>
    %146 = arith.subf %142, %145 : vector<16x16xf32>
    %147 = math.exp %146 : vector<16x16xf32>
    %cst_65 = arith.constant dense<0.000000e+00> : vector<16xf32>
    %148 = vector.multi_reduction <add>, %147, %cst_65 [1] : vector<16x16xf32> to vector<16xf32>
    %149 = vector.shape_cast %148 : vector<16xf32> to vector<16x1xf32>
    %150 = tpu.reciprocal %149 {approx = true} : vector<16x1xf32> -> vector<16x1xf32>
    %151 = vector.broadcast %150 : vector<16x1xf32> to vector<16x16xf32>
    %152 = arith.mulf %147, %151 : vector<16x16xf32>
    %cst_66 = arith.constant dense<0.000000e+00> : vector<16x32xf32>
    %153 = tpu.matmul %152, %141, %cst_66 {dimension_numbers = #tpu.dot_dimension_numbers<[1], [0], [0], [1], [0, 0, 1, 1], [], []>} : vector<16x16xf32>, vector<16x32xf32>, vector<16x32xf32> -> vector<16x32xf32>
    %154 = tpu.concatenate %102, %119, %136, %153 in 1 : vector<16x32xf32>, vector<16x32xf32>, vector<16x32xf32>, vector<16x32xf32> -> vector<16x128xf32>
    %c0_67 = arith.constant 0 : index
    %c0_68 = arith.constant 0 : index
    %c0_69 = arith.constant 0 : index
    %155 = vector.load %arg19[%c0_67, %c0_68, %c0_69] : memref<1x128x128xbf16, #tpu.memory_space<vmem>>, vector<1x128x128xbf16>
    %156 = vector.shape_cast %155 : vector<1x128x128xbf16> to vector<128x128xbf16>
    %157 = arith.truncf %154 : vector<16x128xf32> to vector<16x128xbf16>
    %cst_70 = arith.constant dense<0.000000e+00> : vector<16x128xf32>
    %158 = tpu.matmul %157, %156, %cst_70 {dimension_numbers = #tpu.dot_dimension_numbers<[1], [0], [0], [1], [0, 0, 1, 1], [], []>} : vector<16x128xbf16>, vector<128x128xbf16>, vector<16x128xf32> -> vector<16x128xf32>
    %159 = arith.addf %53, %158 : vector<16x128xf32>
    %c0_71 = arith.constant 0 : index
    %c0_72 = arith.constant 0 : index
    %c0_73 = arith.constant 0 : index
    %160 = vector.load %arg20[%c0_71, %c0_72, %c0_73] : memref<1x1x128xf32, #tpu.memory_space<vmem>>, vector<1x1x128xf32>
    %161 = vector.shape_cast %160 : vector<1x1x128xf32> to vector<1x128xf32>
    %162 = vector.broadcast %161 : vector<1x128xf32> to vector<16x128xf32>
    %163 = arith.addf %159, %162 : vector<16x128xf32>
    %c0_74 = arith.constant 0 : index
    %c0_75 = arith.constant 0 : index
    %c0_76 = arith.constant 0 : index
    %164 = vector.load %arg21[%c0_74, %c0_75, %c0_76] : memref<1x1x128xf32, #tpu.memory_space<vmem>>, vector<1x1x128xf32>
    %165 = vector.shape_cast %164 : vector<1x1x128xf32> to vector<1x128xf32>
    %c0_77 = arith.constant 0 : index
    %c0_78 = arith.constant 0 : index
    %c0_79 = arith.constant 0 : index
    %166 = vector.load %arg22[%c0_77, %c0_78, %c0_79] : memref<1x1x128xf32, #tpu.memory_space<vmem>>, vector<1x1x128xf32>
    %167 = vector.shape_cast %166 : vector<1x1x128xf32> to vector<1x128xf32>
    %cst_80 = arith.constant dense<0.000000e+00> : vector<16xf32>
    %168 = vector.multi_reduction <add>, %163, %cst_80 [1] : vector<16x128xf32> to vector<16xf32>
    %169 = vector.shape_cast %168 : vector<16xf32> to vector<16x1xf32>
    %cst_81 = arith.constant 1.280000e+02 : f32
    %170 = vector.broadcast %cst_81 : f32 to vector<16x1xf32>
    %171 = arith.divf %169, %170 : vector<16x1xf32>
    %172 = vector.broadcast %171 : vector<16x1xf32> to vector<16x128xf32>
    %173 = arith.subf %163, %172 : vector<16x128xf32>
    %174 = arith.mulf %173, %173 : vector<16x128xf32>
    %cst_82 = arith.constant dense<0.000000e+00> : vector<16xf32>
    %175 = vector.multi_reduction <add>, %174, %cst_82 [1] : vector<16x128xf32> to vector<16xf32>
    %176 = vector.shape_cast %175 : vector<16xf32> to vector<16x1xf32>
    %cst_83 = arith.constant 1.280000e+02 : f32
    %177 = vector.broadcast %cst_83 : f32 to vector<16x1xf32>
    %178 = arith.divf %176, %177 : vector<16x1xf32>
    %cst_84 = arith.constant 9.99999974E-6 : f32
    %179 = vector.broadcast %cst_84 : f32 to vector<16x1xf32>
    %180 = arith.addf %178, %179 : vector<16x1xf32>
    %181 = math.rsqrt %180 : vector<16x1xf32>
    %182 = vector.broadcast %181 : vector<16x1xf32> to vector<16x128xf32>
    %183 = arith.mulf %173, %182 : vector<16x128xf32>
    %184 = vector.broadcast %165 : vector<1x128xf32> to vector<16x128xf32>
    %185 = arith.mulf %183, %184 : vector<16x128xf32>
    %186 = vector.broadcast %167 : vector<1x128xf32> to vector<16x128xf32>
    %187 = arith.addf %185, %186 : vector<16x128xf32>
    %c0_85 = arith.constant 0 : index
    %c0_86 = arith.constant 0 : index
    %c0_87 = arith.constant 0 : index
    %188 = vector.load %arg23[%c0_85, %c0_86, %c0_87] : memref<1x128x256xbf16, #tpu.memory_space<vmem>>, vector<1x128x256xbf16>
    %189 = vector.shape_cast %188 : vector<1x128x256xbf16> to vector<128x256xbf16>
    %190 = arith.truncf %187 : vector<16x128xf32> to vector<16x128xbf16>
    %cst_88 = arith.constant dense<0.000000e+00> : vector<16x256xf32>
    %191 = tpu.matmul %190, %189, %cst_88 {dimension_numbers = #tpu.dot_dimension_numbers<[1], [0], [0], [1], [0, 0, 1, 1], [], []>} : vector<16x128xbf16>, vector<128x256xbf16>, vector<16x256xf32> -> vector<16x256xf32>
    %c0_89 = arith.constant 0 : index
    %c0_90 = arith.constant 0 : index
    %c0_91 = arith.constant 0 : index
    %192 = vector.load %arg24[%c0_89, %c0_90, %c0_91] : memref<1x1x256xf32, #tpu.memory_space<vmem>>, vector<1x1x256xf32>
    %193 = vector.shape_cast %192 : vector<1x1x256xf32> to vector<1x256xf32>
    %194 = vector.broadcast %193 : vector<1x256xf32> to vector<16x256xf32>
    %195 = arith.addf %191, %194 : vector<16x256xf32>
    %196 = vector.extract_strided_slice %195 {offsets = [0, 0], sizes = [16, 128], strides = [1, 1]} : vector<16x256xf32> to vector<16x128xf32>
    %197 = vector.extract_strided_slice %195 {offsets = [0, 128], sizes = [16, 128], strides = [1, 1]} : vector<16x256xf32> to vector<16x128xf32>
    %cst_92 = arith.constant 0.000000e+00 : f32
    %198 = vector.broadcast %cst_92 : f32 to vector<16x128xf32>
    %199 = arith.subf %198, %197 : vector<16x128xf32>
    %200 = math.exp %199 : vector<16x128xf32>
    %cst_93 = arith.constant 1.000000e+00 : f32
    %201 = vector.broadcast %cst_93 : f32 to vector<16x128xf32>
    %202 = arith.addf %201, %200 : vector<16x128xf32>
    %203 = tpu.reciprocal %202 {approx = true} : vector<16x128xf32> -> vector<16x128xf32>
    %204 = arith.mulf %196, %203 : vector<16x128xf32>
    %205 = tpu.iota {dimensions = array<i32: 0>} : vector<16x1xi32>
    %cst_94 = arith.constant 0.000000e+00 : f32
    %206 = vector.broadcast %cst_94 : f32 to vector<16x128xf32>
    %c4_i32 = arith.constant 4 : i32
    %207 = tpu.dynamic_rotate %204 by %c4_i32 dim 0 : vector<16x128xf32>, i32 -> vector<16x128xf32>
    %c4_i32_95 = arith.constant 4 : i32
    %208 = vector.broadcast %c4_i32_95 : i32 to vector<16x1xi32>
    %209 = arith.cmpi sge, %205, %208 : vector<16x1xi32>
    %c20_i32 = arith.constant 20 : i32
    %210 = vector.broadcast %c20_i32 : i32 to vector<16x1xi32>
    %211 = arith.cmpi slt, %205, %210 : vector<16x1xi32>
    %212 = arith.andi %209, %211 : vector<16x1xi1>
    %cst_96 = arith.constant 0.000000e+00 : f32
    %213 = vector.shape_cast %212 : vector<16x1xi1> to vector<16x1xi1>
    %214 = vector.broadcast %213 : vector<16x1xi1> to vector<16x128xi1>
    %215 = vector.broadcast %cst_96 : f32 to vector<16x128xf32>
    %216 = arith.select %214, %207, %215 : vector<16x128xi1>, vector<16x128xf32>
    %c0_97 = arith.constant 0 : index
    %c0_98 = arith.constant 0 : index
    %c0_99 = arith.constant 0 : index
    %c0_100 = arith.constant 0 : index
    %217 = vector.load %arg25[%c0_97, %c0_98, %c0_99, %c0_100] : memref<1x9x1x128xf32, #tpu.memory_space<vmem>>, vector<1x1x1x128xf32>
    %218 = vector.shape_cast %217 : vector<1x1x1x128xf32> to vector<1x128xf32>
    %219 = vector.broadcast %218 : vector<1x128xf32> to vector<16x128xf32>
    %220 = arith.mulf %216, %219 : vector<16x128xf32>
    %221 = arith.addf %206, %220 : vector<16x128xf32>
    %c3_i32 = arith.constant 3 : i32
    %222 = tpu.dynamic_rotate %204 by %c3_i32 dim 0 : vector<16x128xf32>, i32 -> vector<16x128xf32>
    %c3_i32_101 = arith.constant 3 : i32
    %223 = vector.broadcast %c3_i32_101 : i32 to vector<16x1xi32>
    %224 = arith.cmpi sge, %205, %223 : vector<16x1xi32>
    %c19_i32 = arith.constant 19 : i32
    %225 = vector.broadcast %c19_i32 : i32 to vector<16x1xi32>
    %226 = arith.cmpi slt, %205, %225 : vector<16x1xi32>
    %227 = arith.andi %224, %226 : vector<16x1xi1>
    %cst_102 = arith.constant 0.000000e+00 : f32
    %228 = vector.shape_cast %227 : vector<16x1xi1> to vector<16x1xi1>
    %229 = vector.broadcast %228 : vector<16x1xi1> to vector<16x128xi1>
    %230 = vector.broadcast %cst_102 : f32 to vector<16x128xf32>
    %231 = arith.select %229, %222, %230 : vector<16x128xi1>, vector<16x128xf32>
    %c0_103 = arith.constant 0 : index
    %c1 = arith.constant 1 : index
    %c0_104 = arith.constant 0 : index
    %c0_105 = arith.constant 0 : index
    %232 = vector.load %arg25[%c0_103, %c1, %c0_104, %c0_105] : memref<1x9x1x128xf32, #tpu.memory_space<vmem>>, vector<1x1x1x128xf32>
    %233 = vector.shape_cast %232 : vector<1x1x1x128xf32> to vector<1x128xf32>
    %234 = vector.broadcast %233 : vector<1x128xf32> to vector<16x128xf32>
    %235 = arith.mulf %231, %234 : vector<16x128xf32>
    %236 = arith.addf %221, %235 : vector<16x128xf32>
    %c2_i32 = arith.constant 2 : i32
    %237 = tpu.dynamic_rotate %204 by %c2_i32 dim 0 : vector<16x128xf32>, i32 -> vector<16x128xf32>
    %c2_i32_106 = arith.constant 2 : i32
    %238 = vector.broadcast %c2_i32_106 : i32 to vector<16x1xi32>
    %239 = arith.cmpi sge, %205, %238 : vector<16x1xi32>
    %c18_i32 = arith.constant 18 : i32
    %240 = vector.broadcast %c18_i32 : i32 to vector<16x1xi32>
    %241 = arith.cmpi slt, %205, %240 : vector<16x1xi32>
    %242 = arith.andi %239, %241 : vector<16x1xi1>
    %cst_107 = arith.constant 0.000000e+00 : f32
    %243 = vector.shape_cast %242 : vector<16x1xi1> to vector<16x1xi1>
    %244 = vector.broadcast %243 : vector<16x1xi1> to vector<16x128xi1>
    %245 = vector.broadcast %cst_107 : f32 to vector<16x128xf32>
    %246 = arith.select %244, %237, %245 : vector<16x128xi1>, vector<16x128xf32>
    %c0_108 = arith.constant 0 : index
    %c2 = arith.constant 2 : index
    %c0_109 = arith.constant 0 : index
    %c0_110 = arith.constant 0 : index
    %247 = vector.load %arg25[%c0_108, %c2, %c0_109, %c0_110] : memref<1x9x1x128xf32, #tpu.memory_space<vmem>>, vector<1x1x1x128xf32>
    %248 = vector.shape_cast %247 : vector<1x1x1x128xf32> to vector<1x128xf32>
    %249 = vector.broadcast %248 : vector<1x128xf32> to vector<16x128xf32>
    %250 = arith.mulf %246, %249 : vector<16x128xf32>
    %251 = arith.addf %236, %250 : vector<16x128xf32>
    %c1_i32 = arith.constant 1 : i32
    %252 = tpu.dynamic_rotate %204 by %c1_i32 dim 0 : vector<16x128xf32>, i32 -> vector<16x128xf32>
    %c1_i32_111 = arith.constant 1 : i32
    %253 = vector.broadcast %c1_i32_111 : i32 to vector<16x1xi32>
    %254 = arith.cmpi sge, %205, %253 : vector<16x1xi32>
    %c17_i32 = arith.constant 17 : i32
    %255 = vector.broadcast %c17_i32 : i32 to vector<16x1xi32>
    %256 = arith.cmpi slt, %205, %255 : vector<16x1xi32>
    %257 = arith.andi %254, %256 : vector<16x1xi1>
    %cst_112 = arith.constant 0.000000e+00 : f32
    %258 = vector.shape_cast %257 : vector<16x1xi1> to vector<16x1xi1>
    %259 = vector.broadcast %258 : vector<16x1xi1> to vector<16x128xi1>
    %260 = vector.broadcast %cst_112 : f32 to vector<16x128xf32>
    %261 = arith.select %259, %252, %260 : vector<16x128xi1>, vector<16x128xf32>
    %c0_113 = arith.constant 0 : index
    %c3 = arith.constant 3 : index
    %c0_114 = arith.constant 0 : index
    %c0_115 = arith.constant 0 : index
    %262 = vector.load %arg25[%c0_113, %c3, %c0_114, %c0_115] : memref<1x9x1x128xf32, #tpu.memory_space<vmem>>, vector<1x1x1x128xf32>
    %263 = vector.shape_cast %262 : vector<1x1x1x128xf32> to vector<1x128xf32>
    %264 = vector.broadcast %263 : vector<1x128xf32> to vector<16x128xf32>
    %265 = arith.mulf %261, %264 : vector<16x128xf32>
    %266 = arith.addf %251, %265 : vector<16x128xf32>
    %c0_i32_116 = arith.constant 0 : i32
    %267 = tpu.dynamic_rotate %204 by %c0_i32_116 dim 0 : vector<16x128xf32>, i32 -> vector<16x128xf32>
    %c0_i32_117 = arith.constant 0 : i32
    %268 = vector.broadcast %c0_i32_117 : i32 to vector<16x1xi32>
    %269 = arith.cmpi sge, %205, %268 : vector<16x1xi32>
    %c16_i32 = arith.constant 16 : i32
    %270 = vector.broadcast %c16_i32 : i32 to vector<16x1xi32>
    %271 = arith.cmpi slt, %205, %270 : vector<16x1xi32>
    %272 = arith.andi %269, %271 : vector<16x1xi1>
    %cst_118 = arith.constant 0.000000e+00 : f32
    %273 = vector.shape_cast %272 : vector<16x1xi1> to vector<16x1xi1>
    %274 = vector.broadcast %273 : vector<16x1xi1> to vector<16x128xi1>
    %275 = vector.broadcast %cst_118 : f32 to vector<16x128xf32>
    %276 = arith.select %274, %267, %275 : vector<16x128xi1>, vector<16x128xf32>
    %c0_119 = arith.constant 0 : index
    %c4 = arith.constant 4 : index
    %c0_120 = arith.constant 0 : index
    %c0_121 = arith.constant 0 : index
    %277 = vector.load %arg25[%c0_119, %c4, %c0_120, %c0_121] : memref<1x9x1x128xf32, #tpu.memory_space<vmem>>, vector<1x1x1x128xf32>
    %278 = vector.shape_cast %277 : vector<1x1x1x128xf32> to vector<1x128xf32>
    %279 = vector.broadcast %278 : vector<1x128xf32> to vector<16x128xf32>
    %280 = arith.mulf %276, %279 : vector<16x128xf32>
    %281 = arith.addf %266, %280 : vector<16x128xf32>
    %c15_i32 = arith.constant 15 : i32
    %282 = tpu.dynamic_rotate %204 by %c15_i32 dim 0 : vector<16x128xf32>, i32 -> vector<16x128xf32>
    %c-1_i32 = arith.constant -1 : i32
    %283 = vector.broadcast %c-1_i32 : i32 to vector<16x1xi32>
    %284 = arith.cmpi sge, %205, %283 : vector<16x1xi32>
    %c15_i32_122 = arith.constant 15 : i32
    %285 = vector.broadcast %c15_i32_122 : i32 to vector<16x1xi32>
    %286 = arith.cmpi slt, %205, %285 : vector<16x1xi32>
    %287 = arith.andi %284, %286 : vector<16x1xi1>
    %cst_123 = arith.constant 0.000000e+00 : f32
    %288 = vector.shape_cast %287 : vector<16x1xi1> to vector<16x1xi1>
    %289 = vector.broadcast %288 : vector<16x1xi1> to vector<16x128xi1>
    %290 = vector.broadcast %cst_123 : f32 to vector<16x128xf32>
    %291 = arith.select %289, %282, %290 : vector<16x128xi1>, vector<16x128xf32>
    %c0_124 = arith.constant 0 : index
    %c5 = arith.constant 5 : index
    %c0_125 = arith.constant 0 : index
    %c0_126 = arith.constant 0 : index
    %292 = vector.load %arg25[%c0_124, %c5, %c0_125, %c0_126] : memref<1x9x1x128xf32, #tpu.memory_space<vmem>>, vector<1x1x1x128xf32>
    %293 = vector.shape_cast %292 : vector<1x1x1x128xf32> to vector<1x128xf32>
    %294 = vector.broadcast %293 : vector<1x128xf32> to vector<16x128xf32>
    %295 = arith.mulf %291, %294 : vector<16x128xf32>
    %296 = arith.addf %281, %295 : vector<16x128xf32>
    %c14_i32 = arith.constant 14 : i32
    %297 = tpu.dynamic_rotate %204 by %c14_i32 dim 0 : vector<16x128xf32>, i32 -> vector<16x128xf32>
    %c-2_i32 = arith.constant -2 : i32
    %298 = vector.broadcast %c-2_i32 : i32 to vector<16x1xi32>
    %299 = arith.cmpi sge, %205, %298 : vector<16x1xi32>
    %c14_i32_127 = arith.constant 14 : i32
    %300 = vector.broadcast %c14_i32_127 : i32 to vector<16x1xi32>
    %301 = arith.cmpi slt, %205, %300 : vector<16x1xi32>
    %302 = arith.andi %299, %301 : vector<16x1xi1>
    %cst_128 = arith.constant 0.000000e+00 : f32
    %303 = vector.shape_cast %302 : vector<16x1xi1> to vector<16x1xi1>
    %304 = vector.broadcast %303 : vector<16x1xi1> to vector<16x128xi1>
    %305 = vector.broadcast %cst_128 : f32 to vector<16x128xf32>
    %306 = arith.select %304, %297, %305 : vector<16x128xi1>, vector<16x128xf32>
    %c0_129 = arith.constant 0 : index
    %c6 = arith.constant 6 : index
    %c0_130 = arith.constant 0 : index
    %c0_131 = arith.constant 0 : index
    %307 = vector.load %arg25[%c0_129, %c6, %c0_130, %c0_131] : memref<1x9x1x128xf32, #tpu.memory_space<vmem>>, vector<1x1x1x128xf32>
    %308 = vector.shape_cast %307 : vector<1x1x1x128xf32> to vector<1x128xf32>
    %309 = vector.broadcast %308 : vector<1x128xf32> to vector<16x128xf32>
    %310 = arith.mulf %306, %309 : vector<16x128xf32>
    %311 = arith.addf %296, %310 : vector<16x128xf32>
    %c13_i32 = arith.constant 13 : i32
    %312 = tpu.dynamic_rotate %204 by %c13_i32 dim 0 : vector<16x128xf32>, i32 -> vector<16x128xf32>
    %c-3_i32 = arith.constant -3 : i32
    %313 = vector.broadcast %c-3_i32 : i32 to vector<16x1xi32>
    %314 = arith.cmpi sge, %205, %313 : vector<16x1xi32>
    %c13_i32_132 = arith.constant 13 : i32
    %315 = vector.broadcast %c13_i32_132 : i32 to vector<16x1xi32>
    %316 = arith.cmpi slt, %205, %315 : vector<16x1xi32>
    %317 = arith.andi %314, %316 : vector<16x1xi1>
    %cst_133 = arith.constant 0.000000e+00 : f32
    %318 = vector.shape_cast %317 : vector<16x1xi1> to vector<16x1xi1>
    %319 = vector.broadcast %318 : vector<16x1xi1> to vector<16x128xi1>
    %320 = vector.broadcast %cst_133 : f32 to vector<16x128xf32>
    %321 = arith.select %319, %312, %320 : vector<16x128xi1>, vector<16x128xf32>
    %c0_134 = arith.constant 0 : index
    %c7 = arith.constant 7 : index
    %c0_135 = arith.constant 0 : index
    %c0_136 = arith.constant 0 : index
    %322 = vector.load %arg25[%c0_134, %c7, %c0_135, %c0_136] : memref<1x9x1x128xf32, #tpu.memory_space<vmem>>, vector<1x1x1x128xf32>
    %323 = vector.shape_cast %322 : vector<1x1x1x128xf32> to vector<1x128xf32>
    %324 = vector.broadcast %323 : vector<1x128xf32> to vector<16x128xf32>
    %325 = arith.mulf %321, %324 : vector<16x128xf32>
    %326 = arith.addf %311, %325 : vector<16x128xf32>
    %c12_i32 = arith.constant 12 : i32
    %327 = tpu.dynamic_rotate %204 by %c12_i32 dim 0 : vector<16x128xf32>, i32 -> vector<16x128xf32>
    %c-4_i32 = arith.constant -4 : i32
    %328 = vector.broadcast %c-4_i32 : i32 to vector<16x1xi32>
    %329 = arith.cmpi sge, %205, %328 : vector<16x1xi32>
    %c12_i32_137 = arith.constant 12 : i32
    %330 = vector.broadcast %c12_i32_137 : i32 to vector<16x1xi32>
    %331 = arith.cmpi slt, %205, %330 : vector<16x1xi32>
    %332 = arith.andi %329, %331 : vector<16x1xi1>
    %cst_138 = arith.constant 0.000000e+00 : f32
    %333 = vector.shape_cast %332 : vector<16x1xi1> to vector<16x1xi1>
    %334 = vector.broadcast %333 : vector<16x1xi1> to vector<16x128xi1>
    %335 = vector.broadcast %cst_138 : f32 to vector<16x128xf32>
    %336 = arith.select %334, %327, %335 : vector<16x128xi1>, vector<16x128xf32>
    %c0_139 = arith.constant 0 : index
    %c8 = arith.constant 8 : index
    %c0_140 = arith.constant 0 : index
    %c0_141 = arith.constant 0 : index
    %337 = vector.load %arg25[%c0_139, %c8, %c0_140, %c0_141] : memref<1x9x1x128xf32, #tpu.memory_space<vmem>>, vector<1x1x1x128xf32>
    %338 = vector.shape_cast %337 : vector<1x1x1x128xf32> to vector<1x128xf32>
    %339 = vector.broadcast %338 : vector<1x128xf32> to vector<16x128xf32>
    %340 = arith.mulf %336, %339 : vector<16x128xf32>
    %341 = arith.addf %326, %340 : vector<16x128xf32>
    %c0_142 = arith.constant 0 : index
    %c0_143 = arith.constant 0 : index
    %c0_144 = arith.constant 0 : index
    %342 = vector.load %arg26[%c0_142, %c0_143, %c0_144] : memref<1x1x128xf32, #tpu.memory_space<vmem>>, vector<1x1x128xf32>
    %343 = vector.shape_cast %342 : vector<1x1x128xf32> to vector<1x128xf32>
    %344 = vector.broadcast %343 : vector<1x128xf32> to vector<16x128xf32>
    %345 = arith.addf %341, %344 : vector<16x128xf32>
    %c0_145 = arith.constant 0 : index
    %c0_146 = arith.constant 0 : index
    %c0_147 = arith.constant 0 : index
    %346 = vector.load %arg27[%c0_145, %c0_146, %c0_147] : memref<1x1x128xf32, #tpu.memory_space<vmem>>, vector<1x1x128xf32>
    %347 = vector.shape_cast %346 : vector<1x1x128xf32> to vector<1x128xf32>
    %348 = vector.broadcast %347 : vector<1x128xf32> to vector<16x128xf32>
    %349 = arith.mulf %345, %348 : vector<16x128xf32>
    %c0_148 = arith.constant 0 : index
    %c0_149 = arith.constant 0 : index
    %c0_150 = arith.constant 0 : index
    %350 = vector.load %arg28[%c0_148, %c0_149, %c0_150] : memref<1x1x128xf32, #tpu.memory_space<vmem>>, vector<1x1x128xf32>
    %351 = vector.shape_cast %350 : vector<1x1x128xf32> to vector<1x128xf32>
    %352 = vector.broadcast %351 : vector<1x128xf32> to vector<16x128xf32>
    %353 = arith.addf %349, %352 : vector<16x128xf32>
    %cst_151 = arith.constant 0.000000e+00 : f32
    %354 = vector.broadcast %cst_151 : f32 to vector<16x128xf32>
    %355 = arith.subf %354, %353 : vector<16x128xf32>
    %356 = math.exp %355 : vector<16x128xf32>
    %cst_152 = arith.constant 1.000000e+00 : f32
    %357 = vector.broadcast %cst_152 : f32 to vector<16x128xf32>
    %358 = arith.addf %357, %356 : vector<16x128xf32>
    %359 = tpu.reciprocal %358 {approx = true} : vector<16x128xf32> -> vector<16x128xf32>
    %360 = arith.mulf %353, %359 : vector<16x128xf32>
    %c0_153 = arith.constant 0 : index
    %c0_154 = arith.constant 0 : index
    %c0_155 = arith.constant 0 : index
    %361 = vector.load %arg29[%c0_153, %c0_154, %c0_155] : memref<1x128x128xbf16, #tpu.memory_space<vmem>>, vector<1x128x128xbf16>
    %362 = vector.shape_cast %361 : vector<1x128x128xbf16> to vector<128x128xbf16>
    %363 = arith.truncf %360 : vector<16x128xf32> to vector<16x128xbf16>
    %cst_156 = arith.constant dense<0.000000e+00> : vector<16x128xf32>
    %364 = tpu.matmul %363, %362, %cst_156 {dimension_numbers = #tpu.dot_dimension_numbers<[1], [0], [0], [1], [0, 0, 1, 1], [], []>} : vector<16x128xbf16>, vector<128x128xbf16>, vector<16x128xf32> -> vector<16x128xf32>
    %365 = arith.addf %163, %364 : vector<16x128xf32>
    %c0_157 = arith.constant 0 : index
    %c0_158 = arith.constant 0 : index
    %c0_159 = arith.constant 0 : index
    %366 = vector.load %arg30[%c0_157, %c0_158, %c0_159] : memref<1x1x128xf32, #tpu.memory_space<vmem>>, vector<1x1x128xf32>
    %367 = vector.shape_cast %366 : vector<1x1x128xf32> to vector<1x128xf32>
    %368 = vector.broadcast %367 : vector<1x128xf32> to vector<16x128xf32>
    %369 = arith.addf %365, %368 : vector<16x128xf32>
    %c0_160 = arith.constant 0 : index
    %c0_161 = arith.constant 0 : index
    %c0_162 = arith.constant 0 : index
    %370 = vector.load %arg31[%c0_160, %c0_161, %c0_162] : memref<1x1x128xf32, #tpu.memory_space<vmem>>, vector<1x1x128xf32>
    %371 = vector.shape_cast %370 : vector<1x1x128xf32> to vector<1x128xf32>
    %c0_163 = arith.constant 0 : index
    %c0_164 = arith.constant 0 : index
    %c0_165 = arith.constant 0 : index
    %372 = vector.load %arg32[%c0_163, %c0_164, %c0_165] : memref<1x1x128xf32, #tpu.memory_space<vmem>>, vector<1x1x128xf32>
    %373 = vector.shape_cast %372 : vector<1x1x128xf32> to vector<1x128xf32>
    %cst_166 = arith.constant dense<0.000000e+00> : vector<16xf32>
    %374 = vector.multi_reduction <add>, %369, %cst_166 [1] : vector<16x128xf32> to vector<16xf32>
    %375 = vector.shape_cast %374 : vector<16xf32> to vector<16x1xf32>
    %cst_167 = arith.constant 1.280000e+02 : f32
    %376 = vector.broadcast %cst_167 : f32 to vector<16x1xf32>
    %377 = arith.divf %375, %376 : vector<16x1xf32>
    %378 = vector.broadcast %377 : vector<16x1xf32> to vector<16x128xf32>
    %379 = arith.subf %369, %378 : vector<16x128xf32>
    %380 = arith.mulf %379, %379 : vector<16x128xf32>
    %cst_168 = arith.constant dense<0.000000e+00> : vector<16xf32>
    %381 = vector.multi_reduction <add>, %380, %cst_168 [1] : vector<16x128xf32> to vector<16xf32>
    %382 = vector.shape_cast %381 : vector<16xf32> to vector<16x1xf32>
    %cst_169 = arith.constant 1.280000e+02 : f32
    %383 = vector.broadcast %cst_169 : f32 to vector<16x1xf32>
    %384 = arith.divf %382, %383 : vector<16x1xf32>
    %cst_170 = arith.constant 9.99999974E-6 : f32
    %385 = vector.broadcast %cst_170 : f32 to vector<16x1xf32>
    %386 = arith.addf %384, %385 : vector<16x1xf32>
    %387 = math.rsqrt %386 : vector<16x1xf32>
    %388 = vector.broadcast %387 : vector<16x1xf32> to vector<16x128xf32>
    %389 = arith.mulf %379, %388 : vector<16x128xf32>
    %390 = vector.broadcast %371 : vector<1x128xf32> to vector<16x128xf32>
    %391 = arith.mulf %389, %390 : vector<16x128xf32>
    %392 = vector.broadcast %373 : vector<1x128xf32> to vector<16x128xf32>
    %393 = arith.addf %391, %392 : vector<16x128xf32>
    %c0_171 = arith.constant 0 : index
    %c0_172 = arith.constant 0 : index
    %c0_173 = arith.constant 0 : index
    %394 = vector.load %arg33[%c0_171, %c0_172, %c0_173] : memref<1x128x256xbf16, #tpu.memory_space<vmem>>, vector<1x128x256xbf16>
    %395 = vector.shape_cast %394 : vector<1x128x256xbf16> to vector<128x256xbf16>
    %396 = arith.truncf %393 : vector<16x128xf32> to vector<16x128xbf16>
    %cst_174 = arith.constant dense<0.000000e+00> : vector<16x256xf32>
    %397 = tpu.matmul %396, %395, %cst_174 {dimension_numbers = #tpu.dot_dimension_numbers<[1], [0], [0], [1], [0, 0, 1, 1], [], []>} : vector<16x128xbf16>, vector<128x256xbf16>, vector<16x256xf32> -> vector<16x256xf32>
    %c0_175 = arith.constant 0 : index
    %c0_176 = arith.constant 0 : index
    %c0_177 = arith.constant 0 : index
    %398 = vector.load %arg34[%c0_175, %c0_176, %c0_177] : memref<1x1x256xf32, #tpu.memory_space<vmem>>, vector<1x1x256xf32>
    %399 = vector.shape_cast %398 : vector<1x1x256xf32> to vector<1x256xf32>
    %400 = vector.broadcast %399 : vector<1x256xf32> to vector<16x256xf32>
    %401 = arith.addf %397, %400 : vector<16x256xf32>
    %cst_178 = arith.constant 0.000000e+00 : f32
    %402 = vector.broadcast %cst_178 : f32 to vector<16x256xf32>
    %403 = arith.subf %402, %401 : vector<16x256xf32>
    %404 = math.exp %403 : vector<16x256xf32>
    %cst_179 = arith.constant 1.000000e+00 : f32
    %405 = vector.broadcast %cst_179 : f32 to vector<16x256xf32>
    %406 = arith.addf %405, %404 : vector<16x256xf32>
    %407 = tpu.reciprocal %406 {approx = true} : vector<16x256xf32> -> vector<16x256xf32>
    %408 = arith.mulf %401, %407 : vector<16x256xf32>
    %c0_180 = arith.constant 0 : index
    %c0_181 = arith.constant 0 : index
    %c0_182 = arith.constant 0 : index
    %409 = vector.load %arg35[%c0_180, %c0_181, %c0_182] : memref<1x256x128xbf16, #tpu.memory_space<vmem>>, vector<1x256x128xbf16>
    %410 = vector.shape_cast %409 : vector<1x256x128xbf16> to vector<256x128xbf16>
    %411 = arith.truncf %408 : vector<16x256xf32> to vector<16x256xbf16>
    %cst_183 = arith.constant dense<0.000000e+00> : vector<16x128xf32>
    %412 = tpu.matmul %411, %410, %cst_183 {dimension_numbers = #tpu.dot_dimension_numbers<[1], [0], [0], [1], [0, 0, 1, 1], [], []>} : vector<16x256xbf16>, vector<256x128xbf16>, vector<16x128xf32> -> vector<16x128xf32>
    %c0_184 = arith.constant 0 : index
    %c0_185 = arith.constant 0 : index
    %c0_186 = arith.constant 0 : index
    %413 = vector.load %arg36[%c0_184, %c0_185, %c0_186] : memref<1x1x128xf32, #tpu.memory_space<vmem>>, vector<1x1x128xf32>
    %414 = vector.shape_cast %413 : vector<1x1x128xf32> to vector<1x128xf32>
    %415 = vector.broadcast %414 : vector<1x128xf32> to vector<16x128xf32>
    %416 = arith.addf %412, %415 : vector<16x128xf32>
    %cst_187 = arith.constant 5.000000e-01 : f32
    %417 = vector.broadcast %cst_187 : f32 to vector<16x128xf32>
    %418 = arith.mulf %417, %416 : vector<16x128xf32>
    %419 = arith.addf %369, %418 : vector<16x128xf32>
    %c0_188 = arith.constant 0 : index
    %c0_189 = arith.constant 0 : index
    %c0_190 = arith.constant 0 : index
    %420 = vector.load %arg37[%c0_188, %c0_189, %c0_190] : memref<1x1x128xf32, #tpu.memory_space<vmem>>, vector<1x1x128xf32>
    %421 = vector.shape_cast %420 : vector<1x1x128xf32> to vector<1x128xf32>
    %c0_191 = arith.constant 0 : index
    %c0_192 = arith.constant 0 : index
    %c0_193 = arith.constant 0 : index
    %422 = vector.load %arg38[%c0_191, %c0_192, %c0_193] : memref<1x1x128xf32, #tpu.memory_space<vmem>>, vector<1x1x128xf32>
    %423 = vector.shape_cast %422 : vector<1x1x128xf32> to vector<1x128xf32>
    %cst_194 = arith.constant dense<0.000000e+00> : vector<16xf32>
    %424 = vector.multi_reduction <add>, %419, %cst_194 [1] : vector<16x128xf32> to vector<16xf32>
    %425 = vector.shape_cast %424 : vector<16xf32> to vector<16x1xf32>
    %cst_195 = arith.constant 1.280000e+02 : f32
    %426 = vector.broadcast %cst_195 : f32 to vector<16x1xf32>
    %427 = arith.divf %425, %426 : vector<16x1xf32>
    %428 = vector.broadcast %427 : vector<16x1xf32> to vector<16x128xf32>
    %429 = arith.subf %419, %428 : vector<16x128xf32>
    %430 = arith.mulf %429, %429 : vector<16x128xf32>
    %cst_196 = arith.constant dense<0.000000e+00> : vector<16xf32>
    %431 = vector.multi_reduction <add>, %430, %cst_196 [1] : vector<16x128xf32> to vector<16xf32>
    %432 = vector.shape_cast %431 : vector<16xf32> to vector<16x1xf32>
    %cst_197 = arith.constant 1.280000e+02 : f32
    %433 = vector.broadcast %cst_197 : f32 to vector<16x1xf32>
    %434 = arith.divf %432, %433 : vector<16x1xf32>
    %cst_198 = arith.constant 9.99999974E-6 : f32
    %435 = vector.broadcast %cst_198 : f32 to vector<16x1xf32>
    %436 = arith.addf %434, %435 : vector<16x1xf32>
    %437 = math.rsqrt %436 : vector<16x1xf32>
    %438 = vector.broadcast %437 : vector<16x1xf32> to vector<16x128xf32>
    %439 = arith.mulf %429, %438 : vector<16x128xf32>
    %440 = vector.broadcast %421 : vector<1x128xf32> to vector<16x128xf32>
    %441 = arith.mulf %439, %440 : vector<16x128xf32>
    %442 = vector.broadcast %423 : vector<1x128xf32> to vector<16x128xf32>
    %443 = arith.addf %441, %442 : vector<16x128xf32>
    %c0_199 = arith.constant 0 : index
    %c0_200 = arith.constant 0 : index
    %444 = vector.load %arg40[%c0_199, %c0_200] : memref<16x128xf32, #tpu.memory_space<vmem>>, vector<16x128xf32>
    tpu.vector_store %arg40[%c0_199, %c0_200], %443 {strides = array<i32>} : memref<16x128xf32, #tpu.memory_space<vmem>>, vector<16x128xf32>,
    %c4_i32_201 = arith.constant 4 : i32
    %445 = arith.cmpi eq, %arg1, %c4_i32_201 : i32
    %446 = arith.extui %445 : i1 to i32
    %c0_i32_202 = arith.constant 0 : i32
    %447 = arith.cmpi ne, %446, %c0_i32_202 : i32
    scf.if %447 {
      %c0_203 = arith.constant 0 : index
      %c0_204 = arith.constant 0 : index
      %448 = vector.load %arg5[%c0_203, %c0_204] : memref<128x1xf32, #tpu.memory_space<vmem>>, vector<128x1xf32>
      %cst_205 = arith.constant dense<0.000000e+00> : vector<16x1xf32>
      %449 = tpu.matmul %443, %448, %cst_205 {dimension_numbers = #tpu.dot_dimension_numbers<[1], [0], [0], [1], [0, 0, 1, 1], [], []>} : vector<16x128xf32>, vector<128x1xf32>, vector<16x1xf32> -> vector<16x1xf32>
      %c0_206 = arith.constant 0 : index
      %c0_207 = arith.constant 0 : index
      %450 = vector.load %arg6[%c0_206, %c0_207] : memref<1x1xf32, #tpu.memory_space<vmem>>, vector<1x1xf32>
      %451 = vector.broadcast %450 : vector<1x1xf32> to vector<16x1xf32>
      %452 = arith.addf %449, %451 : vector<16x1xf32>
      %cst_208 = arith.constant dense<0xFF800000> : vector<1xf32>
      %453 = vector.multi_reduction <maximumf>, %452, %cst_208 [0] : vector<16x1xf32> to vector<1xf32>
      %454 = vector.shape_cast %453 : vector<1xf32> to vector<1x1xf32>
      %455 = vector.broadcast %454 : vector<1x1xf32> to vector<16x1xf32>
      %456 = arith.subf %452, %455 : vector<16x1xf32>
      %457 = math.exp %456 : vector<16x1xf32>
      %cst_209 = arith.constant dense<0.000000e+00> : vector<1xf32>
      %458 = vector.multi_reduction <add>, %457, %cst_209 [0] : vector<16x1xf32> to vector<1xf32>
      %459 = vector.shape_cast %458 : vector<1xf32> to vector<1x1xf32>
      %460 = tpu.reciprocal %459 {approx = true} : vector<1x1xf32> -> vector<1x1xf32>
      %461 = vector.broadcast %460 : vector<1x1xf32> to vector<16x1xf32>
      %462 = arith.mulf %457, %461 : vector<16x1xf32>
      %463 = vector.broadcast %462 : vector<16x1xf32> to vector<16x128xf32>
      %464 = arith.mulf %443, %463 : vector<16x128xf32>
      %cst_210 = arith.constant dense<0.000000e+00> : vector<128xf32>
      %465 = vector.multi_reduction <add>, %464, %cst_210 [0] : vector<16x128xf32> to vector<128xf32>
      %466 = vector.shape_cast %465 : vector<128xf32> to vector<1x128xf32>
      %c0_211 = arith.constant 0 : index
      %c0_212 = arith.constant 0 : index
      %467 = vector.load %arg7[%c0_211, %c0_212] : memref<128x64xf32, #tpu.memory_space<vmem>>, vector<128x64xf32>
      %cst_213 = arith.constant dense<0.000000e+00> : vector<1x64xf32>
      %468 = tpu.matmul %466, %467, %cst_213 {dimension_numbers = #tpu.dot_dimension_numbers<[1], [0], [0], [1], [0, 0, 1, 1], [], []>} : vector<1x128xf32>, vector<128x64xf32>, vector<1x64xf32> -> vector<1x64xf32>
      %c0_214 = arith.constant 0 : index
      %c0_215 = arith.constant 0 : index
      %469 = vector.load %arg8[%c0_214, %c0_215] : memref<1x64xf32, #tpu.memory_space<vmem>>, vector<1x64xf32>
      %470 = arith.addf %468, %469 : vector<1x64xf32>
      %cst_216 = arith.constant 0.000000e+00 : f32
      %471 = vector.broadcast %cst_216 : f32 to vector<1x64xf32>
      %472 = arith.maximumf %470, %471 : vector<1x64xf32>
      %473 = vector.shape_cast %472 : vector<1x64xf32> to vector<1x1x64xf32>
      %c0_217 = arith.constant 0 : index
      %c0_218 = arith.constant 0 : index
      %c0_219 = arith.constant 0 : index
      %474 = vector.load %arg39[%c0_217, %c0_218, %c0_219] : memref<1x1x64xf32, #tpu.memory_space<vmem>>, vector<1x1x64xf32>
      tpu.vector_store %arg39[%c0_217, %c0_218, %c0_219], %473 {strides = array<i32>} : memref<1x1x64xf32, #tpu.memory_space<vmem>>, vector<1x1x64xf32>,
    } else {
    }
    return
  }
  func.func @transform_0(%arg0: i32, %arg1: i32) -> (i32, i32, i32) {
    %c0_i32 = arith.constant 0 : i32
    %c0_i32_0 = arith.constant 0 : i32
    %c0_i32_1 = arith.constant 0 : i32
    return %arg0, %c0_i32, %c0_i32_0 : i32, i32, i32
  }
  func.func @transform_1(%arg0: i32, %arg1: i32) -> (i32, i32) {
    %c0_i32 = arith.constant 0 : i32
    %c0_i32_0 = arith.constant 0 : i32
    %c0_i32_1 = arith.constant 0 : i32
    return %c0_i32, %c0_i32_0 : i32, i32
  }
  func.func @transform_2(%arg0: i32, %arg1: i32) -> (i32, i32) {
    %c0_i32 = arith.constant 0 : i32
    %c0_i32_0 = arith.constant 0 : i32
    %c0_i32_1 = arith.constant 0 : i32
    return %c0_i32, %c0_i32_0 : i32, i32
  }
  func.func @transform_3(%arg0: i32, %arg1: i32) -> (i32, i32) {
    %c0_i32 = arith.constant 0 : i32
    %c0_i32_0 = arith.constant 0 : i32
    %c0_i32_1 = arith.constant 0 : i32
    return %c0_i32, %c0_i32_0 : i32, i32
  }
  func.func @transform_4(%arg0: i32, %arg1: i32) -> (i32, i32) {
    %c0_i32 = arith.constant 0 : i32
    %c0_i32_0 = arith.constant 0 : i32
    %c0_i32_1 = arith.constant 0 : i32
    return %c0_i32, %c0_i32_0 : i32, i32
  }
  func.func @transform_5(%arg0: i32, %arg1: i32) -> (i32, i32) {
    %c0_i32 = arith.constant 0 : i32
    %c0_i32_0 = arith.constant 0 : i32
    %c0_i32_1 = arith.constant 0 : i32
    return %c0_i32, %c0_i32_0 : i32, i32
  }
  func.func @transform_6(%arg0: i32, %arg1: i32) -> (i32, i32) {
    %c0_i32 = arith.constant 0 : i32
    %c0_i32_0 = arith.constant 0 : i32
    %c0_i32_1 = arith.constant 0 : i32
    return %c0_i32, %c0_i32_0 : i32, i32
  }
  func.func @transform_7(%arg0: i32, %arg1: i32) -> (i32, i32, i32) {
    %c0_i32 = arith.constant 0 : i32
    %c0_i32_0 = arith.constant 0 : i32
    %c0_i32_1 = arith.constant 0 : i32
    return %arg1, %c0_i32, %c0_i32_0 : i32, i32, i32
  }
  func.func @transform_8(%arg0: i32, %arg1: i32) -> (i32, i32, i32) {
    %c0_i32 = arith.constant 0 : i32
    %c0_i32_0 = arith.constant 0 : i32
    %c0_i32_1 = arith.constant 0 : i32
    return %arg1, %c0_i32, %c0_i32_0 : i32, i32, i32
  }
  func.func @transform_9(%arg0: i32, %arg1: i32) -> (i32, i32, i32) {
    %c0_i32 = arith.constant 0 : i32
    %c0_i32_0 = arith.constant 0 : i32
    %c0_i32_1 = arith.constant 0 : i32
    return %arg1, %c0_i32, %c0_i32_0 : i32, i32, i32
  }
  func.func @transform_10(%arg0: i32, %arg1: i32) -> (i32, i32, i32) {
    %c0_i32 = arith.constant 0 : i32
    %c0_i32_0 = arith.constant 0 : i32
    %c0_i32_1 = arith.constant 0 : i32
    return %arg1, %c0_i32, %c0_i32_0 : i32, i32, i32
  }
  func.func @transform_11(%arg0: i32, %arg1: i32) -> (i32, i32, i32) {
    %c0_i32 = arith.constant 0 : i32
    %c0_i32_0 = arith.constant 0 : i32
    %c0_i32_1 = arith.constant 0 : i32
    return %arg1, %c0_i32, %c0_i32_0 : i32, i32, i32
  }
  func.func @transform_12(%arg0: i32, %arg1: i32) -> (i32, i32, i32) {
    %c0_i32 = arith.constant 0 : i32
    %c0_i32_0 = arith.constant 0 : i32
    %c0_i32_1 = arith.constant 0 : i32
    return %arg1, %c0_i32, %c0_i32_0 : i32, i32, i32
  }
  func.func @transform_13(%arg0: i32, %arg1: i32) -> (i32, i32, i32) {
    %c0_i32 = arith.constant 0 : i32
    %c0_i32_0 = arith.constant 0 : i32
    %c0_i32_1 = arith.constant 0 : i32
    return %arg1, %c0_i32, %c0_i32_0 : i32, i32, i32
  }
  func.func @transform_14(%arg0: i32, %arg1: i32) -> (i32, i32, i32) {
    %c0_i32 = arith.constant 0 : i32
    %c0_i32_0 = arith.constant 0 : i32
    %c0_i32_1 = arith.constant 0 : i32
    return %arg1, %c0_i32, %c0_i32_0 : i32, i32, i32
  }
  func.func @transform_15(%arg0: i32, %arg1: i32) -> (i32, i32, i32) {
    %c0_i32 = arith.constant 0 : i32
    %c0_i32_0 = arith.constant 0 : i32
    %c0_i32_1 = arith.constant 0 : i32
    return %arg1, %c0_i32, %c0_i32_0 : i32, i32, i32
  }
  func.func @transform_16(%arg0: i32, %arg1: i32) -> (i32, i32, i32) {
    %c0_i32 = arith.constant 0 : i32
    %c0_i32_0 = arith.constant 0 : i32
    %c0_i32_1 = arith.constant 0 : i32
    return %arg1, %c0_i32, %c0_i32_0 : i32, i32, i32
  }
  func.func @transform_17(%arg0: i32, %arg1: i32) -> (i32, i32, i32) {
    %c0_i32 = arith.constant 0 : i32
    %c0_i32_0 = arith.constant 0 : i32
    %c0_i32_1 = arith.constant 0 : i32
    return %arg1, %c0_i32, %c0_i32_0 : i32, i32, i32
  }
  func.func @transform_18(%arg0: i32, %arg1: i32) -> (i32, i32, i32) {
    %c0_i32 = arith.constant 0 : i32
    %c0_i32_0 = arith.constant 0 : i32
    %c0_i32_1 = arith.constant 0 : i32
    return %arg1, %c0_i32, %c0_i32_0 : i32, i32, i32
  }
  func.func @transform_19(%arg0: i32, %arg1: i32) -> (i32, i32, i32) {
    %c0_i32 = arith.constant 0 : i32
    %c0_i32_0 = arith.constant 0 : i32
    %c0_i32_1 = arith.constant 0 : i32
    return %arg1, %c0_i32, %c0_i32_0 : i32, i32, i32
  }
  func.func @transform_20(%arg0: i32, %arg1: i32) -> (i32, i32, i32) {
    %c0_i32 = arith.constant 0 : i32
    %c0_i32_0 = arith.constant 0 : i32
    %c0_i32_1 = arith.constant 0 : i32
    return %arg1, %c0_i32, %c0_i32_0 : i32, i32, i32
  }
  func.func @transform_21(%arg0: i32, %arg1: i32) -> (i32, i32, i32) {
    %c0_i32 = arith.constant 0 : i32
    %c0_i32_0 = arith.constant 0 : i32
    %c0_i32_1 = arith.constant 0 : i32
    return %arg1, %c0_i32, %c0_i32_0 : i32, i32, i32
  }
  func.func @transform_22(%arg0: i32, %arg1: i32) -> (i32, i32, i32) {
    %c0_i32 = arith.constant 0 : i32
    %c0_i32_0 = arith.constant 0 : i32
    %c0_i32_1 = arith.constant 0 : i32
    return %arg1, %c0_i32, %c0_i32_0 : i32, i32, i32
  }
  func.func @transform_23(%arg0: i32, %arg1: i32) -> (i32, i32, i32, i32) {
    %c0_i32 = arith.constant 0 : i32
    %c0_i32_0 = arith.constant 0 : i32
    %c0_i32_1 = arith.constant 0 : i32
    %c0_i32_2 = arith.constant 0 : i32
    return %arg1, %c0_i32, %c0_i32_0, %c0_i32_1 : i32, i32, i32, i32
  }
  func.func @transform_24(%arg0: i32, %arg1: i32) -> (i32, i32, i32) {
    %c0_i32 = arith.constant 0 : i32
    %c0_i32_0 = arith.constant 0 : i32
    %c0_i32_1 = arith.constant 0 : i32
    return %arg1, %c0_i32, %c0_i32_0 : i32, i32, i32
  }
  func.func @transform_25(%arg0: i32, %arg1: i32) -> (i32, i32, i32) {
    %c0_i32 = arith.constant 0 : i32
    %c0_i32_0 = arith.constant 0 : i32
    %c0_i32_1 = arith.constant 0 : i32
    return %arg1, %c0_i32, %c0_i32_0 : i32, i32, i32
  }
  func.func @transform_26(%arg0: i32, %arg1: i32) -> (i32, i32, i32) {
    %c0_i32 = arith.constant 0 : i32
    %c0_i32_0 = arith.constant 0 : i32
    %c0_i32_1 = arith.constant 0 : i32
    return %arg1, %c0_i32, %c0_i32_0 : i32, i32, i32
  }
  func.func @transform_27(%arg0: i32, %arg1: i32) -> (i32, i32, i32) {
    %c0_i32 = arith.constant 0 : i32
    %c0_i32_0 = arith.constant 0 : i32
    %c0_i32_1 = arith.constant 0 : i32
    return %arg1, %c0_i32, %c0_i32_0 : i32, i32, i32
  }
  func.func @transform_28(%arg0: i32, %arg1: i32) -> (i32, i32, i32) {
    %c0_i32 = arith.constant 0 : i32
    %c0_i32_0 = arith.constant 0 : i32
    %c0_i32_1 = arith.constant 0 : i32
    return %arg1, %c0_i32, %c0_i32_0 : i32, i32, i32
  }
  func.func @transform_29(%arg0: i32, %arg1: i32) -> (i32, i32, i32) {
    %c0_i32 = arith.constant 0 : i32
    %c0_i32_0 = arith.constant 0 : i32
    %c0_i32_1 = arith.constant 0 : i32
    return %arg1, %c0_i32, %c0_i32_0 : i32, i32, i32
  }
  func.func @transform_30(%arg0: i32, %arg1: i32) -> (i32, i32, i32) {
    %c0_i32 = arith.constant 0 : i32
    %c0_i32_0 = arith.constant 0 : i32
    %c0_i32_1 = arith.constant 0 : i32
    return %arg1, %c0_i32, %c0_i32_0 : i32, i32, i32
  }
  func.func @transform_31(%arg0: i32, %arg1: i32) -> (i32, i32, i32) {
    %c0_i32 = arith.constant 0 : i32
    %c0_i32_0 = arith.constant 0 : i32
    %c0_i32_1 = arith.constant 0 : i32
    return %arg1, %c0_i32, %c0_i32_0 : i32, i32, i32
  }
  func.func @transform_32(%arg0: i32, %arg1: i32) -> (i32, i32, i32) {
    %c0_i32 = arith.constant 0 : i32
    %c0_i32_0 = arith.constant 0 : i32
    %c0_i32_1 = arith.constant 0 : i32
    return %arg1, %c0_i32, %c0_i32_0 : i32, i32, i32
  }
  func.func @transform_33(%arg0: i32, %arg1: i32) -> (i32, i32, i32) {
    %c0_i32 = arith.constant 0 : i32
    %c0_i32_0 = arith.constant 0 : i32
    %c0_i32_1 = arith.constant 0 : i32
    return %arg1, %c0_i32, %c0_i32_0 : i32, i32, i32
  }
  func.func @transform_34(%arg0: i32, %arg1: i32) -> (i32, i32, i32) {
    %c0_i32 = arith.constant 0 : i32
    %c0_i32_0 = arith.constant 0 : i32
    %c0_i32_1 = arith.constant 0 : i32
    return %arg1, %c0_i32, %c0_i32_0 : i32, i32, i32
  }
  func.func @transform_35(%arg0: i32, %arg1: i32) -> (i32, i32, i32) {
    %c0_i32 = arith.constant 0 : i32
    %c0_i32_0 = arith.constant 0 : i32
    %c0_i32_1 = arith.constant 0 : i32
    return %arg1, %c0_i32, %c0_i32_0 : i32, i32, i32
  }
  func.func @transform_36(%arg0: i32, %arg1: i32) -> (i32, i32, i32) {
    %c0_i32 = arith.constant 0 : i32
    %c0_i32_0 = arith.constant 0 : i32
    %c0_i32_1 = arith.constant 0 : i32
    return %arg1, %c0_i32, %c0_i32_0 : i32, i32, i32
  }
  func.func @transform_37(%arg0: i32, %arg1: i32) -> (i32, i32, i32) {
    %c0_i32 = arith.constant 0 : i32
    %c0_i32_0 = arith.constant 0 : i32
    %c0_i32_1 = arith.constant 0 : i32
    return %arg0, %c0_i32, %c0_i32_0 : i32, i32, i32
  }
}

</mosaic_0001>

<llo_original>
// kernel: classifier_forward.1
$region0: #{classifier_forward.1}
  #allocation0 [shape = 'u32[]', space=smem, size = 0x4, offset = 0x4, fixed_abs, tag = 'smem constant byte address 0x4 - core index']
  #allocation1 [shape = 'u32[144,128]{1,0:T(1,128)}', space=vmem, size = 0x12000, scoped, tag = 'internal scratch']
  #allocation2 [shape = 'f32[16,128]{1,0:T(8,128)}', space=vmem, size = 0x2000, scoped, tag = 'scratch operand']
  #allocation3 [shape = 'f32[1,1]{1,0:T(1,128)S(1)}', space=vmem, size = 0x200, scoped, tag = 'scoped memory for classifier_forward.1']
  %s0 = inlined_call_operand.smem [shape: u32[38], index: -1, kind: input, shape index: {}]
  %s1 = sld [smem:[%s0]]
  %s2 = scalar_lea.smem %s0, 1
  %s3 = sld [smem:[%s2]]
  %s4 = scalar_lea.smem %s0, 2
  %s5 = sld [smem:[%s4]]
  %s6 = scalar_lea.smem %s0, 3
  %s7 = sld [smem:[%s6]]
  %s8 = scalar_lea.smem %s0, 4
  %s9 = sld [smem:[%s8]]
  %s10 = scalar_lea.smem %s0, 5
  %s11 = sld [smem:[%s10]]
  %s12 = scalar_lea.smem %s0, 6
  %s13 = sld [smem:[%s12]]
  %s14 = scalar_lea.smem %s0, 7
  %s15 = sld [smem:[%s14]]
  %s16 = scalar_lea.smem %s0, 8
  %s17 = sld [smem:[%s16]]
  %s18 = scalar_lea.smem %s0, 9
  %s19 = sld [smem:[%s18]]
  %s20 = scalar_lea.smem %s0, 10
  %s21 = sld [smem:[%s20]]
  %s22 = scalar_lea.smem %s0, 11
  %s23 = sld [smem:[%s22]]
  %s24 = scalar_lea.smem %s0, 12
  %s25 = sld [smem:[%s24]]
  %s26 = scalar_lea.smem %s0, 13
  %s27 = sld [smem:[%s26]]
  %s28 = scalar_lea.smem %s0, 14
  %s29 = sld [smem:[%s28]]
  %s30 = scalar_lea.smem %s0, 15
  %s31 = sld [smem:[%s30]]
  %s32 = scalar_lea.smem %s0, 16
  %s33 = sld [smem:[%s32]]
  %s34 = scalar_lea.smem %s0, 17
  %s35 = sld [smem:[%s34]]
  %s36 = scalar_lea.smem %s0, 18
  %s37 = sld [smem:[%s36]]
  %s38 = scalar_lea.smem %s0, 19
  %s39 = sld [smem:[%s38]]
  %s40 = scalar_lea.smem %s0, 20
  %s41 = sld [smem:[%s40]]
  %s42 = scalar_lea.smem %s0, 21
  %s43 = sld [smem:[%s42]]
  %s44 = scalar_lea.smem %s0, 22
  %s45 = sld [smem:[%s44]]
  %s46 = scalar_lea.smem %s0, 23
  %s47 = sld [smem:[%s46]]
  %s48 = scalar_lea.smem %s0, 24
  %s49 = sld [smem:[%s48]]
  %s50 = scalar_lea.smem %s0, 25
  %s51 = sld [smem:[%s50]]
  %s52 = scalar_lea.smem %s0, 26
  %s53 = sld [smem:[%s52]]
  %s54 = scalar_lea.smem %s0, 27
  %s55 = sld [smem:[%s54]]
  %s56 = scalar_lea.smem %s0, 28
  %s57 = sld [smem:[%s56]]
  %s58 = scalar_lea.smem %s0, 29
  %s59 = sld [smem:[%s58]]
  %s60 = scalar_lea.smem %s0, 30
  %s61 = sld [smem:[%s60]]
  %s62 = scalar_lea.smem %s0, 31
  %s63 = sld [smem:[%s62]]
  %s64 = scalar_lea.smem %s0, 32
  %s65 = sld [smem:[%s64]]
  %s66 = scalar_lea.smem %s0, 33
  %s67 = sld [smem:[%s66]]
  %s68 = scalar_lea.smem %s0, 34
  %s69 = sld [smem:[%s68]]
  %s70 = scalar_lea.smem %s0, 35
  %s71 = sld [smem:[%s70]]
  %s72 = scalar_lea.smem %s0, 36
  %s73 = sld [smem:[%s72]]
  %s74 = scalar_lea.smem %s0, 37
  %s75 = sld [smem:[%s74]]
  %s76 = sld [smem:[#allocation0]]
  $region309: #{classifier_forward.1} parent=0
    _
  %s78 = ssub.s32 1, %s76
  %s79 = scalar_select 0, %s78, %s76
  %v80 = vstv %s9
  %81 = vst [vmem:[#allocation3] sm:$0x1] %v80
  $region1: #{classifier_forward.1} parent=0
    #allocation4 [shape = 'u8[20480]{0}', space=vmem, size = 0x5000, scoped, tag = 'input window, operand 1, single buffered']
    #allocation5 [shape = 's32[2]{0}', space=sflag, size = 0x8, scoped, tag = 'scoped memory for classifier_forward.1']
    #allocation6 [shape = 's32[2]{0}', space=sflag, size = 0x8, scoped, tag = 'scoped memory for classifier_forward.1']
    #allocation7 [shape = 'u8[512]{0}', space=vmem, size = 0x400, scoped, tag = 'input window, operand 2, single buffered']
    #allocation8 [shape = 's32[1]{0}', space=sflag, size = 0x4, scoped, tag = 'scoped memory for classifier_forward.1']
    #allocation9 [shape = 'u8[1024]{0}', space=vmem, size = 0x400, scoped, tag = 'input window, operand 7']
    #allocation10 [shape = 'u8[1024]{0}', space=vmem, size = 0x400, scoped, tag = 'input window, operand 8']
    #allocation11 [shape = 'u8[2048]{0}', space=vmem, size = 0x800, scoped, tag = 'input window, operand 10']
    #allocation12 [shape = 'u8[131072]{0}', space=vmem, size = 0x20000, scoped, tag = 'input window, operand 11']
    #allocation13 [shape = 'u8[1024]{0}', space=vmem, size = 0x400, scoped, tag = 'input window, operand 12']
    #allocation14 [shape = 'u8[1024]{0}', space=vmem, size = 0x400, scoped, tag = 'input window, operand 13']
    #allocation15 [shape = 'u8[1024]{0}', space=vmem, size = 0x400, scoped, tag = 'input window, operand 14']
    #allocation16 [shape = 'u8[196608]{0}', space=vmem, size = 0x30000, scoped, tag = 'input window, operand 15']
    #allocation17 [shape = 'u8[3072]{0}', space=vmem, size = 0xc00, scoped, tag = 'input window, operand 16']
    #allocation18 [shape = 'u8[65536]{0}', space=vmem, size = 0x10000, scoped, tag = 'input window, operand 17']
    #allocation19 [shape = 'u8[1024]{0}', space=vmem, size = 0x400, scoped, tag = 'input window, operand 18']
    #allocation20 [shape = 'u8[1024]{0}', space=vmem, size = 0x400, scoped, tag = 'input window, operand 19']
    #allocation21 [shape = 'u8[1024]{0}', space=vmem, size = 0x400, scoped, tag = 'input window, operand 20']
    #allocation22 [shape = 'u8[131072]{0}', space=vmem, size = 0x20000, scoped, tag = 'input window, operand 21']
    #allocation23 [shape = 'u8[2048]{0}', space=vmem, size = 0x800, scoped, tag = 'input window, operand 22']
    #allocation24 [shape = 'u8[1024]{0}', space=vmem, size = 0x400, scoped, tag = 'input window, operand 24']
    #allocation25 [shape = 'u8[1024]{0}', space=vmem, size = 0x400, scoped, tag = 'input window, operand 25']
    #allocation26 [shape = 'u8[1024]{0}', space=vmem, size = 0x400, scoped, tag = 'input window, operand 26']
    #allocation27 [shape = 'u8[65536]{0}', space=vmem, size = 0x10000, scoped, tag = 'input window, operand 27']
    #allocation28 [shape = 'u8[1024]{0}', space=vmem, size = 0x400, scoped, tag = 'input window, operand 28']
    #allocation29 [shape = 'u8[1024]{0}', space=vmem, size = 0x400, scoped, tag = 'input window, operand 29']
    #allocation30 [shape = 'u8[1024]{0}', space=vmem, size = 0x400, scoped, tag = 'input window, operand 30']
    #allocation31 [shape = 'u8[131072]{0}', space=vmem, size = 0x20000, scoped, tag = 'input window, operand 31']
    #allocation32 [shape = 'u8[2048]{0}', space=vmem, size = 0x800, scoped, tag = 'input window, operand 32']
    #allocation33 [shape = 'u8[131072]{0}', space=vmem, size = 0x20000, scoped, tag = 'input window, operand 33']
    #allocation34 [shape = 'u8[1024]{0}', space=vmem, size = 0x400, scoped, tag = 'input window, operand 34']
    #allocation35 [shape = 'u8[1024]{0}', space=vmem, size = 0x400, scoped, tag = 'input window, operand 35']
    #allocation36 [shape = 'u8[1024]{0}', space=vmem, size = 0x400, scoped, tag = 'input window, operand 36']
    #allocation37 [shape = 'u8[1024]{0}', space=vmem, size = 0x400, scoped, tag = 'output window, operand 0']
    %82 = vsyncpa [#allocation5], 0
    %83 = vsyncpa [#allocation8], 0
    %84 = vsyncpa [#allocation6], 0
    %s85 = scalar_lea.sflag [#allocation6], 1
    %86 = vsyncpa %s85, 0
    loop: start=0, step=1, limit=12
    $region2: #{classifier_forward.1} parent=1 // loop_pre_header
      _
    $region3: #{classifier_forward.1} parent=1 // loop_header
      %s88 = sphi 0, %s92
      %p89 = scmp.ge.s32.totalorder %s88, 12
      %s95 = sphi 0, %s107
      %s96 = sphi 0, %s103
      %s97 = sphi 0, %s95
      %s98 = sphi 0, %s96
      %s99 = sphi 0, %s97
      %s100 = sphi 0, %s98
      %s110 = sphi 0, %s112
      %s113 = sphi 0, %s110
      %s114 = sphi 0, %s113
      %s130 = sphi 0, %s114
      %s134 = sphi 0, %s134
      %s136 = sphi 0, %s134
      %s137 = sphi 0, %s136
      %s151 = sphi 0, %s137
      %s155 = sphi 0, %s155
      %s157 = sphi 0, %s155
      %s158 = sphi 0, %s157
      %s172 = sphi 0, %s158
      %s176 = sphi 0, %s176
      %s178 = sphi 0, %s176
      %s179 = sphi 0, %s178
      %s193 = sphi 0, %s179
      %s197 = sphi 0, %s197
      %s199 = sphi 0, %s197
      %s200 = sphi 0, %s199
      %s214 = sphi 0, %s200
      %s218 = sphi 0, %s218
      %s220 = sphi 0, %s218
      %s221 = sphi 0, %s220
      %s235 = sphi 0, %s221
      %s239 = sphi 0, %s239
      %s241 = sphi 0, %s239
      %s242 = sphi 0, %s241
      %s256 = sphi 0, %s242
      %s262 = sphi 0, %s264
      %s265 = sphi 0, %s262
      %s266 = sphi 0, %s265
      %s282 = sphi 0, %s266
      %s288 = sphi 0, %s290
      %s291 = sphi 0, %s288
      %s292 = sphi 0, %s291
      %s308 = sphi 0, %s292
      %s314 = sphi 0, %s316
      %s317 = sphi 0, %s314
      %s318 = sphi 0, %s317
      %s334 = sphi 0, %s318
      %s340 = sphi 0, %s342
      %s343 = sphi 0, %s340
      %s344 = sphi 0, %s343
      %s360 = sphi 0, %s344
      %s366 = sphi 0, %s368
      %s369 = sphi 0, %s366
      %s370 = sphi 0, %s369
      %s386 = sphi 0, %s370
      %s392 = sphi 0, %s394
      %s395 = sphi 0, %s392
      %s396 = sphi 0, %s395
      %s412 = sphi 0, %s396
      %s418 = sphi 0, %s420
      %s421 = sphi 0, %s418
      %s422 = sphi 0, %s421
      %s438 = sphi 0, %s422
      %s444 = sphi 0, %s446
      %s447 = sphi 0, %s444
      %s448 = sphi 0, %s447
      %s464 = sphi 0, %s448
      %s470 = sphi 0, %s472
      %s473 = sphi 0, %s470
      %s474 = sphi 0, %s473
      %s490 = sphi 0, %s474
      %s496 = sphi 0, %s498
      %s499 = sphi 0, %s496
      %s500 = sphi 0, %s499
      %s516 = sphi 0, %s500
      %s522 = sphi 0, %s524
      %s525 = sphi 0, %s522
      %s526 = sphi 0, %s525
      %s542 = sphi 0, %s526
      %s548 = sphi 0, %s550
      %s551 = sphi 0, %s548
      %s552 = sphi 0, %s551
      %s568 = sphi 0, %s552
      %s574 = sphi 0, %s576
      %s577 = sphi 0, %s574
      %s578 = sphi 0, %s577
      %s594 = sphi 0, %s578
      %s600 = sphi 0, %s602
      %s603 = sphi 0, %s600
      %s604 = sphi 0, %s603
      %s620 = sphi 0, %s604
      %s626 = sphi 0, %s628
      %s629 = sphi 0, %s626
      %s630 = sphi 0, %s629
      %s646 = sphi 0, %s630
      %s652 = sphi 0, %s654
      %s655 = sphi 0, %s652
      %s656 = sphi 0, %s655
      %s672 = sphi 0, %s656
      %s678 = sphi 0, %s680
      %s681 = sphi 0, %s678
      %s682 = sphi 0, %s681
      %s698 = sphi 0, %s682
      %s704 = sphi 0, %s706
      %s707 = sphi 0, %s704
      %s708 = sphi 0, %s707
      %s724 = sphi 0, %s708
      %s730 = sphi 0, %s732
      %s733 = sphi 0, %s730
      %s734 = sphi 0, %s733
      %s750 = sphi 0, %s734
      %s756 = sphi 0, %s758
      %s759 = sphi 0, %s756
      %s760 = sphi 0, %s759
      %s776 = sphi 0, %s760
      %s782 = sphi 0, %s784
      %s785 = sphi 0, %s782
      %s786 = sphi 0, %s785
      %s802 = sphi 0, %s786
      %s808 = sphi 0, %s810
      %s811 = sphi 0, %s808
      %s812 = sphi 0, %s811
      %s828 = sphi 0, %s812
      %s834 = sphi 0, %s836
      %s837 = sphi 0, %s834
      %s838 = sphi 0, %s837
      %s854 = sphi 0, %s838
      %s860 = sphi 0, %s862
      %s863 = sphi 0, %s860
      %s864 = sphi 0, %s863
      %s880 = sphi 0, %s864
      %s886 = sphi 0, %s888
      %s889 = sphi 0, %s886
      %s890 = sphi 0, %s889
      %s906 = sphi 0, %s890
      %s912 = sphi 0, %s914
      %s915 = sphi 0, %s912
      %s916 = sphi 0, %s915
      %s932 = sphi 0, %s916
      %s938 = sphi 0, %s940
      %s941 = sphi 0, %s938
      %s942 = sphi 0, %s941
      %s958 = sphi 0, %s942
      %s964 = sphi 0, %s966
      %s967 = sphi 0, %s964
      %s968 = sphi 0, %s967
      %s984 = sphi 0, %s968
      %s990 = sphi 0, %s992
      %s993 = sphi 0, %s990
      %s994 = sphi 0, %s993
      %s1010 = sphi 0, %s994
      %s1016 = sphi 0, %s1018
      %s1019 = sphi 0, %s1016
      %s1020 = sphi 0, %s1019
      %s1036 = sphi 0, %s1020
      %s1042 = sphi 0, %s1044
      %s1045 = sphi 0, %s1042
      %s1046 = sphi 0, %s1045
      %s1062 = sphi 0, %s1046
    $region4: #{classifier_forward.1} parent=1 // loop_header_branch
      %91 = sbr.rel (%p89) target = $region8
    $region5: #{classifier_forward.1} parent=1 // loop_body
      %s93 = ssub.s32 %s88, 1
      %s94 = ssub.s32 %s88, 2
      %s101 = sadd.s32 1, %s96
      %p102 = scmp.ge.s32.totalorder %s101, 5
      %s103 = scalar_select %p102, 0, %s101
      %s104 = sadd.s32 1, %s95
      %s105 = scalar_select %p102, %s104, %s95
      %p106 = scmp.ge.s32.totalorder %s105, 2
      %s107 = scalar_select %p106, 0, %s105
      %s108 = ssub.s32 %s95, %s107
      %p109 = scmp.eq.s32.totalorder %s108, 0
      %s111 = sadd.s32 %s110, 1
      %s112 = scalar_select %p109, %s110, %s111
      %p115 = pneg %p109
      %p116 = scmp.eq.s32.totalorder %s88, 9
      %p117 = por %p115, %p116
      %p118 = scmp.ne.s32.totalorder %s110, %s113
      %p119 = scmp.eq.s32.totalorder %s88, 0
      %p120 = por %p118, %p119
      %p121 = scmp.ne.s32.totalorder %s110, %s113
      %p122 = scmp.eq.s32.totalorder %s93, 9
      %p123 = por %p121, %p122
      %p124 = scmp.ne.s32.totalorder %s113, %s114
      %p125 = scmp.eq.s32.totalorder %s93, 0
      %p126 = por %p124, %p125
      %p127 = scmp.ne.s32.totalorder %s113, %s114
      %p128 = scmp.eq.s32.totalorder %s94, 9
      %p129 = por %p127, %p128
      %p131 = scmp.ne.s32.totalorder %s114, %s130
      %p132 = scmp.eq.s32.totalorder %s94, 0
      %p133 = por %p131, %p132
      %s135 = sadd.s32 %s134, 1
      %p138 = scmp.eq.s32.totalorder %s88, 9
      %p139 = scmp.ne.s32.totalorder %s134, %s136
      %p140 = scmp.eq.s32.totalorder %s88, 0
      %p141 = por %p139, %p140
      %p142 = scmp.ne.s32.totalorder %s134, %s136
      %p143 = scmp.eq.s32.totalorder %s93, 9
      %p144 = por %p142, %p143
      %p145 = scmp.ne.s32.totalorder %s136, %s137
      %p146 = scmp.eq.s32.totalorder %s93, 0
      %p147 = por %p145, %p146
      %p148 = scmp.ne.s32.totalorder %s136, %s137
      %p149 = scmp.eq.s32.totalorder %s94, 9
      %p150 = por %p148, %p149
      %p152 = scmp.ne.s32.totalorder %s137, %s151
      %p153 = scmp.eq.s32.totalorder %s94, 0
      %p154 = por %p152, %p153
      %s156 = sadd.s32 %s155, 1
      %p159 = scmp.eq.s32.totalorder %s88, 9
      %p160 = scmp.ne.s32.totalorder %s155, %s157
      %p161 = scmp.eq.s32.totalorder %s88, 0
      %p162 = por %p160, %p161
      %p163 = scmp.ne.s32.totalorder %s155, %s157
      %p164 = scmp.eq.s32.totalorder %s93, 9
      %p165 = por %p163, %p164
      %p166 = scmp.ne.s32.totalorder %s157, %s158
      %p167 = scmp.eq.s32.totalorder %s93, 0
      %p168 = por %p166, %p167
      %p169 = scmp.ne.s32.totalorder %s157, %s158
      %p170 = scmp.eq.s32.totalorder %s94, 9
      %p171 = por %p169, %p170
      %p173 = scmp.ne.s32.totalorder %s158, %s172
      %p174 = scmp.eq.s32.totalorder %s94, 0
      %p175 = por %p173, %p174
      %s177 = sadd.s32 %s176, 1
      %p180 = scmp.eq.s32.totalorder %s88, 9
      %p181 = scmp.ne.s32.totalorder %s176, %s178
      %p182 = scmp.eq.s32.totalorder %s88, 0
      %p183 = por %p181, %p182
      %p184 = scmp.ne.s32.totalorder %s176, %s178
      %p185 = scmp.eq.s32.totalorder %s93, 9
      %p186 = por %p184, %p185
      %p187 = scmp.ne.s32.totalorder %s178, %s179
      %p188 = scmp.eq.s32.totalorder %s93, 0
      %p189 = por %p187, %p188
      %p190 = scmp.ne.s32.totalorder %s178, %s179
      %p191 = scmp.eq.s32.totalorder %s94, 9
      %p192 = por %p190, %p191
      %p194 = scmp.ne.s32.totalorder %s179, %s193
      %p195 = scmp.eq.s32.totalorder %s94, 0
      %p196 = por %p194, %p195
      %s198 = sadd.s32 %s197, 1
      %p201 = scmp.eq.s32.totalorder %s88, 9
      %p202 = scmp.ne.s32.totalorder %s197, %s199
      %p203 = scmp.eq.s32.totalorder %s88, 0
      %p204 = por %p202, %p203
      %p205 = scmp.ne.s32.totalorder %s197, %s199
      %p206 = scmp.eq.s32.totalorder %s93, 9
      %p207 = por %p205, %p206
      %p208 = scmp.ne.s32.totalorder %s199, %s200
      %p209 = scmp.eq.s32.totalorder %s93, 0
      %p210 = por %p208, %p209
      %p211 = scmp.ne.s32.totalorder %s199, %s200
      %p212 = scmp.eq.s32.totalorder %s94, 9
      %p213 = por %p211, %p212
      %p215 = scmp.ne.s32.totalorder %s200, %s214
      %p216 = scmp.eq.s32.totalorder %s94, 0
      %p217 = por %p215, %p216
      %s219 = sadd.s32 %s218, 1
      %p222 = scmp.eq.s32.totalorder %s88, 9
      %p223 = scmp.ne.s32.totalorder %s218, %s220
      %p224 = scmp.eq.s32.totalorder %s88, 0
      %p225 = por %p223, %p224
      %p226 = scmp.ne.s32.totalorder %s218, %s220
      %p227 = scmp.eq.s32.totalorder %s93, 9
      %p228 = por %p226, %p227
      %p229 = scmp.ne.s32.totalorder %s220, %s221
      %p230 = scmp.eq.s32.totalorder %s93, 0
      %p231 = por %p229, %p230
      %p232 = scmp.ne.s32.totalorder %s220, %s221
      %p233 = scmp.eq.s32.totalorder %s94, 9
      %p234 = por %p232, %p233
      %p236 = scmp.ne.s32.totalorder %s221, %s235
      %p237 = scmp.eq.s32.totalorder %s94, 0
      %p238 = por %p236, %p237
      %s240 = sadd.s32 %s239, 1
      %p243 = scmp.eq.s32.totalorder %s88, 9
      %p244 = scmp.ne.s32.totalorder %s239, %s241
      %p245 = scmp.eq.s32.totalorder %s88, 0
      %p246 = por %p244, %p245
      %p247 = scmp.ne.s32.totalorder %s239, %s241
      %p248 = scmp.eq.s32.totalorder %s93, 9
      %p249 = por %p247, %p248
      %p250 = scmp.ne.s32.totalorder %s241, %s242
      %p251 = scmp.eq.s32.totalorder %s93, 0
      %p252 = por %p250, %p251
      %p253 = scmp.ne.s32.totalorder %s241, %s242
      %p254 = scmp.eq.s32.totalorder %s94, 9
      %p255 = por %p253, %p254
      %p257 = scmp.ne.s32.totalorder %s242, %s256
      %p258 = scmp.eq.s32.totalorder %s94, 0
      %p259 = por %p257, %p258
      %s260 = ssub.s32 %s96, %s103
      %p261 = scmp.eq.s32.totalorder %s260, 0
      %s263 = sadd.s32 %s262, 1
      %s264 = scalar_select %p261, %s262, %s263
      %p267 = pneg %p261
      %p268 = scmp.eq.s32.totalorder %s88, 9
      %p269 = por %p267, %p268
      %p270 = scmp.ne.s32.totalorder %s262, %s265
      %p271 = scmp.eq.s32.totalorder %s88, 0
      %p272 = por %p270, %p271
      %p273 = scmp.ne.s32.totalorder %s262, %s265
      %p274 = scmp.eq.s32.totalorder %s93, 9
      %p275 = por %p273, %p274
      %p276 = scmp.ne.s32.totalorder %s265, %s266
      %p277 = scmp.eq.s32.totalorder %s93, 0
      %p278 = por %p276, %p277
      %p279 = scmp.ne.s32.totalorder %s265, %s266
      %p280 = scmp.eq.s32.totalorder %s94, 9
      %p281 = por %p279, %p280
      %p283 = scmp.ne.s32.totalorder %s266, %s282
      %p284 = scmp.eq.s32.totalorder %s94, 0
      %p285 = por %p283, %p284
      %s286 = ssub.s32 %s96, %s103
      %p287 = scmp.eq.s32.totalorder %s286, 0
      %s289 = sadd.s32 %s288, 1
      %s290 = scalar_select %p287, %s288, %s289
      %p293 = pneg %p287
      %p294 = scmp.eq.s32.totalorder %s88, 9
      %p295 = por %p293, %p294
      %p296 = scmp.ne.s32.totalorder %s288, %s291
      %p297 = scmp.eq.s32.totalorder %s88, 0
      %p298 = por %p296, %p297
      %p299 = scmp.ne.s32.totalorder %s288, %s291
      %p300 = scmp.eq.s32.totalorder %s93, 9
      %p301 = por %p299, %p300
      %p302 = scmp.ne.s32.totalorder %s291, %s292
      %p303 = scmp.eq.s32.totalorder %s93, 0
      %p304 = por %p302, %p303
      %p305 = scmp.ne.s32.totalorder %s291, %s292
      %p306 = scmp.eq.s32.totalorder %s94, 9
      %p307 = por %p305, %p306
      %p309 = scmp.ne.s32.totalorder %s292, %s308
      %p310 = scmp.eq.s32.totalorder %s94, 0
      %p311 = por %p309, %p310
      %s312 = ssub.s32 %s96, %s103
      %p313 = scmp.eq.s32.totalorder %s312, 0
      %s315 = sadd.s32 %s314, 1
      %s316 = scalar_select %p313, %s314, %s315
      %p319 = pneg %p313
      %p320 = scmp.eq.s32.totalorder %s88, 9
      %p321 = por %p319, %p320
      %p322 = scmp.ne.s32.totalorder %s314, %s317
      %p323 = scmp.eq.s32.totalorder %s88, 0
      %p324 = por %p322, %p323
      %p325 = scmp.ne.s32.totalorder %s314, %s317
      %p326 = scmp.eq.s32.totalorder %s93, 9
      %p327 = por %p325, %p326
      %p328 = scmp.ne.s32.totalorder %s317, %s318
      %p329 = scmp.eq.s32.totalorder %s93, 0
      %p330 = por %p328, %p329
      %p331 = scmp.ne.s32.totalorder %s317, %s318
      %p332 = scmp.eq.s32.totalorder %s94, 9
      %p333 = por %p331, %p332
      %p335 = scmp.ne.s32.totalorder %s318, %s334
      %p336 = scmp.eq.s32.totalorder %s94, 0
      %p337 = por %p335, %p336
      %s338 = ssub.s32 %s96, %s103
      %p339 = scmp.eq.s32.totalorder %s338, 0
      %s341 = sadd.s32 %s340, 1
      %s342 = scalar_select %p339, %s340, %s341
      %p345 = pneg %p339
      %p346 = scmp.eq.s32.totalorder %s88, 9
      %p347 = por %p345, %p346
      %p348 = scmp.ne.s32.totalorder %s340, %s343
      %p349 = scmp.eq.s32.totalorder %s88, 0
      %p350 = por %p348, %p349
      %p351 = scmp.ne.s32.totalorder %s340, %s343
      %p352 = scmp.eq.s32.totalorder %s93, 9
      %p353 = por %p351, %p352
      %p354 = scmp.ne.s32.totalorder %s343, %s344
      %p355 = scmp.eq.s32.totalorder %s93, 0
      %p356 = por %p354, %p355
      %p357 = scmp.ne.s32.totalorder %s343, %s344
      %p358 = scmp.eq.s32.totalorder %s94, 9
      %p359 = por %p357, %p358
      %p361 = scmp.ne.s32.totalorder %s344, %s360
      %p362 = scmp.eq.s32.totalorder %s94, 0
      %p363 = por %p361, %p362
      %s364 = ssub.s32 %s96, %s103
      %p365 = scmp.eq.s32.totalorder %s364, 0
      %s367 = sadd.s32 %s366, 1
      %s368 = scalar_select %p365, %s366, %s367
      %p371 = pneg %p365
      %p372 = scmp.eq.s32.totalorder %s88, 9
      %p373 = por %p371, %p372
      %p374 = scmp.ne.s32.totalorder %s366, %s369
      %p375 = scmp.eq.s32.totalorder %s88, 0
      %p376 = por %p374, %p375
      %p377 = scmp.ne.s32.totalorder %s366, %s369
      %p378 = scmp.eq.s32.totalorder %s93, 9
      %p379 = por %p377, %p378
      %p380 = scmp.ne.s32.totalorder %s369, %s370
      %p381 = scmp.eq.s32.totalorder %s93, 0
      %p382 = por %p380, %p381
      %p383 = scmp.ne.s32.totalorder %s369, %s370
      %p384 = scmp.eq.s32.totalorder %s94, 9
      %p385 = por %p383, %p384
      %p387 = scmp.ne.s32.totalorder %s370, %s386
      %p388 = scmp.eq.s32.totalorder %s94, 0
      %p389 = por %p387, %p388
      %s390 = ssub.s32 %s96, %s103
      %p391 = scmp.eq.s32.totalorder %s390, 0
      %s393 = sadd.s32 %s392, 1
      %s394 = scalar_select %p391, %s392, %s393
      %p397 = pneg %p391
      %p398 = scmp.eq.s32.totalorder %s88, 9
      %p399 = por %p397, %p398
      %p400 = scmp.ne.s32.totalorder %s392, %s395
      %p401 = scmp.eq.s32.totalorder %s88, 0
      %p402 = por %p400, %p401
      %p403 = scmp.ne.s32.totalorder %s392, %s395
      %p404 = scmp.eq.s32.totalorder %s93, 9
      %p405 = por %p403, %p404
      %p406 = scmp.ne.s32.totalorder %s395, %s396
      %p407 = scmp.eq.s32.totalorder %s93, 0
      %p408 = por %p406, %p407
      %p409 = scmp.ne.s32.totalorder %s395, %s396
      %p410 = scmp.eq.s32.totalorder %s94, 9
      %p411 = por %p409, %p410
      %p413 = scmp.ne.s32.totalorder %s396, %s412
      %p414 = scmp.eq.s32.totalorder %s94, 0
      %p415 = por %p413, %p414
      %s416 = ssub.s32 %s96, %s103
      %p417 = scmp.eq.s32.totalorder %s416, 0
      %s419 = sadd.s32 %s418, 1
      %s420 = scalar_select %p417, %s418, %s419
      %p423 = pneg %p417
      %p424 = scmp.eq.s32.totalorder %s88, 9
      %p425 = por %p423, %p424
      %p426 = scmp.ne.s32.totalorder %s418, %s421
      %p427 = scmp.eq.s32.totalorder %s88, 0
      %p428 = por %p426, %p427
      %p429 = scmp.ne.s32.totalorder %s418, %s421
      %p430 = scmp.eq.s32.totalorder %s93, 9
      %p431 = por %p429, %p430
      %p432 = scmp.ne.s32.totalorder %s421, %s422
      %p433 = scmp.eq.s32.totalorder %s93, 0
      %p434 = por %p432, %p433
      %p435 = scmp.ne.s32.totalorder %s421, %s422
      %p436 = scmp.eq.s32.totalorder %s94, 9
      %p437 = por %p435, %p436
      %p439 = scmp.ne.s32.totalorder %s422, %s438
      %p440 = scmp.eq.s32.totalorder %s94, 0
      %p441 = por %p439, %p440
      %s442 = ssub.s32 %s96, %s103
      %p443 = scmp.eq.s32.totalorder %s442, 0
      %s445 = sadd.s32 %s444, 1
      %s446 = scalar_select %p443, %s444, %s445
      %p449 = pneg %p443
      %p450 = scmp.eq.s32.totalorder %s88, 9
      %p451 = por %p449, %p450
      %p452 = scmp.ne.s32.totalorder %s444, %s447
      %p453 = scmp.eq.s32.totalorder %s88, 0
      %p454 = por %p452, %p453
      %p455 = scmp.ne.s32.totalorder %s444, %s447
      %p456 = scmp.eq.s32.totalorder %s93, 9
      %p457 = por %p455, %p456
      %p458 = scmp.ne.s32.totalorder %s447, %s448
      %p459 = scmp.eq.s32.totalorder %s93, 0
      %p460 = por %p458, %p459
      %p461 = scmp.ne.s32.totalorder %s447, %s448
      %p462 = scmp.eq.s32.totalorder %s94, 9
      %p463 = por %p461, %p462
      %p465 = scmp.ne.s32.totalorder %s448, %s464
      %p466 = scmp.eq.s32.totalorder %s94, 0
      %p467 = por %p465, %p466
      %s468 = ssub.s32 %s96, %s103
      %p469 = scmp.eq.s32.totalorder %s468, 0
      %s471 = sadd.s32 %s470, 1
      %s472 = scalar_select %p469, %s470, %s471
      %p475 = pneg %p469
      %p476 = scmp.eq.s32.totalorder %s88, 9
      %p477 = por %p475, %p476
      %p478 = scmp.ne.s32.totalorder %s470, %s473
      %p479 = scmp.eq.s32.totalorder %s88, 0
      %p480 = por %p478, %p479
      %p481 = scmp.ne.s32.totalorder %s470, %s473
      %p482 = scmp.eq.s32.totalorder %s93, 9
      %p483 = por %p481, %p482
      %p484 = scmp.ne.s32.totalorder %s473, %s474
      %p485 = scmp.eq.s32.totalorder %s93, 0
      %p486 = por %p484, %p485
      %p487 = scmp.ne.s32.totalorder %s473, %s474
      %p488 = scmp.eq.s32.totalorder %s94, 9
      %p489 = por %p487, %p488
      %p491 = scmp.ne.s32.totalorder %s474, %s490
      %p492 = scmp.eq.s32.totalorder %s94, 0
      %p493 = por %p491, %p492
      %s494 = ssub.s32 %s96, %s103
      %p495 = scmp.eq.s32.totalorder %s494, 0
      %s497 = sadd.s32 %s496, 1
      %s498 = scalar_select %p495, %s496, %s497
      %p501 = pneg %p495
      %p502 = scmp.eq.s32.totalorder %s88, 9
      %p503 = por %p501, %p502
      %p504 = scmp.ne.s32.totalorder %s496, %s499
      %p505 = scmp.eq.s32.totalorder %s88, 0
      %p506 = por %p504, %p505
      %p507 = scmp.ne.s32.totalorder %s496, %s499
      %p508 = scmp.eq.s32.totalorder %s93, 9
      %p509 = por %p507, %p508
      %p510 = scmp.ne.s32.totalorder %s499, %s500
      %p511 = scmp.eq.s32.totalorder %s93, 0
      %p512 = por %p510, %p511
      %p513 = scmp.ne.s32.totalorder %s499, %s500
      %p514 = scmp.eq.s32.totalorder %s94, 9
      %p515 = por %p513, %p514
      %p517 = scmp.ne.s32.totalorder %s500, %s516
      %p518 = scmp.eq.s32.totalorder %s94, 0
      %p519 = por %p517, %p518
      %s520 = ssub.s32 %s96, %s103
      %p521 = scmp.eq.s32.totalorder %s520, 0
      %s523 = sadd.s32 %s522, 1
      %s524 = scalar_select %p521, %s522, %s523
      %p527 = pneg %p521
      %p528 = scmp.eq.s32.totalorder %s88, 9
      %p529 = por %p527, %p528
      %p530 = scmp.ne.s32.totalorder %s522, %s525
      %p531 = scmp.eq.s32.totalorder %s88, 0
      %p532 = por %p530, %p531
      %p533 = scmp.ne.s32.totalorder %s522, %s525
      %p534 = scmp.eq.s32.totalorder %s93, 9
      %p535 = por %p533, %p534
      %p536 = scmp.ne.s32.totalorder %s525, %s526
      %p537 = scmp.eq.s32.totalorder %s93, 0
      %p538 = por %p536, %p537
      %p539 = scmp.ne.s32.totalorder %s525, %s526
      %p540 = scmp.eq.s32.totalorder %s94, 9
      %p541 = por %p539, %p540
      %p543 = scmp.ne.s32.totalorder %s526, %s542
      %p544 = scmp.eq.s32.totalorder %s94, 0
      %p545 = por %p543, %p544
      %s546 = ssub.s32 %s96, %s103
      %p547 = scmp.eq.s32.totalorder %s546, 0
      %s549 = sadd.s32 %s548, 1
      %s550 = scalar_select %p547, %s548, %s549
      %p553 = pneg %p547
      %p554 = scmp.eq.s32.totalorder %s88, 9
      %p555 = por %p553, %p554
      %p556 = scmp.ne.s32.totalorder %s548, %s551
      %p557 = scmp.eq.s32.totalorder %s88, 0
      %p558 = por %p556, %p557
      %p559 = scmp.ne.s32.totalorder %s548, %s551
      %p560 = scmp.eq.s32.totalorder %s93, 9
      %p561 = por %p559, %p560
      %p562 = scmp.ne.s32.totalorder %s551, %s552
      %p563 = scmp.eq.s32.totalorder %s93, 0
      %p564 = por %p562, %p563
      %p565 = scmp.ne.s32.totalorder %s551, %s552
      %p566 = scmp.eq.s32.totalorder %s94, 9
      %p567 = por %p565, %p566
      %p569 = scmp.ne.s32.totalorder %s552, %s568
      %p570 = scmp.eq.s32.totalorder %s94, 0
      %p571 = por %p569, %p570
      %s572 = ssub.s32 %s96, %s103
      %p573 = scmp.eq.s32.totalorder %s572, 0
      %s575 = sadd.s32 %s574, 1
      %s576 = scalar_select %p573, %s574, %s575
      %p579 = pneg %p573
      %p580 = scmp.eq.s32.totalorder %s88, 9
      %p581 = por %p579, %p580
      %p582 = scmp.ne.s32.totalorder %s574, %s577
      %p583 = scmp.eq.s32.totalorder %s88, 0
      %p584 = por %p582, %p583
      %p585 = scmp.ne.s32.totalorder %s574, %s577
      %p586 = scmp.eq.s32.totalorder %s93, 9
      %p587 = por %p585, %p586
      %p588 = scmp.ne.s32.totalorder %s577, %s578
      %p589 = scmp.eq.s32.totalorder %s93, 0
      %p590 = por %p588, %p589
      %p591 = scmp.ne.s32.totalorder %s577, %s578
      %p592 = scmp.eq.s32.totalorder %s94, 9
      %p593 = por %p591, %p592
      %p595 = scmp.ne.s32.totalorder %s578, %s594
      %p596 = scmp.eq.s32.totalorder %s94, 0
      %p597 = por %p595, %p596
      %s598 = ssub.s32 %s96, %s103
      %p599 = scmp.eq.s32.totalorder %s598, 0
      %s601 = sadd.s32 %s600, 1
      %s602 = scalar_select %p599, %s600, %s601
      %p605 = pneg %p599
      %p606 = scmp.eq.s32.totalorder %s88, 9
      %p607 = por %p605, %p606
      %p608 = scmp.ne.s32.totalorder %s600, %s603
      %p609 = scmp.eq.s32.totalorder %s88, 0
      %p610 = por %p608, %p609
      %p611 = scmp.ne.s32.totalorder %s600, %s603
      %p612 = scmp.eq.s32.totalorder %s93, 9
      %p613 = por %p611, %p612
      %p614 = scmp.ne.s32.totalorder %s603, %s604
      %p615 = scmp.eq.s32.totalorder %s93, 0
      %p616 = por %p614, %p615
      %p617 = scmp.ne.s32.totalorder %s603, %s604
      %p618 = scmp.eq.s32.totalorder %s94, 9
      %p619 = por %p617, %p618
      %p621 = scmp.ne.s32.totalorder %s604, %s620
      %p622 = scmp.eq.s32.totalorder %s94, 0
      %p623 = por %p621, %p622
      %s624 = ssub.s32 %s96, %s103
      %p625 = scmp.eq.s32.totalorder %s624, 0
      %s627 = sadd.s32 %s626, 1
      %s628 = scalar_select %p625, %s626, %s627
      %p631 = pneg %p625
      %p632 = scmp.eq.s32.totalorder %s88, 9
      %p633 = por %p631, %p632
      %p634 = scmp.ne.s32.totalorder %s626, %s629
      %p635 = scmp.eq.s32.totalorder %s88, 0
      %p636 = por %p634, %p635
      %p637 = scmp.ne.s32.totalorder %s626, %s629
      %p638 = scmp.eq.s32.totalorder %s93, 9
      %p639 = por %p637, %p638
      %p640 = scmp.ne.s32.totalorder %s629, %s630
      %p641 = scmp.eq.s32.totalorder %s93, 0
      %p642 = por %p640, %p641
      %p643 = scmp.ne.s32.totalorder %s629, %s630
      %p644 = scmp.eq.s32.totalorder %s94, 9
      %p645 = por %p643, %p644
      %p647 = scmp.ne.s32.totalorder %s630, %s646
      %p648 = scmp.eq.s32.totalorder %s94, 0
      %p649 = por %p647, %p648
      %s650 = ssub.s32 %s96, %s103
      %p651 = scmp.eq.s32.totalorder %s650, 0
      %s653 = sadd.s32 %s652, 1
      %s654 = scalar_select %p651, %s652, %s653
      %p657 = pneg %p651
      %p658 = scmp.eq.s32.totalorder %s88, 9
      %p659 = por %p657, %p658
      %p660 = scmp.ne.s32.totalorder %s652, %s655
      %p661 = scmp.eq.s32.totalorder %s88, 0
      %p662 = por %p660, %p661
      %p663 = scmp.ne.s32.totalorder %s652, %s655
      %p664 = scmp.eq.s32.totalorder %s93, 9
      %p665 = por %p663, %p664
      %p666 = scmp.ne.s32.totalorder %s655, %s656
      %p667 = scmp.eq.s32.totalorder %s93, 0
      %p668 = por %p666, %p667
      %p669 = scmp.ne.s32.totalorder %s655, %s656
      %p670 = scmp.eq.s32.totalorder %s94, 9
      %p671 = por %p669, %p670
      %p673 = scmp.ne.s32.totalorder %s656, %s672
      %p674 = scmp.eq.s32.totalorder %s94, 0
      %p675 = por %p673, %p674
      %s676 = ssub.s32 %s96, %s103
      %p677 = scmp.eq.s32.totalorder %s676, 0
      %s679 = sadd.s32 %s678, 1
      %s680 = scalar_select %p677, %s678, %s679
      %p683 = pneg %p677
      %p684 = scmp.eq.s32.totalorder %s88, 9
      %p685 = por %p683, %p684
      %p686 = scmp.ne.s32.totalorder %s678, %s681
      %p687 = scmp.eq.s32.totalorder %s88, 0
      %p688 = por %p686, %p687
      %p689 = scmp.ne.s32.totalorder %s678, %s681
      %p690 = scmp.eq.s32.totalorder %s93, 9
      %p691 = por %p689, %p690
      %p692 = scmp.ne.s32.totalorder %s681, %s682
      %p693 = scmp.eq.s32.totalorder %s93, 0
      %p694 = por %p692, %p693
      %p695 = scmp.ne.s32.totalorder %s681, %s682
      %p696 = scmp.eq.s32.totalorder %s94, 9
      %p697 = por %p695, %p696
      %p699 = scmp.ne.s32.totalorder %s682, %s698
      %p700 = scmp.eq.s32.totalorder %s94, 0
      %p701 = por %p699, %p700
      %s702 = ssub.s32 %s96, %s103
      %p703 = scmp.eq.s32.totalorder %s702, 0
      %s705 = sadd.s32 %s704, 1
      %s706 = scalar_select %p703, %s704, %s705
      %p709 = pneg %p703
      %p710 = scmp.eq.s32.totalorder %s88, 9
      %p711 = por %p709, %p710
      %p712 = scmp.ne.s32.totalorder %s704, %s707
      %p713 = scmp.eq.s32.totalorder %s88, 0
      %p714 = por %p712, %p713
      %p715 = scmp.ne.s32.totalorder %s704, %s707
      %p716 = scmp.eq.s32.totalorder %s93, 9
      %p717 = por %p715, %p716
      %p718 = scmp.ne.s32.totalorder %s707, %s708
      %p719 = scmp.eq.s32.totalorder %s93, 0
      %p720 = por %p718, %p719
      %p721 = scmp.ne.s32.totalorder %s707, %s708
      %p722 = scmp.eq.s32.totalorder %s94, 9
      %p723 = por %p721, %p722
      %p725 = scmp.ne.s32.totalorder %s708, %s724
      %p726 = scmp.eq.s32.totalorder %s94, 0
      %p727 = por %p725, %p726
      %s728 = ssub.s32 %s96, %s103
      %p729 = scmp.eq.s32.totalorder %s728, 0
      %s731 = sadd.s32 %s730, 1
      %s732 = scalar_select %p729, %s730, %s731
      %p735 = pneg %p729
      %p736 = scmp.eq.s32.totalorder %s88, 9
      %p737 = por %p735, %p736
      %p738 = scmp.ne.s32.totalorder %s730, %s733
      %p739 = scmp.eq.s32.totalorder %s88, 0
      %p740 = por %p738, %p739
      %p741 = scmp.ne.s32.totalorder %s730, %s733
      %p742 = scmp.eq.s32.totalorder %s93, 9
      %p743 = por %p741, %p742
      %p744 = scmp.ne.s32.totalorder %s733, %s734
      %p745 = scmp.eq.s32.totalorder %s93, 0
      %p746 = por %p744, %p745
      %p747 = scmp.ne.s32.totalorder %s733, %s734
      %p748 = scmp.eq.s32.totalorder %s94, 9
      %p749 = por %p747, %p748
      %p751 = scmp.ne.s32.totalorder %s734, %s750
      %p752 = scmp.eq.s32.totalorder %s94, 0
      %p753 = por %p751, %p752
      %s754 = ssub.s32 %s96, %s103
      %p755 = scmp.eq.s32.totalorder %s754, 0
      %s757 = sadd.s32 %s756, 1
      %s758 = scalar_select %p755, %s756, %s757
      %p761 = pneg %p755
      %p762 = scmp.eq.s32.totalorder %s88, 9
      %p763 = por %p761, %p762
      %p764 = scmp.ne.s32.totalorder %s756, %s759
      %p765 = scmp.eq.s32.totalorder %s88, 0
      %p766 = por %p764, %p765
      %p767 = scmp.ne.s32.totalorder %s756, %s759
      %p768 = scmp.eq.s32.totalorder %s93, 9
      %p769 = por %p767, %p768
      %p770 = scmp.ne.s32.totalorder %s759, %s760
      %p771 = scmp.eq.s32.totalorder %s93, 0
      %p772 = por %p770, %p771
      %p773 = scmp.ne.s32.totalorder %s759, %s760
      %p774 = scmp.eq.s32.totalorder %s94, 9
      %p775 = por %p773, %p774
      %p777 = scmp.ne.s32.totalorder %s760, %s776
      %p778 = scmp.eq.s32.totalorder %s94, 0
      %p779 = por %p777, %p778
      %s780 = ssub.s32 %s96, %s103
      %p781 = scmp.eq.s32.totalorder %s780, 0
      %s783 = sadd.s32 %s782, 1
      %s784 = scalar_select %p781, %s782, %s783
      %p787 = pneg %p781
      %p788 = scmp.eq.s32.totalorder %s88, 9
      %p789 = por %p787, %p788
      %p790 = scmp.ne.s32.totalorder %s782, %s785
      %p791 = scmp.eq.s32.totalorder %s88, 0
      %p792 = por %p790, %p791
      %p793 = scmp.ne.s32.totalorder %s782, %s785
      %p794 = scmp.eq.s32.totalorder %s93, 9
      %p795 = por %p793, %p794
      %p796 = scmp.ne.s32.totalorder %s785, %s786
      %p797 = scmp.eq.s32.totalorder %s93, 0
      %p798 = por %p796, %p797
      %p799 = scmp.ne.s32.totalorder %s785, %s786
      %p800 = scmp.eq.s32.totalorder %s94, 9
      %p801 = por %p799, %p800
      %p803 = scmp.ne.s32.totalorder %s786, %s802
      %p804 = scmp.eq.s32.totalorder %s94, 0
      %p805 = por %p803, %p804
      %s806 = ssub.s32 %s96, %s103
      %p807 = scmp.eq.s32.totalorder %s806, 0
      %s809 = sadd.s32 %s808, 1
      %s810 = scalar_select %p807, %s808, %s809
      %p813 = pneg %p807
      %p814 = scmp.eq.s32.totalorder %s88, 9
      %p815 = por %p813, %p814
      %p816 = scmp.ne.s32.totalorder %s808, %s811
      %p817 = scmp.eq.s32.totalorder %s88, 0
      %p818 = por %p816, %p817
      %p819 = scmp.ne.s32.totalorder %s808, %s811
      %p820 = scmp.eq.s32.totalorder %s93, 9
      %p821 = por %p819, %p820
      %p822 = scmp.ne.s32.totalorder %s811, %s812
      %p823 = scmp.eq.s32.totalorder %s93, 0
      %p824 = por %p822, %p823
      %p825 = scmp.ne.s32.totalorder %s811, %s812
      %p826 = scmp.eq.s32.totalorder %s94, 9
      %p827 = por %p825, %p826
      %p829 = scmp.ne.s32.totalorder %s812, %s828
      %p830 = scmp.eq.s32.totalorder %s94, 0
      %p831 = por %p829, %p830
      %s832 = ssub.s32 %s96, %s103
      %p833 = scmp.eq.s32.totalorder %s832, 0
      %s835 = sadd.s32 %s834, 1
      %s836 = scalar_select %p833, %s834, %s835
      %p839 = pneg %p833
      %p840 = scmp.eq.s32.totalorder %s88, 9
      %p841 = por %p839, %p840
      %p842 = scmp.ne.s32.totalorder %s834, %s837
      %p843 = scmp.eq.s32.totalorder %s88, 0
      %p844 = por %p842, %p843
      %p845 = scmp.ne.s32.totalorder %s834, %s837
      %p846 = scmp.eq.s32.totalorder %s93, 9
      %p847 = por %p845, %p846
      %p848 = scmp.ne.s32.totalorder %s837, %s838
      %p849 = scmp.eq.s32.totalorder %s93, 0
      %p850 = por %p848, %p849
      %p851 = scmp.ne.s32.totalorder %s837, %s838
      %p852 = scmp.eq.s32.totalorder %s94, 9
      %p853 = por %p851, %p852
      %p855 = scmp.ne.s32.totalorder %s838, %s854
      %p856 = scmp.eq.s32.totalorder %s94, 0
      %p857 = por %p855, %p856
      %s858 = ssub.s32 %s96, %s103
      %p859 = scmp.eq.s32.totalorder %s858, 0
      %s861 = sadd.s32 %s860, 1
      %s862 = scalar_select %p859, %s860, %s861
      %p865 = pneg %p859
      %p866 = scmp.eq.s32.totalorder %s88, 9
      %p867 = por %p865, %p866
      %p868 = scmp.ne.s32.totalorder %s860, %s863
      %p869 = scmp.eq.s32.totalorder %s88, 0
      %p870 = por %p868, %p869
      %p871 = scmp.ne.s32.totalorder %s860, %s863
      %p872 = scmp.eq.s32.totalorder %s93, 9
      %p873 = por %p871, %p872
      %p874 = scmp.ne.s32.totalorder %s863, %s864
      %p875 = scmp.eq.s32.totalorder %s93, 0
      %p876 = por %p874, %p875
      %p877 = scmp.ne.s32.totalorder %s863, %s864
      %p878 = scmp.eq.s32.totalorder %s94, 9
      %p879 = por %p877, %p878
      %p881 = scmp.ne.s32.totalorder %s864, %s880
      %p882 = scmp.eq.s32.totalorder %s94, 0
      %p883 = por %p881, %p882
      %s884 = ssub.s32 %s96, %s103
      %p885 = scmp.eq.s32.totalorder %s884, 0
      %s887 = sadd.s32 %s886, 1
      %s888 = scalar_select %p885, %s886, %s887
      %p891 = pneg %p885
      %p892 = scmp.eq.s32.totalorder %s88, 9
      %p893 = por %p891, %p892
      %p894 = scmp.ne.s32.totalorder %s886, %s889
      %p895 = scmp.eq.s32.totalorder %s88, 0
      %p896 = por %p894, %p895
      %p897 = scmp.ne.s32.totalorder %s886, %s889
      %p898 = scmp.eq.s32.totalorder %s93, 9
      %p899 = por %p897, %p898
      %p900 = scmp.ne.s32.totalorder %s889, %s890
      %p901 = scmp.eq.s32.totalorder %s93, 0
      %p902 = por %p900, %p901
      %p903 = scmp.ne.s32.totalorder %s889, %s890
      %p904 = scmp.eq.s32.totalorder %s94, 9
      %p905 = por %p903, %p904
      %p907 = scmp.ne.s32.totalorder %s890, %s906
      %p908 = scmp.eq.s32.totalorder %s94, 0
      %p909 = por %p907, %p908
      %s910 = ssub.s32 %s96, %s103
      %p911 = scmp.eq.s32.totalorder %s910, 0
      %s913 = sadd.s32 %s912, 1
      %s914 = scalar_select %p911, %s912, %s913
      %p917 = pneg %p911
      %p918 = scmp.eq.s32.totalorder %s88, 9
      %p919 = por %p917, %p918
      %p920 = scmp.ne.s32.totalorder %s912, %s915
      %p921 = scmp.eq.s32.totalorder %s88, 0
      %p922 = por %p920, %p921
      %p923 = scmp.ne.s32.totalorder %s912, %s915
      %p924 = scmp.eq.s32.totalorder %s93, 9
      %p925 = por %p923, %p924
      %p926 = scmp.ne.s32.totalorder %s915, %s916
      %p927 = scmp.eq.s32.totalorder %s93, 0
      %p928 = por %p926, %p927
      %p929 = scmp.ne.s32.totalorder %s915, %s916
      %p930 = scmp.eq.s32.totalorder %s94, 9
      %p931 = por %p929, %p930
      %p933 = scmp.ne.s32.totalorder %s916, %s932
      %p934 = scmp.eq.s32.totalorder %s94, 0
      %p935 = por %p933, %p934
      %s936 = ssub.s32 %s96, %s103
      %p937 = scmp.eq.s32.totalorder %s936, 0
      %s939 = sadd.s32 %s938, 1
      %s940 = scalar_select %p937, %s938, %s939
      %p943 = pneg %p937
      %p944 = scmp.eq.s32.totalorder %s88, 9
      %p945 = por %p943, %p944
      %p946 = scmp.ne.s32.totalorder %s938, %s941
      %p947 = scmp.eq.s32.totalorder %s88, 0
      %p948 = por %p946, %p947
      %p949 = scmp.ne.s32.totalorder %s938, %s941
      %p950 = scmp.eq.s32.totalorder %s93, 9
      %p951 = por %p949, %p950
      %p952 = scmp.ne.s32.totalorder %s941, %s942
      %p953 = scmp.eq.s32.totalorder %s93, 0
      %p954 = por %p952, %p953
      %p955 = scmp.ne.s32.totalorder %s941, %s942
      %p956 = scmp.eq.s32.totalorder %s94, 9
      %p957 = por %p955, %p956
      %p959 = scmp.ne.s32.totalorder %s942, %s958
      %p960 = scmp.eq.s32.totalorder %s94, 0
      %p961 = por %p959, %p960
      %s962 = ssub.s32 %s96, %s103
      %p963 = scmp.eq.s32.totalorder %s962, 0
      %s965 = sadd.s32 %s964, 1
      %s966 = scalar_select %p963, %s964, %s965
      %p969 = pneg %p963
      %p970 = scmp.eq.s32.totalorder %s88, 9
      %p971 = por %p969, %p970
      %p972 = scmp.ne.s32.totalorder %s964, %s967
      %p973 = scmp.eq.s32.totalorder %s88, 0
      %p974 = por %p972, %p973
      %p975 = scmp.ne.s32.totalorder %s964, %s967
      %p976 = scmp.eq.s32.totalorder %s93, 9
      %p977 = por %p975, %p976
      %p978 = scmp.ne.s32.totalorder %s967, %s968
      %p979 = scmp.eq.s32.totalorder %s93, 0
      %p980 = por %p978, %p979
      %p981 = scmp.ne.s32.totalorder %s967, %s968
      %p982 = scmp.eq.s32.totalorder %s94, 9
      %p983 = por %p981, %p982
      %p985 = scmp.ne.s32.totalorder %s968, %s984
      %p986 = scmp.eq.s32.totalorder %s94, 0
      %p987 = por %p985, %p986
      %s988 = ssub.s32 %s96, %s103
      %p989 = scmp.eq.s32.totalorder %s988, 0
      %s991 = sadd.s32 %s990, 1
      %s992 = scalar_select %p989, %s990, %s991
      %p995 = pneg %p989
      %p996 = scmp.eq.s32.totalorder %s88, 9
      %p997 = por %p995, %p996
      %p998 = scmp.ne.s32.totalorder %s990, %s993
      %p999 = scmp.eq.s32.totalorder %s88, 0
      %p1000 = por %p998, %p999
      %p1001 = scmp.ne.s32.totalorder %s990, %s993
      %p1002 = scmp.eq.s32.totalorder %s93, 9
      %p1003 = por %p1001, %p1002
      %p1004 = scmp.ne.s32.totalorder %s993, %s994
      %p1005 = scmp.eq.s32.totalorder %s93, 0
      %p1006 = por %p1004, %p1005
      %p1007 = scmp.ne.s32.totalorder %s993, %s994
      %p1008 = scmp.eq.s32.totalorder %s94, 9
      %p1009 = por %p1007, %p1008
      %p1011 = scmp.ne.s32.totalorder %s994, %s1010
      %p1012 = scmp.eq.s32.totalorder %s94, 0
      %p1013 = por %p1011, %p1012
      %s1014 = ssub.s32 %s96, %s103
      %p1015 = scmp.eq.s32.totalorder %s1014, 0
      %s1017 = sadd.s32 %s1016, 1
      %s1018 = scalar_select %p1015, %s1016, %s1017
      %p1021 = pneg %p1015
      %p1022 = scmp.eq.s32.totalorder %s88, 9
      %p1023 = por %p1021, %p1022
      %p1024 = scmp.ne.s32.totalorder %s1016, %s1019
      %p1025 = scmp.eq.s32.totalorder %s88, 0
      %p1026 = por %p1024, %p1025
      %p1027 = scmp.ne.s32.totalorder %s1016, %s1019
      %p1028 = scmp.eq.s32.totalorder %s93, 9
      %p1029 = por %p1027, %p1028
      %p1030 = scmp.ne.s32.totalorder %s1019, %s1020
      %p1031 = scmp.eq.s32.totalorder %s93, 0
      %p1032 = por %p1030, %p1031
      %p1033 = scmp.ne.s32.totalorder %s1019, %s1020
      %p1034 = scmp.eq.s32.totalorder %s94, 9
      %p1035 = por %p1033, %p1034
      %p1037 = scmp.ne.s32.totalorder %s1020, %s1036
      %p1038 = scmp.eq.s32.totalorder %s94, 0
      %p1039 = por %p1037, %p1038
      %s1040 = ssub.s32 %s95, %s107
      %p1041 = scmp.eq.s32.totalorder %s1040, 0
      %s1043 = sadd.s32 %s1042, 1
      %s1044 = scalar_select %p1041, %s1042, %s1043
      %p1047 = pneg %p1041
      %p1048 = scmp.eq.s32.totalorder %s88, 9
      %p1049 = por %p1047, %p1048
      %p1050 = scmp.ne.s32.totalorder %s1042, %s1045
      %p1051 = scmp.eq.s32.totalorder %s88, 0
      %p1052 = por %p1050, %p1051
      %p1053 = scmp.ne.s32.totalorder %s1042, %s1045
      %p1054 = scmp.eq.s32.totalorder %s93, 9
      %p1055 = por %p1053, %p1054
      %p1056 = scmp.ne.s32.totalorder %s1045, %s1046
      %p1057 = scmp.eq.s32.totalorder %s93, 0
      %p1058 = por %p1056, %p1057
      %p1059 = scmp.ne.s32.totalorder %s1045, %s1046
      %p1060 = scmp.eq.s32.totalorder %s94, 9
      %p1061 = por %p1059, %p1060
      %p1063 = scmp.ne.s32.totalorder %s1046, %s1062
      %p1064 = scmp.eq.s32.totalorder %s94, 0
      %p1065 = por %p1063, %p1064
      %p1066 = scmp.le.s32.totalorder 1, %s88
      %p1067 = scmp.lt.s32.totalorder %s88, 11
      %p1068 = pnand %p1066, %p1067
      %p1069 = pneg %p1068
      // Predicated region
      $region9: #{classifier_forward.1} parent=5 // pred_check
        _
      $region10: #{classifier_forward.1} parent=5 // pred_check_branch
        %1071 = sbr.rel (%p1068) target = $region12
      $region11: #{classifier_forward.1} parent=5 // pred_region
        %s1072 = ssub.s32 %s88, 1
        // Predicated region
        $region13: #{classifier_forward.1} parent=11 // pred_check
          %p1073 = pneg %p147
        $region14: #{classifier_forward.1} parent=11 // pred_check_branch
          %1075 = sbr.rel (%p1073) target = $region16
        $region15: #{classifier_forward.1} parent=11 // pred_region
          %s1077 = ssub.s32 640, 640
          %1078 = vsyncadd [#allocation5], %s1077
          %s1079 = sshll.u32 [#allocation4], 4
          %s1080 = int_to_ptr.vmem [resolvable:$true] %s1079
          %1085 = dma.hbm_to_vmem [thread:$0]  %s3, 640, %s1080, [#allocation5], 128, 128, 8
        $region16: #{classifier_forward.1} parent=11 // pred_fallthru
          _
        // Predicated region
        $region17: #{classifier_forward.1} parent=11 // pred_check
          %p1086 = pneg %p168
        $region18: #{classifier_forward.1} parent=11 // pred_check_branch
          %1088 = sbr.rel (%p1086) target = $region20
        $region19: #{classifier_forward.1} parent=11 // pred_region
          %s1090 = ssub.s32 16, 16
          %1091 = vsyncadd [#allocation8], %s1090
          %s1093 = sshll.u32 [#allocation7], 4
          %s1094 = int_to_ptr.vmem [resolvable:$true] %s1093
          %1096 = dma.hbm_to_vmem [thread:$0]  %s5, 16, %s1094, [#allocation8]
        $region20: #{classifier_forward.1} parent=11 // pred_fallthru
          _
        // Predicated region
        $region21: #{classifier_forward.1} parent=11 // pred_check
          %p1097 = pneg %p189
        $region22: #{classifier_forward.1} parent=11 // pred_check_branch
          %1099 = sbr.rel (%p1097) target = $region24
        $region23: #{classifier_forward.1} parent=11 // pred_region
          _
        $region24: #{classifier_forward.1} parent=11 // pred_fallthru
          _
        // Predicated region
        $region25: #{classifier_forward.1} parent=11 // pred_check
          %p1100 = pneg %p210
        $region26: #{classifier_forward.1} parent=11 // pred_check_branch
          %1102 = sbr.rel (%p1100) target = $region28
        $region27: #{classifier_forward.1} parent=11 // pred_region
          _
        $region28: #{classifier_forward.1} parent=11 // pred_fallthru
          _
        // Predicated region
        $region29: #{classifier_forward.1} parent=11 // pred_check
          %p1103 = pneg %p231
        $region30: #{classifier_forward.1} parent=11 // pred_check_branch
          %1105 = sbr.rel (%p1103) target = $region32
        $region31: #{classifier_forward.1} parent=11 // pred_region
          _
        $region32: #{classifier_forward.1} parent=11 // pred_fallthru
          _
        // Predicated region
        $region33: #{classifier_forward.1} parent=11 // pred_check
          %p1106 = pneg %p252
        $region34: #{classifier_forward.1} parent=11 // pred_check_branch
          %1108 = sbr.rel (%p1106) target = $region36
        $region35: #{classifier_forward.1} parent=11 // pred_region
          _
        $region36: #{classifier_forward.1} parent=11 // pred_fallthru
          _
      $region12: #{classifier_forward.1} parent=5 // pred_fallthru
        _
      %p1109 = scmp.lt.s32.totalorder %s88, 10
      // Predicated region
      $region37: #{classifier_forward.1} parent=5 // pred_check
        %p1110 = pneg %p1109
      $region38: #{classifier_forward.1} parent=5 // pred_check_branch
        %1112 = sbr.rel (%p1110) target = $region40
      $region39: #{classifier_forward.1} parent=5 // pred_region
        // Predicated region
        $region41: #{classifier_forward.1} parent=39 // pred_check
          %p1113 = pneg %p120
        $region42: #{classifier_forward.1} parent=39 // pred_check_branch
          %1115 = sbr.rel (%p1113) target = $region44
        $region43: #{classifier_forward.1} parent=39 // pred_region
          %p1116 = scmp.lt.s32.totalorder %s95, 1
          %s1117 = scalar_select %p1116, %s95, 1
          %s1118 = smul.addr %s1117, 2
          %s1119 = smul.addr %s1118, 8
          %s1120 = scalar_lea.vmem %s1, %s1119
        $region44: #{classifier_forward.1} parent=39 // pred_fallthru
          _
        // Predicated region
        $region45: #{classifier_forward.1} parent=39 // pred_check
          %p1121 = pneg %p272
        $region46: #{classifier_forward.1} parent=39 // pred_check_branch
          %1123 = sbr.rel (%p1121) target = $region48
        $region47: #{classifier_forward.1} parent=39 // pred_region
          %s1124 = sand.u32 %s88, 1
          %s1125 = scalar_lea.sflag [#allocation5], %s1124
          %s1126 = sand.u32 %s262, 1
          %s1127 = scalar_lea.vmem [#allocation9], %s1126
          %s1129 = ssub.s32 16, 16
          %1130 = vsyncadd %s1125, %s1129
          %s1131 = smul.addr %s96, 16
          %s1132 = scalar_lea.hbm %s15, %s1131
          %s1134 = sshll.u32 %s1127, 4
          %s1135 = int_to_ptr.vmem [resolvable:$true] %s1134
          %1137 = dma.hbm_to_vmem [thread:$0]  %s1132, 16, %s1135, %s1125
        $region48: #{classifier_forward.1} parent=39 // pred_fallthru
          _
        // Predicated region
        $region49: #{classifier_forward.1} parent=39 // pred_check
          %p1138 = pneg %p298
        $region50: #{classifier_forward.1} parent=39 // pred_check_branch
          %1140 = sbr.rel (%p1138) target = $region52
        $region51: #{classifier_forward.1} parent=39 // pred_region
          %s1141 = sand.u32 %s88, 1
          %s1142 = scalar_lea.sflag [#allocation5], %s1141
          %s1143 = sand.u32 %s288, 1
          %s1144 = scalar_lea.vmem [#allocation10], %s1143
          %s1146 = ssub.s32 16, 16
          %1147 = vsyncadd %s1142, %s1146
          %s1148 = smul.addr %s96, 16
          %s1149 = scalar_lea.hbm %s17, %s1148
          %s1151 = sshll.u32 %s1144, 4
          %s1152 = int_to_ptr.vmem [resolvable:$true] %s1151
          %1154 = dma.hbm_to_vmem [thread:$0]  %s1149, 16, %s1152, %s1142
        $region52: #{classifier_forward.1} parent=39 // pred_fallthru
          _
        // Predicated region
        $region53: #{classifier_forward.1} parent=39 // pred_check
          %p1155 = pneg %p324
        $region54: #{classifier_forward.1} parent=39 // pred_check_branch
          %1157 = sbr.rel (%p1155) target = $region56
        $region55: #{classifier_forward.1} parent=39 // pred_region
          %p1158 = scmp.lt.s32.totalorder %s96, 4
          %s1159 = scalar_select %p1158, %s96, 4
          %s1160 = smul.addr %s1159, 32
          %s1161 = smul.addr %s1160, 4
          %s1162 = scalar_lea.vmem %s19, %s1161
        $region56: #{classifier_forward.1} parent=39 // pred_fallthru
          _
        // Predicated region
        $region57: #{classifier_forward.1} parent=39 // pred_check
          %p1163 = pneg %p350
        $region58: #{classifier_forward.1} parent=39 // pred_check_branch
          %1165 = sbr.rel (%p1163) target = $region60
        $region59: #{classifier_forward.1} parent=39 // pred_region
          %s1166 = sand.u32 %s88, 1
          %s1167 = scalar_lea.sflag [#allocation5], %s1166
          %s1168 = sand.u32 %s340, 1
          %s1169 = smul.addr %s1168, 2
          %s1170 = scalar_lea.vmem [#allocation11], %s1169
          %s1172 = ssub.s32 32, 32
          %1173 = vsyncadd %s1167, %s1172
          %s1174 = smul.addr %s96, 2
          %s1175 = smul.addr %s1174, 16
          %s1176 = scalar_lea.hbm %s21, %s1175
          %s1178 = sshll.u32 %s1170, 4
          %s1179 = int_to_ptr.vmem [resolvable:$true] %s1178
          %1181 = dma.hbm_to_vmem [thread:$0]  %s1176, 32, %s1179, %s1167
        $region60: #{classifier_forward.1} parent=39 // pred_fallthru
          _
        // Predicated region
        $region61: #{classifier_forward.1} parent=39 // pred_check
          %p1182 = pneg %p376
        $region62: #{classifier_forward.1} parent=39 // pred_check_branch
          %1184 = sbr.rel (%p1182) target = $region64
        $region63: #{classifier_forward.1} parent=39 // pred_region
          %s1185 = sand.u32 %s88, 1
          %s1186 = scalar_lea.sflag [#allocation5], %s1185
          %s1187 = sand.u32 %s366, 1
          %s1188 = smul.addr %s1187, 128
          %s1189 = scalar_lea.vmem [#allocation12], %s1188
          %s1191 = ssub.s32 2048, 2048
          %1192 = vsyncadd %s1186, %s1191
          %s1193 = smul.addr %s96, 32
          %s1194 = smul.addr %s1193, 64
          %s1195 = scalar_lea.hbm %s23, %s1194
          %s1196 = sshll.u32 %s1189, 4
          %s1197 = int_to_ptr.vmem [resolvable:$true] %s1196
          %1202 = dma.hbm_to_vmem [thread:$0]  %s1195, 2048, %s1197, %s1186, 64, 64, 4
        $region64: #{classifier_forward.1} parent=39 // pred_fallthru
          _
        // Predicated region
        $region65: #{classifier_forward.1} parent=39 // pred_check
          %p1203 = pneg %p402
        $region66: #{classifier_forward.1} parent=39 // pred_check_branch
          %1205 = sbr.rel (%p1203) target = $region68
        $region67: #{classifier_forward.1} parent=39 // pred_region
          %s1206 = sand.u32 %s88, 1
          %s1207 = scalar_lea.sflag [#allocation5], %s1206
          %s1208 = sand.u32 %s392, 1
          %s1209 = scalar_lea.vmem [#allocation13], %s1208
          %s1211 = ssub.s32 16, 16
          %1212 = vsyncadd %s1207, %s1211
          %s1213 = smul.addr %s96, 16
          %s1214 = scalar_lea.hbm %s25, %s1213
          %s1216 = sshll.u32 %s1209, 4
          %s1217 = int_to_ptr.vmem [resolvable:$true] %s1216
          %1219 = dma.hbm_to_vmem [thread:$0]  %s1214, 16, %s1217, %s1207
        $region68: #{classifier_forward.1} parent=39 // pred_fallthru
          _
        // Predicated region
        $region69: #{classifier_forward.1} parent=39 // pred_check
          %p1220 = pneg %p428
        $region70: #{classifier_forward.1} parent=39 // pred_check_branch
          %1222 = sbr.rel (%p1220) target = $region72
        $region71: #{classifier_forward.1} parent=39 // pred_region
          %s1223 = sand.u32 %s88, 1
          %s1224 = scalar_lea.sflag [#allocation5], %s1223
          %s1225 = sand.u32 %s418, 1
          %s1226 = scalar_lea.vmem [#allocation14], %s1225
          %s1228 = ssub.s32 16, 16
          %1229 = vsyncadd %s1224, %s1228
          %s1230 = smul.addr %s96, 16
          %s1231 = scalar_lea.hbm %s27, %s1230
          %s1233 = sshll.u32 %s1226, 4
          %s1234 = int_to_ptr.vmem [resolvable:$true] %s1233
          %1236 = dma.hbm_to_vmem [thread:$0]  %s1231, 16, %s1234, %s1224
        $region72: #{classifier_forward.1} parent=39 // pred_fallthru
          _
        // Predicated region
        $region73: #{classifier_forward.1} parent=39 // pred_check
          %p1237 = pneg %p454
        $region74: #{classifier_forward.1} parent=39 // pred_check_branch
          %1239 = sbr.rel (%p1237) target = $region76
        $region75: #{classifier_forward.1} parent=39 // pred_region
          %s1240 = sand.u32 %s88, 1
          %s1241 = scalar_lea.sflag [#allocation5], %s1240
          %s1242 = sand.u32 %s444, 1
          %s1243 = scalar_lea.vmem [#allocation15], %s1242
          %s1245 = ssub.s32 16, 16
          %1246 = vsyncadd %s1241, %s1245
          %s1247 = smul.addr %s96, 16
          %s1248 = scalar_lea.hbm %s29, %s1247
          %s1250 = sshll.u32 %s1243, 4
          %s1251 = int_to_ptr.vmem [resolvable:$true] %s1250
          %1253 = dma.hbm_to_vmem [thread:$0]  %s1248, 16, %s1251, %s1241
        $region76: #{classifier_forward.1} parent=39 // pred_fallthru
          _
        // Predicated region
        $region77: #{classifier_forward.1} parent=39 // pred_check
          %p1254 = pneg %p480
        $region78: #{classifier_forward.1} parent=39 // pred_check_branch
          %1256 = sbr.rel (%p1254) target = $region80
        $region79: #{classifier_forward.1} parent=39 // pred_region
          %s1257 = sand.u32 %s88, 1
          %s1258 = scalar_lea.sflag [#allocation5], %s1257
          %s1259 = sand.u32 %s470, 1
          %s1260 = smul.addr %s1259, 192
          %s1261 = scalar_lea.vmem [#allocation16], %s1260
          %s1263 = ssub.s32 3072, 3072
          %1264 = vsyncadd %s1258, %s1263
          %s1265 = smul.addr %s96, 48
          %s1266 = smul.addr %s1265, 64
          %s1267 = scalar_lea.hbm %s31, %s1266
          %s1268 = sshll.u32 %s1261, 4
          %s1269 = int_to_ptr.vmem [resolvable:$true] %s1268
          %1274 = dma.hbm_to_vmem [thread:$0]  %s1267, 3072, %s1269, %s1258, 192, 192, 12
        $region80: #{classifier_forward.1} parent=39 // pred_fallthru
          _
        // Predicated region
        $region81: #{classifier_forward.1} parent=39 // pred_check
          %p1275 = pneg %p506
        $region82: #{classifier_forward.1} parent=39 // pred_check_branch
          %1277 = sbr.rel (%p1275) target = $region84
        $region83: #{classifier_forward.1} parent=39 // pred_region
          %s1278 = sand.u32 %s88, 1
          %s1279 = scalar_lea.sflag [#allocation5], %s1278
          %s1280 = sand.u32 %s496, 1
          %s1281 = smul.addr %s1280, 3
          %s1282 = scalar_lea.vmem [#allocation17], %s1281
          %s1284 = ssub.s32 48, 48
          %1285 = vsyncadd %s1279, %s1284
          %s1286 = smul.addr %s96, 3
          %s1287 = smul.addr %s1286, 16
          %s1288 = scalar_lea.hbm %s33, %s1287
          %s1290 = sshll.u32 %s1282, 4
          %s1291 = int_to_ptr.vmem [resolvable:$true] %s1290
          %1293 = dma.hbm_to_vmem [thread:$0]  %s1288, 48, %s1291, %s1279
        $region84: #{classifier_forward.1} parent=39 // pred_fallthru
          _
        // Predicated region
        $region85: #{classifier_forward.1} parent=39 // pred_check
          %p1294 = pneg %p532
        $region86: #{classifier_forward.1} parent=39 // pred_check_branch
          %1296 = sbr.rel (%p1294) target = $region88
        $region87: #{classifier_forward.1} parent=39 // pred_region
          %s1297 = sand.u32 %s88, 1
          %s1298 = scalar_lea.sflag [#allocation5], %s1297
          %s1299 = sand.u32 %s522, 1
          %s1300 = smul.addr %s1299, 64
          %s1301 = scalar_lea.vmem [#allocation18], %s1300
          %s1303 = ssub.s32 1024, 1024
          %1304 = vsyncadd %s1298, %s1303
          %s1305 = smul.addr %s96, 16
          %s1306 = smul.addr %s1305, 64
          %s1307 = scalar_lea.hbm %s35, %s1306
          %s1308 = sshll.u32 %s1301, 4
          %s1309 = int_to_ptr.vmem [resolvable:$true] %s1308
          %1314 = dma.hbm_to_vmem [thread:$0]  %s1307, 1024, %s1309, %s1298, 64, 64, 4
        $region88: #{classifier_forward.1} parent=39 // pred_fallthru
          _
        // Predicated region
        $region89: #{classifier_forward.1} parent=39 // pred_check
          %p1315 = pneg %p558
        $region90: #{classifier_forward.1} parent=39 // pred_check_branch
          %1317 = sbr.rel (%p1315) target = $region92
        $region91: #{classifier_forward.1} parent=39 // pred_region
          %s1318 = sand.u32 %s88, 1
          %s1319 = scalar_lea.sflag [#allocation5], %s1318
          %s1320 = sand.u32 %s548, 1
          %s1321 = scalar_lea.vmem [#allocation19], %s1320
          %s1323 = ssub.s32 16, 16
          %1324 = vsyncadd %s1319, %s1323
          %s1325 = smul.addr %s96, 16
          %s1326 = scalar_lea.hbm %s37, %s1325
          %s1328 = sshll.u32 %s1321, 4
          %s1329 = int_to_ptr.vmem [resolvable:$true] %s1328
          %1331 = dma.hbm_to_vmem [thread:$0]  %s1326, 16, %s1329, %s1319
        $region92: #{classifier_forward.1} parent=39 // pred_fallthru
          _
        // Predicated region
        $region93: #{classifier_forward.1} parent=39 // pred_check
          %p1332 = pneg %p584
        $region94: #{classifier_forward.1} parent=39 // pred_check_branch
          %1334 = sbr.rel (%p1332) target = $region96
        $region95: #{classifier_forward.1} parent=39 // pred_region
          %s1335 = sand.u32 %s88, 1
          %s1336 = scalar_lea.sflag [#allocation5], %s1335
          %s1337 = sand.u32 %s574, 1
          %s1338 = scalar_lea.vmem [#allocation20], %s1337
          %s1340 = ssub.s32 16, 16
          %1341 = vsyncadd %s1336, %s1340
          %s1342 = smul.addr %s96, 16
          %s1343 = scalar_lea.hbm %s39, %s1342
          %s1345 = sshll.u32 %s1338, 4
          %s1346 = int_to_ptr.vmem [resolvable:$true] %s1345
          %1348 = dma.hbm_to_vmem [thread:$0]  %s1343, 16, %s1346, %s1336
        $region96: #{classifier_forward.1} parent=39 // pred_fallthru
          _
        // Predicated region
        $region97: #{classifier_forward.1} parent=39 // pred_check
          %p1349 = pneg %p610
        $region98: #{classifier_forward.1} parent=39 // pred_check_branch
          %1351 = sbr.rel (%p1349) target = $region100
        $region99: #{classifier_forward.1} parent=39 // pred_region
          %s1352 = sand.u32 %s88, 1
          %s1353 = scalar_lea.sflag [#allocation5], %s1352
          %s1354 = sand.u32 %s600, 1
          %s1355 = scalar_lea.vmem [#allocation21], %s1354
          %s1357 = ssub.s32 16, 16
          %1358 = vsyncadd %s1353, %s1357
          %s1359 = smul.addr %s96, 16
          %s1360 = scalar_lea.hbm %s41, %s1359
          %s1362 = sshll.u32 %s1355, 4
          %s1363 = int_to_ptr.vmem [resolvable:$true] %s1362
          %1365 = dma.hbm_to_vmem [thread:$0]  %s1360, 16, %s1363, %s1353
        $region100: #{classifier_forward.1} parent=39 // pred_fallthru
          _
        // Predicated region
        $region101: #{classifier_forward.1} parent=39 // pred_check
          %p1366 = pneg %p636
        $region102: #{classifier_forward.1} parent=39 // pred_check_branch
          %1368 = sbr.rel (%p1366) target = $region104
        $region103: #{classifier_forward.1} parent=39 // pred_region
          %s1369 = sand.u32 %s88, 1
          %s1370 = scalar_lea.sflag [#allocation5], %s1369
          %s1371 = sand.u32 %s626, 1
          %s1372 = smul.addr %s1371, 128
          %s1373 = scalar_lea.vmem [#allocation22], %s1372
          %s1375 = ssub.s32 2048, 2048
          %1376 = vsyncadd %s1370, %s1375
          %s1377 = smul.addr %s96, 32
          %s1378 = smul.addr %s1377, 64
          %s1379 = scalar_lea.hbm %s43, %s1378
          %s1380 = sshll.u32 %s1373, 4
          %s1381 = int_to_ptr.vmem [resolvable:$true] %s1380
          %1386 = dma.hbm_to_vmem [thread:$0]  %s1379, 2048, %s1381, %s1370, 128, 128, 8
        $region104: #{classifier_forward.1} parent=39 // pred_fallthru
          _
        // Predicated region
        $region105: #{classifier_forward.1} parent=39 // pred_check
          %p1387 = pneg %p662
        $region106: #{classifier_forward.1} parent=39 // pred_check_branch
          %1389 = sbr.rel (%p1387) target = $region108
        $region107: #{classifier_forward.1} parent=39 // pred_region
          %s1390 = sand.u32 %s88, 1
          %s1391 = scalar_lea.sflag [#allocation5], %s1390
          %s1392 = sand.u32 %s652, 1
          %s1393 = smul.addr %s1392, 2
          %s1394 = scalar_lea.vmem [#allocation23], %s1393
          %s1396 = ssub.s32 32, 32
          %1397 = vsyncadd %s1391, %s1396
          %s1398 = smul.addr %s96, 2
          %s1399 = smul.addr %s1398, 16
          %s1400 = scalar_lea.hbm %s45, %s1399
          %s1402 = sshll.u32 %s1394, 4
          %s1403 = int_to_ptr.vmem [resolvable:$true] %s1402
          %1405 = dma.hbm_to_vmem [thread:$0]  %s1400, 32, %s1403, %s1391
        $region108: #{classifier_forward.1} parent=39 // pred_fallthru
          _
        // Predicated region
        $region109: #{classifier_forward.1} parent=39 // pred_check
          %p1406 = pneg %p688
        $region110: #{classifier_forward.1} parent=39 // pred_check_branch
          %1408 = sbr.rel (%p1406) target = $region112
        $region111: #{classifier_forward.1} parent=39 // pred_region
          %p1409 = scmp.lt.s32.totalorder %s96, 4
          %s1410 = scalar_select %p1409, %s96, 4
          %s1411 = smul.addr %s1410, 9
          %s1412 = scalar_lea.vmem %s47, %s1411
        $region112: #{classifier_forward.1} parent=39 // pred_fallthru
          _
        // Predicated region
        $region113: #{classifier_forward.1} parent=39 // pred_check
          %p1413 = pneg %p714
        $region114: #{classifier_forward.1} parent=39 // pred_check_branch
          %1415 = sbr.rel (%p1413) target = $region116
        $region115: #{classifier_forward.1} parent=39 // pred_region
          %s1416 = sand.u32 %s88, 1
          %s1417 = scalar_lea.sflag [#allocation5], %s1416
          %s1418 = sand.u32 %s704, 1
          %s1419 = scalar_lea.vmem [#allocation24], %s1418
          %s1421 = ssub.s32 16, 16
          %1422 = vsyncadd %s1417, %s1421
          %s1423 = smul.addr %s96, 16
          %s1424 = scalar_lea.hbm %s49, %s1423
          %s1426 = sshll.u32 %s1419, 4
          %s1427 = int_to_ptr.vmem [resolvable:$true] %s1426
          %1429 = dma.hbm_to_vmem [thread:$0]  %s1424, 16, %s1427, %s1417
        $region116: #{classifier_forward.1} parent=39 // pred_fallthru
          _
        // Predicated region
        $region117: #{classifier_forward.1} parent=39 // pred_check
          %p1430 = pneg %p740
        $region118: #{classifier_forward.1} parent=39 // pred_check_branch
          %1432 = sbr.rel (%p1430) target = $region120
        $region119: #{classifier_forward.1} parent=39 // pred_region
          %s1433 = sand.u32 %s88, 1
          %s1434 = scalar_lea.sflag [#allocation5], %s1433
          %s1435 = sand.u32 %s730, 1
          %s1436 = scalar_lea.vmem [#allocation25], %s1435
          %s1438 = ssub.s32 16, 16
          %1439 = vsyncadd %s1434, %s1438
          %s1440 = smul.addr %s96, 16
          %s1441 = scalar_lea.hbm %s51, %s1440
          %s1443 = sshll.u32 %s1436, 4
          %s1444 = int_to_ptr.vmem [resolvable:$true] %s1443
          %1446 = dma.hbm_to_vmem [thread:$0]  %s1441, 16, %s1444, %s1434
        $region120: #{classifier_forward.1} parent=39 // pred_fallthru
          _
        // Predicated region
        $region121: #{classifier_forward.1} parent=39 // pred_check
          %p1447 = pneg %p766
        $region122: #{classifier_forward.1} parent=39 // pred_check_branch
          %1449 = sbr.rel (%p1447) target = $region124
        $region123: #{classifier_forward.1} parent=39 // pred_region
          %s1450 = sand.u32 %s88, 1
          %s1451 = scalar_lea.sflag [#allocation5], %s1450
          %s1452 = sand.u32 %s756, 1
          %s1453 = scalar_lea.vmem [#allocation26], %s1452
          %s1455 = ssub.s32 16, 16
          %1456 = vsyncadd %s1451, %s1455
          %s1457 = smul.addr %s96, 16
          %s1458 = scalar_lea.hbm %s53, %s1457
          %s1460 = sshll.u32 %s1453, 4
          %s1461 = int_to_ptr.vmem [resolvable:$true] %s1460
          %1463 = dma.hbm_to_vmem [thread:$0]  %s1458, 16, %s1461, %s1451
        $region124: #{classifier_forward.1} parent=39 // pred_fallthru
          _
        // Predicated region
        $region125: #{classifier_forward.1} parent=39 // pred_check
          %p1464 = pneg %p792
        $region126: #{classifier_forward.1} parent=39 // pred_check_branch
          %1466 = sbr.rel (%p1464) target = $region128
        $region127: #{classifier_forward.1} parent=39 // pred_region
          %s1467 = sand.u32 %s88, 1
          %s1468 = scalar_lea.sflag [#allocation5], %s1467
          %s1469 = sand.u32 %s782, 1
          %s1470 = smul.addr %s1469, 64
          %s1471 = scalar_lea.vmem [#allocation27], %s1470
          %s1473 = ssub.s32 1024, 1024
          %1474 = vsyncadd %s1468, %s1473
          %s1475 = smul.addr %s96, 16
          %s1476 = smul.addr %s1475, 64
          %s1477 = scalar_lea.hbm %s55, %s1476
          %s1478 = sshll.u32 %s1471, 4
          %s1479 = int_to_ptr.vmem [resolvable:$true] %s1478
          %1484 = dma.hbm_to_vmem [thread:$0]  %s1477, 1024, %s1479, %s1468, 64, 64, 4
        $region128: #{classifier_forward.1} parent=39 // pred_fallthru
          _
        // Predicated region
        $region129: #{classifier_forward.1} parent=39 // pred_check
          %p1485 = pneg %p818
        $region130: #{classifier_forward.1} parent=39 // pred_check_branch
          %1487 = sbr.rel (%p1485) target = $region132
        $region131: #{classifier_forward.1} parent=39 // pred_region
          %s1488 = sand.u32 %s88, 1
          %s1489 = scalar_lea.sflag [#allocation5], %s1488
          %s1490 = sand.u32 %s808, 1
          %s1491 = scalar_lea.vmem [#allocation28], %s1490
          %s1493 = ssub.s32 16, 16
          %1494 = vsyncadd %s1489, %s1493
          %s1495 = smul.addr %s96, 16
          %s1496 = scalar_lea.hbm %s57, %s1495
          %s1498 = sshll.u32 %s1491, 4
          %s1499 = int_to_ptr.vmem [resolvable:$true] %s1498
          %1501 = dma.hbm_to_vmem [thread:$0]  %s1496, 16, %s1499, %s1489
        $region132: #{classifier_forward.1} parent=39 // pred_fallthru
          _
        // Predicated region
        $region133: #{classifier_forward.1} parent=39 // pred_check
          %p1502 = pneg %p844
        $region134: #{classifier_forward.1} parent=39 // pred_check_branch
          %1504 = sbr.rel (%p1502) target = $region136
        $region135: #{classifier_forward.1} parent=39 // pred_region
          %s1505 = sand.u32 %s88, 1
          %s1506 = scalar_lea.sflag [#allocation5], %s1505
          %s1507 = sand.u32 %s834, 1
          %s1508 = scalar_lea.vmem [#allocation29], %s1507
          %s1510 = ssub.s32 16, 16
          %1511 = vsyncadd %s1506, %s1510
          %s1512 = smul.addr %s96, 16
          %s1513 = scalar_lea.hbm %s59, %s1512
          %s1515 = sshll.u32 %s1508, 4
          %s1516 = int_to_ptr.vmem [resolvable:$true] %s1515
          %1518 = dma.hbm_to_vmem [thread:$0]  %s1513, 16, %s1516, %s1506
        $region136: #{classifier_forward.1} parent=39 // pred_fallthru
          _
        // Predicated region
        $region137: #{classifier_forward.1} parent=39 // pred_check
          %p1519 = pneg %p870
        $region138: #{classifier_forward.1} parent=39 // pred_check_branch
          %1521 = sbr.rel (%p1519) target = $region140
        $region139: #{classifier_forward.1} parent=39 // pred_region
          %s1522 = sand.u32 %s88, 1
          %s1523 = scalar_lea.sflag [#allocation5], %s1522
          %s1524 = sand.u32 %s860, 1
          %s1525 = scalar_lea.vmem [#allocation30], %s1524
          %s1527 = ssub.s32 16, 16
          %1528 = vsyncadd %s1523, %s1527
          %s1529 = smul.addr %s96, 16
          %s1530 = scalar_lea.hbm %s61, %s1529
          %s1532 = sshll.u32 %s1525, 4
          %s1533 = int_to_ptr.vmem [resolvable:$true] %s1532
          %1535 = dma.hbm_to_vmem [thread:$0]  %s1530, 16, %s1533, %s1523
        $region140: #{classifier_forward.1} parent=39 // pred_fallthru
          _
        // Predicated region
        $region141: #{classifier_forward.1} parent=39 // pred_check
          %p1536 = pneg %p896
        $region142: #{classifier_forward.1} parent=39 // pred_check_branch
          %1538 = sbr.rel (%p1536) target = $region144
        $region143: #{classifier_forward.1} parent=39 // pred_region
          %s1539 = sand.u32 %s88, 1
          %s1540 = scalar_lea.sflag [#allocation5], %s1539
          %s1541 = sand.u32 %s886, 1
          %s1542 = smul.addr %s1541, 128
          %s1543 = scalar_lea.vmem [#allocation31], %s1542
          %s1545 = ssub.s32 2048, 2048
          %1546 = vsyncadd %s1540, %s1545
          %s1547 = smul.addr %s96, 32
          %s1548 = smul.addr %s1547, 64
          %s1549 = scalar_lea.hbm %s63, %s1548
          %s1550 = sshll.u32 %s1543, 4
          %s1551 = int_to_ptr.vmem [resolvable:$true] %s1550
          %1556 = dma.hbm_to_vmem [thread:$0]  %s1549, 2048, %s1551, %s1540, 128, 128, 8
        $region144: #{classifier_forward.1} parent=39 // pred_fallthru
          _
        // Predicated region
        $region145: #{classifier_forward.1} parent=39 // pred_check
          %p1557 = pneg %p922
        $region146: #{classifier_forward.1} parent=39 // pred_check_branch
          %1559 = sbr.rel (%p1557) target = $region148
        $region147: #{classifier_forward.1} parent=39 // pred_region
          %s1560 = sand.u32 %s88, 1
          %s1561 = scalar_lea.sflag [#allocation5], %s1560
          %s1562 = sand.u32 %s912, 1
          %s1563 = smul.addr %s1562, 2
          %s1564 = scalar_lea.vmem [#allocation32], %s1563
          %s1566 = ssub.s32 32, 32
          %1567 = vsyncadd %s1561, %s1566
          %s1568 = smul.addr %s96, 2
          %s1569 = smul.addr %s1568, 16
          %s1570 = scalar_lea.hbm %s65, %s1569
          %s1572 = sshll.u32 %s1564, 4
          %s1573 = int_to_ptr.vmem [resolvable:$true] %s1572
          %1575 = dma.hbm_to_vmem [thread:$0]  %s1570, 32, %s1573, %s1561
        $region148: #{classifier_forward.1} parent=39 // pred_fallthru
          _
        // Predicated region
        $region149: #{classifier_forward.1} parent=39 // pred_check
          %p1576 = pneg %p948
        $region150: #{classifier_forward.1} parent=39 // pred_check_branch
          %1578 = sbr.rel (%p1576) target = $region152
        $region151: #{classifier_forward.1} parent=39 // pred_region
          %s1579 = sand.u32 %s88, 1
          %s1580 = scalar_lea.sflag [#allocation5], %s1579
          %s1581 = sand.u32 %s938, 1
          %s1582 = smul.addr %s1581, 128
          %s1583 = scalar_lea.vmem [#allocation33], %s1582
          %s1585 = ssub.s32 2048, 2048
          %1586 = vsyncadd %s1580, %s1585
          %s1587 = smul.addr %s96, 32
          %s1588 = smul.addr %s1587, 64
          %s1589 = scalar_lea.hbm %s67, %s1588
          %s1590 = sshll.u32 %s1583, 4
          %s1591 = int_to_ptr.vmem [resolvable:$true] %s1590
          %1596 = dma.hbm_to_vmem [thread:$0]  %s1589, 2048, %s1591, %s1580, 64, 64, 4
        $region152: #{classifier_forward.1} parent=39 // pred_fallthru
          _
        // Predicated region
        $region153: #{classifier_forward.1} parent=39 // pred_check
          %p1597 = pneg %p974
        $region154: #{classifier_forward.1} parent=39 // pred_check_branch
          %1599 = sbr.rel (%p1597) target = $region156
        $region155: #{classifier_forward.1} parent=39 // pred_region
          %s1600 = sand.u32 %s88, 1
          %s1601 = scalar_lea.sflag [#allocation5], %s1600
          %s1602 = sand.u32 %s964, 1
          %s1603 = scalar_lea.vmem [#allocation34], %s1602
          %s1605 = ssub.s32 16, 16
          %1606 = vsyncadd %s1601, %s1605
          %s1607 = smul.addr %s96, 16
          %s1608 = scalar_lea.hbm %s69, %s1607
          %s1610 = sshll.u32 %s1603, 4
          %s1611 = int_to_ptr.vmem [resolvable:$true] %s1610
          %1613 = dma.hbm_to_vmem [thread:$0]  %s1608, 16, %s1611, %s1601
        $region156: #{classifier_forward.1} parent=39 // pred_fallthru
          _
        // Predicated region
        $region157: #{classifier_forward.1} parent=39 // pred_check
          %p1614 = pneg %p1000
        $region158: #{classifier_forward.1} parent=39 // pred_check_branch
          %1616 = sbr.rel (%p1614) target = $region160
        $region159: #{classifier_forward.1} parent=39 // pred_region
          %s1617 = sand.u32 %s88, 1
          %s1618 = scalar_lea.sflag [#allocation5], %s1617
          %s1619 = sand.u32 %s990, 1
          %s1620 = scalar_lea.vmem [#allocation35], %s1619
          %s1622 = ssub.s32 16, 16
          %1623 = vsyncadd %s1618, %s1622
          %s1624 = smul.addr %s96, 16
          %s1625 = scalar_lea.hbm %s71, %s1624
          %s1627 = sshll.u32 %s1620, 4
          %s1628 = int_to_ptr.vmem [resolvable:$true] %s1627
          %1630 = dma.hbm_to_vmem [thread:$0]  %s1625, 16, %s1628, %s1618
        $region160: #{classifier_forward.1} parent=39 // pred_fallthru
          _
        // Predicated region
        $region161: #{classifier_forward.1} parent=39 // pred_check
          %p1631 = pneg %p1026
        $region162: #{classifier_forward.1} parent=39 // pred_check_branch
          %1633 = sbr.rel (%p1631) target = $region164
        $region163: #{classifier_forward.1} parent=39 // pred_region
          %s1634 = sand.u32 %s88, 1
          %s1635 = scalar_lea.sflag [#allocation5], %s1634
          %s1636 = sand.u32 %s1016, 1
          %s1637 = scalar_lea.vmem [#allocation36], %s1636
          %s1639 = ssub.s32 16, 16
          %1640 = vsyncadd %s1635, %s1639
          %s1641 = smul.addr %s96, 16
          %s1642 = scalar_lea.hbm %s73, %s1641
          %s1644 = sshll.u32 %s1637, 4
          %s1645 = int_to_ptr.vmem [resolvable:$true] %s1644
          %1647 = dma.hbm_to_vmem [thread:$0]  %s1642, 16, %s1645, %s1635
        $region164: #{classifier_forward.1} parent=39 // pred_fallthru
          _
      $region40: #{classifier_forward.1} parent=5 // pred_fallthru
        _
      %p1648 = scmp.le.s32.totalorder 1, %s88
      %p1649 = scmp.lt.s32.totalorder %s88, 11
      %p1650 = pnand %p1648, %p1649
      %p1651 = pneg %p1650
      // Predicated region
      $region165: #{classifier_forward.1} parent=5 // pred_check
        _
      $region166: #{classifier_forward.1} parent=5 // pred_check_branch
        %1653 = sbr.rel (%p1650) target = $region168
      $region167: #{classifier_forward.1} parent=5 // pred_region
        %s1654 = ssub.s32 %s88, 1
        // Predicated region
        $region169: #{classifier_forward.1} parent=167 // pred_check
          %p1655 = pneg %p147
        $region170: #{classifier_forward.1} parent=167 // pred_check_branch
          %1657 = sbr.rel (%p1655) target = $region172
        $region171: #{classifier_forward.1} parent=167 // pred_region
          %1658 = dma.done [#allocation5], 640
        $region172: #{classifier_forward.1} parent=167 // pred_fallthru
          _
        // Predicated region
        $region173: #{classifier_forward.1} parent=167 // pred_check
          %p1659 = pneg %p168
        $region174: #{classifier_forward.1} parent=167 // pred_check_branch
          %1661 = sbr.rel (%p1659) target = $region176
        $region175: #{classifier_forward.1} parent=167 // pred_region
          %1662 = dma.done [#allocation8], 16
        $region176: #{classifier_forward.1} parent=167 // pred_fallthru
          _
        %s1663 = sand.u32 %s93, 1
        %s1664 = scalar_lea.sflag [#allocation5], %s1663
        %s1665 = sand.u32 %s265, 1
        %s1666 = scalar_lea.vmem [#allocation9], %s1665
        // Predicated region
        $region177: #{classifier_forward.1} parent=167 // pred_check
          %p1667 = pneg %p278
        $region178: #{classifier_forward.1} parent=167 // pred_check_branch
          %1669 = sbr.rel (%p1667) target = $region180
        $region179: #{classifier_forward.1} parent=167 // pred_region
          %1670 = dma.done %s1664, 16
        $region180: #{classifier_forward.1} parent=167 // pred_fallthru
          _
        %s1671 = sand.u32 %s93, 1
        %s1672 = scalar_lea.sflag [#allocation5], %s1671
        %s1673 = sand.u32 %s291, 1
        %s1674 = scalar_lea.vmem [#allocation10], %s1673
        // Predicated region
        $region181: #{classifier_forward.1} parent=167 // pred_check
          %p1675 = pneg %p304
        $region182: #{classifier_forward.1} parent=167 // pred_check_branch
          %1677 = sbr.rel (%p1675) target = $region184
        $region183: #{classifier_forward.1} parent=167 // pred_region
          %1678 = dma.done %s1672, 16
        $region184: #{classifier_forward.1} parent=167 // pred_fallthru
          _
        %s1679 = sand.u32 %s93, 1
        %s1680 = scalar_lea.sflag [#allocation5], %s1679
        %s1681 = sand.u32 %s343, 1
        %s1682 = smul.addr %s1681, 2
        %s1683 = scalar_lea.vmem [#allocation11], %s1682
        // Predicated region
        $region185: #{classifier_forward.1} parent=167 // pred_check
          %p1684 = pneg %p356
        $region186: #{classifier_forward.1} parent=167 // pred_check_branch
          %1686 = sbr.rel (%p1684) target = $region188
        $region187: #{classifier_forward.1} parent=167 // pred_region
          %1687 = dma.done %s1680, 32
        $region188: #{classifier_forward.1} parent=167 // pred_fallthru
          _
        %s1688 = sand.u32 %s93, 1
        %s1689 = scalar_lea.sflag [#allocation5], %s1688
        %s1690 = sand.u32 %s369, 1
        %s1691 = smul.addr %s1690, 128
        %s1692 = scalar_lea.vmem [#allocation12], %s1691
        // Predicated region
        $region189: #{classifier_forward.1} parent=167 // pred_check
          %p1693 = pneg %p382
        $region190: #{classifier_forward.1} parent=167 // pred_check_branch
          %1695 = sbr.rel (%p1693) target = $region192
        $region191: #{classifier_forward.1} parent=167 // pred_region
          %1696 = dma.done %s1689, 2048
        $region192: #{classifier_forward.1} parent=167 // pred_fallthru
          _
        %s1697 = sand.u32 %s93, 1
        %s1698 = scalar_lea.sflag [#allocation5], %s1697
        %s1699 = sand.u32 %s395, 1
        %s1700 = scalar_lea.vmem [#allocation13], %s1699
        // Predicated region
        $region193: #{classifier_forward.1} parent=167 // pred_check
          %p1701 = pneg %p408
        $region194: #{classifier_forward.1} parent=167 // pred_check_branch
          %1703 = sbr.rel (%p1701) target = $region196
        $region195: #{classifier_forward.1} parent=167 // pred_region
          %1704 = dma.done %s1698, 16
        $region196: #{classifier_forward.1} parent=167 // pred_fallthru
          _
        %s1705 = sand.u32 %s93, 1
        %s1706 = scalar_lea.sflag [#allocation5], %s1705
        %s1707 = sand.u32 %s421, 1
        %s1708 = scalar_lea.vmem [#allocation14], %s1707
        // Predicated region
        $region197: #{classifier_forward.1} parent=167 // pred_check
          %p1709 = pneg %p434
        $region198: #{classifier_forward.1} parent=167 // pred_check_branch
          %1711 = sbr.rel (%p1709) target = $region200
        $region199: #{classifier_forward.1} parent=167 // pred_region
          %1712 = dma.done %s1706, 16
        $region200: #{classifier_forward.1} parent=167 // pred_fallthru
          _
        %s1713 = sand.u32 %s93, 1
        %s1714 = scalar_lea.sflag [#allocation5], %s1713
        %s1715 = sand.u32 %s447, 1
        %s1716 = scalar_lea.vmem [#allocation15], %s1715
        // Predicated region
        $region201: #{classifier_forward.1} parent=167 // pred_check
          %p1717 = pneg %p460
        $region202: #{classifier_forward.1} parent=167 // pred_check_branch
          %1719 = sbr.rel (%p1717) target = $region204
        $region203: #{classifier_forward.1} parent=167 // pred_region
          %1720 = dma.done %s1714, 16
        $region204: #{classifier_forward.1} parent=167 // pred_fallthru
          _
        %s1721 = sand.u32 %s93, 1
        %s1722 = scalar_lea.sflag [#allocation5], %s1721
        %s1723 = sand.u32 %s473, 1
        %s1724 = smul.addr %s1723, 192
        %s1725 = scalar_lea.vmem [#allocation16], %s1724
        // Predicated region
        $region205: #{classifier_forward.1} parent=167 // pred_check
          %p1726 = pneg %p486
        $region206: #{classifier_forward.1} parent=167 // pred_check_branch
          %1728 = sbr.rel (%p1726) target = $region208
        $region207: #{classifier_forward.1} parent=167 // pred_region
          %1729 = dma.done %s1722, 3072
        $region208: #{classifier_forward.1} parent=167 // pred_fallthru
          _
        %s1730 = sand.u32 %s93, 1
        %s1731 = scalar_lea.sflag [#allocation5], %s1730
        %s1732 = sand.u32 %s499, 1
        %s1733 = smul.addr %s1732, 3
        %s1734 = scalar_lea.vmem [#allocation17], %s1733
        // Predicated region
        $region209: #{classifier_forward.1} parent=167 // pred_check
          %p1735 = pneg %p512
        $region210: #{classifier_forward.1} parent=167 // pred_check_branch
          %1737 = sbr.rel (%p1735) target = $region212
        $region211: #{classifier_forward.1} parent=167 // pred_region
          %1738 = dma.done %s1731, 48
        $region212: #{classifier_forward.1} parent=167 // pred_fallthru
          _
        %s1739 = sand.u32 %s93, 1
        %s1740 = scalar_lea.sflag [#allocation5], %s1739
        %s1741 = sand.u32 %s525, 1
        %s1742 = smul.addr %s1741, 64
        %s1743 = scalar_lea.vmem [#allocation18], %s1742
        // Predicated region
        $region213: #{classifier_forward.1} parent=167 // pred_check
          %p1744 = pneg %p538
        $region214: #{classifier_forward.1} parent=167 // pred_check_branch
          %1746 = sbr.rel (%p1744) target = $region216
        $region215: #{classifier_forward.1} parent=167 // pred_region
          %1747 = dma.done %s1740, 1024
        $region216: #{classifier_forward.1} parent=167 // pred_fallthru
          _
        %s1748 = sand.u32 %s93, 1
        %s1749 = scalar_lea.sflag [#allocation5], %s1748
        %s1750 = sand.u32 %s551, 1
        %s1751 = scalar_lea.vmem [#allocation19], %s1750
        // Predicated region
        $region217: #{classifier_forward.1} parent=167 // pred_check
          %p1752 = pneg %p564
        $region218: #{classifier_forward.1} parent=167 // pred_check_branch
          %1754 = sbr.rel (%p1752) target = $region220
        $region219: #{classifier_forward.1} parent=167 // pred_region
          %1755 = dma.done %s1749, 16
        $region220: #{classifier_forward.1} parent=167 // pred_fallthru
          _
        %s1756 = sand.u32 %s93, 1
        %s1757 = scalar_lea.sflag [#allocation5], %s1756
        %s1758 = sand.u32 %s577, 1
        %s1759 = scalar_lea.vmem [#allocation20], %s1758
        // Predicated region
        $region221: #{classifier_forward.1} parent=167 // pred_check
          %p1760 = pneg %p590
        $region222: #{classifier_forward.1} parent=167 // pred_check_branch
          %1762 = sbr.rel (%p1760) target = $region224
        $region223: #{classifier_forward.1} parent=167 // pred_region
          %1763 = dma.done %s1757, 16
        $region224: #{classifier_forward.1} parent=167 // pred_fallthru
          _
        %s1764 = sand.u32 %s93, 1
        %s1765 = scalar_lea.sflag [#allocation5], %s1764
        %s1766 = sand.u32 %s603, 1
        %s1767 = scalar_lea.vmem [#allocation21], %s1766
        // Predicated region
        $region225: #{classifier_forward.1} parent=167 // pred_check
          %p1768 = pneg %p616
        $region226: #{classifier_forward.1} parent=167 // pred_check_branch
          %1770 = sbr.rel (%p1768) target = $region228
        $region227: #{classifier_forward.1} parent=167 // pred_region
          %1771 = dma.done %s1765, 16
        $region228: #{classifier_forward.1} parent=167 // pred_fallthru
          _
        %s1772 = sand.u32 %s93, 1
        %s1773 = scalar_lea.sflag [#allocation5], %s1772
        %s1774 = sand.u32 %s629, 1
        %s1775 = smul.addr %s1774, 128
        %s1776 = scalar_lea.vmem [#allocation22], %s1775
        // Predicated region
        $region229: #{classifier_forward.1} parent=167 // pred_check
          %p1777 = pneg %p642
        $region230: #{classifier_forward.1} parent=167 // pred_check_branch
          %1779 = sbr.rel (%p1777) target = $region232
        $region231: #{classifier_forward.1} parent=167 // pred_region
          %1780 = dma.done %s1773, 2048
        $region232: #{classifier_forward.1} parent=167 // pred_fallthru
          _
        %s1781 = sand.u32 %s93, 1
        %s1782 = scalar_lea.sflag [#allocation5], %s1781
        %s1783 = sand.u32 %s655, 1
        %s1784 = smul.addr %s1783, 2
        %s1785 = scalar_lea.vmem [#allocation23], %s1784
        // Predicated region
        $region233: #{classifier_forward.1} parent=167 // pred_check
          %p1786 = pneg %p668
        $region234: #{classifier_forward.1} parent=167 // pred_check_branch
          %1788 = sbr.rel (%p1786) target = $region236
        $region235: #{classifier_forward.1} parent=167 // pred_region
          %1789 = dma.done %s1782, 32
        $region236: #{classifier_forward.1} parent=167 // pred_fallthru
          _
        %s1790 = sand.u32 %s93, 1
        %s1791 = scalar_lea.sflag [#allocation5], %s1790
        %s1792 = sand.u32 %s707, 1
        %s1793 = scalar_lea.vmem [#allocation24], %s1792
        // Predicated region
        $region237: #{classifier_forward.1} parent=167 // pred_check
          %p1794 = pneg %p720
        $region238: #{classifier_forward.1} parent=167 // pred_check_branch
          %1796 = sbr.rel (%p1794) target = $region240
        $region239: #{classifier_forward.1} parent=167 // pred_region
          %1797 = dma.done %s1791, 16
        $region240: #{classifier_forward.1} parent=167 // pred_fallthru
          _
        %s1798 = sand.u32 %s93, 1
        %s1799 = scalar_lea.sflag [#allocation5], %s1798
        %s1800 = sand.u32 %s733, 1
        %s1801 = scalar_lea.vmem [#allocation25], %s1800
        // Predicated region
        $region241: #{classifier_forward.1} parent=167 // pred_check
          %p1802 = pneg %p746
        $region242: #{classifier_forward.1} parent=167 // pred_check_branch
          %1804 = sbr.rel (%p1802) target = $region244
        $region243: #{classifier_forward.1} parent=167 // pred_region
          %1805 = dma.done %s1799, 16
        $region244: #{classifier_forward.1} parent=167 // pred_fallthru
          _
        %s1806 = sand.u32 %s93, 1
        %s1807 = scalar_lea.sflag [#allocation5], %s1806
        %s1808 = sand.u32 %s759, 1
        %s1809 = scalar_lea.vmem [#allocation26], %s1808
        // Predicated region
        $region245: #{classifier_forward.1} parent=167 // pred_check
          %p1810 = pneg %p772
        $region246: #{classifier_forward.1} parent=167 // pred_check_branch
          %1812 = sbr.rel (%p1810) target = $region248
        $region247: #{classifier_forward.1} parent=167 // pred_region
          %1813 = dma.done %s1807, 16
        $region248: #{classifier_forward.1} parent=167 // pred_fallthru
          _
        %s1814 = sand.u32 %s93, 1
        %s1815 = scalar_lea.sflag [#allocation5], %s1814
        %s1816 = sand.u32 %s785, 1
        %s1817 = smul.addr %s1816, 64
        %s1818 = scalar_lea.vmem [#allocation27], %s1817
        // Predicated region
        $region249: #{classifier_forward.1} parent=167 // pred_check
          %p1819 = pneg %p798
        $region250: #{classifier_forward.1} parent=167 // pred_check_branch
          %1821 = sbr.rel (%p1819) target = $region252
        $region251: #{classifier_forward.1} parent=167 // pred_region
          %1822 = dma.done %s1815, 1024
        $region252: #{classifier_forward.1} parent=167 // pred_fallthru
          _
        %s1823 = sand.u32 %s93, 1
        %s1824 = scalar_lea.sflag [#allocation5], %s1823
        %s1825 = sand.u32 %s811, 1
        %s1826 = scalar_lea.vmem [#allocation28], %s1825
        // Predicated region
        $region253: #{classifier_forward.1} parent=167 // pred_check
          %p1827 = pneg %p824
        $region254: #{classifier_forward.1} parent=167 // pred_check_branch
          %1829 = sbr.rel (%p1827) target = $region256
        $region255: #{classifier_forward.1} parent=167 // pred_region
          %1830 = dma.done %s1824, 16
        $region256: #{classifier_forward.1} parent=167 // pred_fallthru
          _
        %s1831 = sand.u32 %s93, 1
        %s1832 = scalar_lea.sflag [#allocation5], %s1831
        %s1833 = sand.u32 %s837, 1
        %s1834 = scalar_lea.vmem [#allocation29], %s1833
        // Predicated region
        $region257: #{classifier_forward.1} parent=167 // pred_check
          %p1835 = pneg %p850
        $region258: #{classifier_forward.1} parent=167 // pred_check_branch
          %1837 = sbr.rel (%p1835) target = $region260
        $region259: #{classifier_forward.1} parent=167 // pred_region
          %1838 = dma.done %s1832, 16
        $region260: #{classifier_forward.1} parent=167 // pred_fallthru
          _
        %s1839 = sand.u32 %s93, 1
        %s1840 = scalar_lea.sflag [#allocation5], %s1839
        %s1841 = sand.u32 %s863, 1
        %s1842 = scalar_lea.vmem [#allocation30], %s1841
        // Predicated region
        $region261: #{classifier_forward.1} parent=167 // pred_check
          %p1843 = pneg %p876
        $region262: #{classifier_forward.1} parent=167 // pred_check_branch
          %1845 = sbr.rel (%p1843) target = $region264
        $region263: #{classifier_forward.1} parent=167 // pred_region
          %1846 = dma.done %s1840, 16
        $region264: #{classifier_forward.1} parent=167 // pred_fallthru
          _
        %s1847 = sand.u32 %s93, 1
        %s1848 = scalar_lea.sflag [#allocation5], %s1847
        %s1849 = sand.u32 %s889, 1
        %s1850 = smul.addr %s1849, 128
        %s1851 = scalar_lea.vmem [#allocation31], %s1850
        // Predicated region
        $region265: #{classifier_forward.1} parent=167 // pred_check
          %p1852 = pneg %p902
        $region266: #{classifier_forward.1} parent=167 // pred_check_branch
          %1854 = sbr.rel (%p1852) target = $region268
        $region267: #{classifier_forward.1} parent=167 // pred_region
          %1855 = dma.done %s1848, 2048
        $region268: #{classifier_forward.1} parent=167 // pred_fallthru
          _
        %s1856 = sand.u32 %s93, 1
        %s1857 = scalar_lea.sflag [#allocation5], %s1856
        %s1858 = sand.u32 %s915, 1
        %s1859 = smul.addr %s1858, 2
        %s1860 = scalar_lea.vmem [#allocation32], %s1859
        // Predicated region
        $region269: #{classifier_forward.1} parent=167 // pred_check
          %p1861 = pneg %p928
        $region270: #{classifier_forward.1} parent=167 // pred_check_branch
          %1863 = sbr.rel (%p1861) target = $region272
        $region271: #{classifier_forward.1} parent=167 // pred_region
          %1864 = dma.done %s1857, 32
        $region272: #{classifier_forward.1} parent=167 // pred_fallthru
          _
        %s1865 = sand.u32 %s93, 1
        %s1866 = scalar_lea.sflag [#allocation5], %s1865
        %s1867 = sand.u32 %s941, 1
        %s1868 = smul.addr %s1867, 128
        %s1869 = scalar_lea.vmem [#allocation33], %s1868
        // Predicated region
        $region273: #{classifier_forward.1} parent=167 // pred_check
          %p1870 = pneg %p954
        $region274: #{classifier_forward.1} parent=167 // pred_check_branch
          %1872 = sbr.rel (%p1870) target = $region276
        $region275: #{classifier_forward.1} parent=167 // pred_region
          %1873 = dma.done %s1866, 2048
        $region276: #{classifier_forward.1} parent=167 // pred_fallthru
          _
        %s1874 = sand.u32 %s93, 1
        %s1875 = scalar_lea.sflag [#allocation5], %s1874
        %s1876 = sand.u32 %s967, 1
        %s1877 = scalar_lea.vmem [#allocation34], %s1876
        // Predicated region
        $region277: #{classifier_forward.1} parent=167 // pred_check
          %p1878 = pneg %p980
        $region278: #{classifier_forward.1} parent=167 // pred_check_branch
          %1880 = sbr.rel (%p1878) target = $region280
        $region279: #{classifier_forward.1} parent=167 // pred_region
          %1881 = dma.done %s1875, 16
        $region280: #{classifier_forward.1} parent=167 // pred_fallthru
          _
        %s1882 = sand.u32 %s93, 1
        %s1883 = scalar_lea.sflag [#allocation5], %s1882
        %s1884 = sand.u32 %s993, 1
        %s1885 = scalar_lea.vmem [#allocation35], %s1884
        // Predicated region
        $region281: #{classifier_forward.1} parent=167 // pred_check
          %p1886 = pneg %p1006
        $region282: #{classifier_forward.1} parent=167 // pred_check_branch
          %1888 = sbr.rel (%p1886) target = $region284
        $region283: #{classifier_forward.1} parent=167 // pred_region
          %1889 = dma.done %s1883, 16
        $region284: #{classifier_forward.1} parent=167 // pred_fallthru
          _
        %s1890 = sand.u32 %s93, 1
        %s1891 = scalar_lea.sflag [#allocation5], %s1890
        %s1892 = sand.u32 %s1019, 1
        %s1893 = scalar_lea.vmem [#allocation36], %s1892
        // Predicated region
        $region285: #{classifier_forward.1} parent=167 // pred_check
          %p1894 = pneg %p1032
        $region286: #{classifier_forward.1} parent=167 // pred_check_branch
          %1896 = sbr.rel (%p1894) target = $region288
        $region287: #{classifier_forward.1} parent=167 // pred_region
          %1897 = dma.done %s1891, 16
        $region288: #{classifier_forward.1} parent=167 // pred_fallthru
          _
        %p1898 = scmp.lt.s32.totalorder %s97, 1
        %s1899 = scalar_select %p1898, %s97, 1
        %s1900 = smul.addr %s1899, 2
        %s1901 = smul.addr %s1900, 8
        %s1902 = scalar_lea.vmem %s1, %s1901
        %p1903 = pneg %p126
        %p1904 = pneg %p123
        %p1905 = pneg %p147
        %p1906 = pneg %p144
        %p1907 = pneg %p168
        %p1908 = pneg %p165
        %p1909 = pneg %p189
        %p1910 = pneg %p186
        %p1911 = pneg %p210
        %p1912 = pneg %p207
        %p1913 = pneg %p231
        %p1914 = pneg %p228
        %p1915 = pneg %p252
        %p1916 = pneg %p249
        %s1917 = sand.u32 %s93, 1
        %s1918 = scalar_lea.sflag [#allocation5], %s1917
        %s1919 = sand.u32 %s265, 1
        %s1920 = scalar_lea.vmem [#allocation9], %s1919
        %p1921 = pneg %p278
        %p1922 = pneg %p275
        %s1923 = sand.u32 %s93, 1
        %s1924 = scalar_lea.sflag [#allocation5], %s1923
        %s1925 = sand.u32 %s291, 1
        %s1926 = scalar_lea.vmem [#allocation10], %s1925
        %p1927 = pneg %p304
        %p1928 = pneg %p301
        %p1929 = scmp.lt.s32.totalorder %s98, 4
        %s1930 = scalar_select %p1929, %s98, 4
        %s1931 = smul.addr %s1930, 32
        %s1932 = smul.addr %s1931, 4
        %s1933 = scalar_lea.vmem %s19, %s1932
        %p1934 = pneg %p330
        %p1935 = pneg %p327
        %s1936 = sand.u32 %s93, 1
        %s1937 = scalar_lea.sflag [#allocation5], %s1936
        %s1938 = sand.u32 %s343, 1
        %s1939 = smul.addr %s1938, 2
        %s1940 = scalar_lea.vmem [#allocation11], %s1939
        %p1941 = pneg %p356
        %p1942 = pneg %p353
        %s1943 = sand.u32 %s93, 1
        %s1944 = scalar_lea.sflag [#allocation5], %s1943
        %s1945 = sand.u32 %s369, 1
        %s1946 = smul.addr %s1945, 128
        %s1947 = scalar_lea.vmem [#allocation12], %s1946
        %p1948 = pneg %p382
        %p1949 = pneg %p379
        %s1950 = sand.u32 %s93, 1
        %s1951 = scalar_lea.sflag [#allocation5], %s1950
        %s1952 = sand.u32 %s395, 1
        %s1953 = scalar_lea.vmem [#allocation13], %s1952
        %p1954 = pneg %p408
        %p1955 = pneg %p405
        %s1956 = sand.u32 %s93, 1
        %s1957 = scalar_lea.sflag [#allocation5], %s1956
        %s1958 = sand.u32 %s421, 1
        %s1959 = scalar_lea.vmem [#allocation14], %s1958
        %p1960 = pneg %p434
        %p1961 = pneg %p431
        %s1962 = sand.u32 %s93, 1
        %s1963 = scalar_lea.sflag [#allocation5], %s1962
        %s1964 = sand.u32 %s447, 1
        %s1965 = scalar_lea.vmem [#allocation15], %s1964
        %p1966 = pneg %p460
        %p1967 = pneg %p457
        %s1968 = sand.u32 %s93, 1
        %s1969 = scalar_lea.sflag [#allocation5], %s1968
        %s1970 = sand.u32 %s473, 1
        %s1971 = smul.addr %s1970, 192
        %s1972 = scalar_lea.vmem [#allocation16], %s1971
        %p1973 = pneg %p486
        %p1974 = pneg %p483
        %s1975 = sand.u32 %s93, 1
        %s1976 = scalar_lea.sflag [#allocation5], %s1975
        %s1977 = sand.u32 %s499, 1
        %s1978 = smul.addr %s1977, 3
        %s1979 = scalar_lea.vmem [#allocation17], %s1978
        %p1980 = pneg %p512
        %p1981 = pneg %p509
        %s1982 = sand.u32 %s93, 1
        %s1983 = scalar_lea.sflag [#allocation5], %s1982
        %s1984 = sand.u32 %s525, 1
        %s1985 = smul.addr %s1984, 64
        %s1986 = scalar_lea.vmem [#allocation18], %s1985
        %p1987 = pneg %p538
        %p1988 = pneg %p535
        %s1989 = sand.u32 %s93, 1
        %s1990 = scalar_lea.sflag [#allocation5], %s1989
        %s1991 = sand.u32 %s551, 1
        %s1992 = scalar_lea.vmem [#allocation19], %s1991
        %p1993 = pneg %p564
        %p1994 = pneg %p561
        %s1995 = sand.u32 %s93, 1
        %s1996 = scalar_lea.sflag [#allocation5], %s1995
        %s1997 = sand.u32 %s577, 1
        %s1998 = scalar_lea.vmem [#allocation20], %s1997
        %p1999 = pneg %p590
        %p2000 = pneg %p587
        %s2001 = sand.u32 %s93, 1
        %s2002 = scalar_lea.sflag [#allocation5], %s2001
        %s2003 = sand.u32 %s603, 1
        %s2004 = scalar_lea.vmem [#allocation21], %s2003
        %p2005 = pneg %p616
        %p2006 = pneg %p613
        %s2007 = sand.u32 %s93, 1
        %s2008 = scalar_lea.sflag [#allocation5], %s2007
        %s2009 = sand.u32 %s629, 1
        %s2010 = smul.addr %s2009, 128
        %s2011 = scalar_lea.vmem [#allocation22], %s2010
        %p2012 = pneg %p642
        %p2013 = pneg %p639
        %s2014 = sand.u32 %s93, 1
        %s2015 = scalar_lea.sflag [#allocation5], %s2014
        %s2016 = sand.u32 %s655, 1
        %s2017 = smul.addr %s2016, 2
        %s2018 = scalar_lea.vmem [#allocation23], %s2017
        %p2019 = pneg %p668
        %p2020 = pneg %p665
        %p2021 = scmp.lt.s32.totalorder %s98, 4
        %s2022 = scalar_select %p2021, %s98, 4
        %s2023 = smul.addr %s2022, 9
        %s2024 = scalar_lea.vmem %s47, %s2023
        %p2025 = pneg %p694
        %p2026 = pneg %p691
        %s2027 = sand.u32 %s93, 1
        %s2028 = scalar_lea.sflag [#allocation5], %s2027
        %s2029 = sand.u32 %s707, 1
        %s2030 = scalar_lea.vmem [#allocation24], %s2029
        %p2031 = pneg %p720
        %p2032 = pneg %p717
        %s2033 = sand.u32 %s93, 1
        %s2034 = scalar_lea.sflag [#allocation5], %s2033
        %s2035 = sand.u32 %s733, 1
        %s2036 = scalar_lea.vmem [#allocation25], %s2035
        %p2037 = pneg %p746
        %p2038 = pneg %p743
        %s2039 = sand.u32 %s93, 1
        %s2040 = scalar_lea.sflag [#allocation5], %s2039
        %s2041 = sand.u32 %s759, 1
        %s2042 = scalar_lea.vmem [#allocation26], %s2041
        %p2043 = pneg %p772
        %p2044 = pneg %p769
        %s2045 = sand.u32 %s93, 1
        %s2046 = scalar_lea.sflag [#allocation5], %s2045
        %s2047 = sand.u32 %s785, 1
        %s2048 = smul.addr %s2047, 64
        %s2049 = scalar_lea.vmem [#allocation27], %s2048
        %p2050 = pneg %p798
        %p2051 = pneg %p795
        %s2052 = sand.u32 %s93, 1
        %s2053 = scalar_lea.sflag [#allocation5], %s2052
        %s2054 = sand.u32 %s811, 1
        %s2055 = scalar_lea.vmem [#allocation28], %s2054
        %p2056 = pneg %p824
        %p2057 = pneg %p821
        %s2058 = sand.u32 %s93, 1
        %s2059 = scalar_lea.sflag [#allocation5], %s2058
        %s2060 = sand.u32 %s837, 1
        %s2061 = scalar_lea.vmem [#allocation29], %s2060
        %p2062 = pneg %p850
        %p2063 = pneg %p847
        %s2064 = sand.u32 %s93, 1
        %s2065 = scalar_lea.sflag [#allocation5], %s2064
        %s2066 = sand.u32 %s863, 1
        %s2067 = scalar_lea.vmem [#allocation30], %s2066
        %p2068 = pneg %p876
        %p2069 = pneg %p873
        %s2070 = sand.u32 %s93, 1
        %s2071 = scalar_lea.sflag [#allocation5], %s2070
        %s2072 = sand.u32 %s889, 1
        %s2073 = smul.addr %s2072, 128
        %s2074 = scalar_lea.vmem [#allocation31], %s2073
        %p2075 = pneg %p902
        %p2076 = pneg %p899
        %s2077 = sand.u32 %s93, 1
        %s2078 = scalar_lea.sflag [#allocation5], %s2077
        %s2079 = sand.u32 %s915, 1
        %s2080 = smul.addr %s2079, 2
        %s2081 = scalar_lea.vmem [#allocation32], %s2080
        %p2082 = pneg %p928
        %p2083 = pneg %p925
        %s2084 = sand.u32 %s93, 1
        %s2085 = scalar_lea.sflag [#allocation5], %s2084
        %s2086 = sand.u32 %s941, 1
        %s2087 = smul.addr %s2086, 128
        %s2088 = scalar_lea.vmem [#allocation33], %s2087
        %p2089 = pneg %p954
        %p2090 = pneg %p951
        %s2091 = sand.u32 %s93, 1
        %s2092 = scalar_lea.sflag [#allocation5], %s2091
        %s2093 = sand.u32 %s967, 1
        %s2094 = scalar_lea.vmem [#allocation34], %s2093
        %p2095 = pneg %p980
        %p2096 = pneg %p977
        %s2097 = sand.u32 %s93, 1
        %s2098 = scalar_lea.sflag [#allocation5], %s2097
        %s2099 = sand.u32 %s993, 1
        %s2100 = scalar_lea.vmem [#allocation35], %s2099
        %p2101 = pneg %p1006
        %p2102 = pneg %p1003
        %s2103 = sand.u32 %s93, 1
        %s2104 = scalar_lea.sflag [#allocation5], %s2103
        %s2105 = sand.u32 %s1019, 1
        %s2106 = scalar_lea.vmem [#allocation36], %s2105
        %p2107 = pneg %p1032
        %p2108 = pneg %p1029
        %p2109 = pneg %p1058
        %p2110 = pneg %p1055
        %s2111 = sand.u32 %s1045, 1
        %s2112 = scalar_lea.sflag [#allocation6], %s2111
        %s2113 = sand.u32 %s1045, 1
        %s2114 = scalar_lea.vmem [#allocation37], %s2113
        %p2115 = scmp.lt.s32.totalorder %s97, 1
        %s2116 = scalar_select %p2115, %s97, 1
        %s2117 = smul.addr %s2116, 2
        %s2118 = smul.addr %s2117, 8
        %s2119 = scalar_lea.vmem %s1, %s2118
        %p2120 = scmp.lt.s32.totalorder %s98, 4
        %s2121 = scalar_select %p2120, %s98, 4
        %s2122 = smul.addr %s2121, 32
        %s2123 = smul.addr %s2122, 4
        %s2124 = scalar_lea.vmem %s19, %s2123
        %p2125 = scmp.lt.s32.totalorder %s98, 4
        %s2126 = scalar_select %p2125, %s98, 4
        %s2127 = smul.addr %s2126, 9
        %s2128 = scalar_lea.vmem %s47, %s2127
        %p2130 = scmp.eq.s32.totalorder %s98, 0
        // Predicated region
        $region289: #{classifier_forward.1} parent=167 // pred_check
          %p2131 = pneg %p2130
        $region290: #{classifier_forward.1} parent=167 // pred_check_branch
          %2133 = sbr.rel (%p2131) target = $region292
        $region291: #{classifier_forward.1} parent=167 // pred_region
          %v2134 = vld [vmem:[%s2119] sm:$0xff]
          %v2135 = vld [vmem:[%s2119 + $0x8] sm:$0xff]
          %v2136 = vld [vmem:[#allocation4] sm:$0xff]
          %v2137 = vld [vmem:[#allocation4 + $0x8] sm:$0xff]
          %v2138 = vld [vmem:[#allocation4 + $0x10] sm:$0xff]
          %v2139 = vld [vmem:[#allocation4 + $0x18] sm:$0xff]
          %v2140 = vld [vmem:[#allocation4 + $0x20] sm:$0xff]
          %v2141 = vld [vmem:[#allocation7] sm:$0x1]
          %v2143 = vlaneseq
          %v2144 = vshrl.u32 %v2143, 7
          %v2145 = vsub.s32 0, %v2144
          %v2146 = vrot.slane %v2141, %v2145
          %vm2148 = vcmask 326656
          %v2150 = vsel %vm2148, %v2134, 0
          %v2153 = vsel %vm2148, %v2135, 0
          %2155 = vmatprep.subr.mxu0 0.0
          %2156 = vmatpush1.msra.mxu0 %v2136
          %2157 = vmatprep.subr.mxu0 0.0
          %2158 = vmatpush1.msra.mxu0 %v2137
          %2159 = vmatprep.subr.mxu0 0.0
          %2160 = vmatpush1.msra.mxu0 %v2138
          %2161 = vmatprep.subr.mxu0 0.0
          %2162 = vmatpush1.msra.mxu0 %v2139
          %2163 = vmatprep.subr.mxu0 0.0
          %2164 = vmatpush1.msra.mxu0 %v2140
          %2165 = vmatprep.subr.mxu0 0.0
          %2166 = vmatpush1.msra.mxu0 0.0
          %2167 = vmatprep.subr.mxu0 0.0
          %2168 = vmatpush1.msra.mxu0 0.0
          %2169 = vmatprep.subr.mxu0 0.0
          %2170 = vmatpush1.msra.mxu0 0.0
          %2171 = vmatprep.subr.mxu0 0.0
          %2172 = vmatpush1.msra.mxu0 0.0
          %2173 = vmatprep.subr.mxu0 0.0
          %2174 = vmatpush1.msra.mxu0 0.0
          %2175 = vmatprep.subr.mxu0 0.0
          %2176 = vmatpush1.msra.mxu0 0.0
          %2177 = vmatprep.subr.mxu0 0.0
          %2178 = vmatpush1.msra.mxu0 0.0
          %2179 = vmatprep.subr.mxu0 0.0
          %2180 = vmatpush1.msra.mxu0 0.0
          %2181 = vmatprep.subr.mxu0 0.0
          %2182 = vmatpush1.msra.mxu0 0.0
          %2183 = vmatprep.subr.mxu0 0.0
          %2184 = vmatpush1.msra.mxu0 0.0
          %2185 = vmatprep.subr.mxu0 0.0
          %2186 = vmatpush1.msra.mxu0 0.0
          %2187 = vmatprep.subr.mxu0 0.0
          %2188 = vmatpush1.msra.mxu0 0.0
          %2189 = vmatprep.subr.mxu0 0.0
          %2190 = vmatpush1.msra.mxu0 0.0
          %2191 = vmatprep.subr.mxu0 0.0
          %2192 = vmatpush1.msra.mxu0 0.0
          %2193 = vmatprep.subr.mxu0 0.0
          %2194 = vmatpush1.msra.mxu0 0.0
          %2195 = vmatprep.subr.mxu0 0.0
          %2196 = vmatpush1.msra.mxu0 0.0
          %2197 = vmatprep.subr.mxu0 0.0
          %2198 = vmatpush1.msra.mxu0 0.0
          %2199 = vmatprep.subr.mxu0 0.0
          %2200 = vmatpush1.msra.mxu0 0.0
          %2201 = vmatprep.subr.mxu0 0.0
          %2202 = vmatpush1.msra.mxu0 0.0
          %2203 = vmatprep.subr.mxu0 0.0
          %2204 = vmatpush1.msra.mxu0 0.0
          %2205 = vmatprep.subr.mxu0 0.0
          %2206 = vmatpush1.msra.mxu0 0.0
          %2207 = vmatprep.subr.mxu0 0.0
          %2208 = vmatpush1.msra.mxu0 0.0
          %2209 = vmatprep.subr.mxu0 0.0
          %2210 = vmatpush1.msra.mxu0 0.0
          %2211 = vmatprep.subr.mxu0 0.0
          %2212 = vmatpush1.msra.mxu0 0.0
          %2213 = vmatprep.subr.mxu0 0.0
          %2214 = vmatpush1.msra.mxu0 0.0
          %2215 = vmatprep.subr.mxu0 0.0
          %2216 = vmatpush1.msra.mxu0 0.0
          %2217 = vmatprep.subr.mxu0 0.0
          %2218 = vmatpush1.msra.mxu0 0.0
          %2219 = vmatprep.mubr.f32.mxu0 0.0
          %2220 = vmatmul.mubr.f32.gmra.mrb[0].mxu0 %v2150
          %v2221 = vpop.f32.mrb[0].mxu0
          %v2222 = vadd.f32 %v2146, %v2221
          %v2223 = vpop.f32.mrb[0].mxu0
          %2224 = vmatprep.mubr.f32.mxu0 0.0
          %2225 = vmatmul.mubr.f32.gmra.mrb[0].mxu0 %v2153
          %v2226 = vpop.f32.mrb[0].mxu0
          %v2227 = vadd.f32 %v2146, %v2226
          %v2228 = vpop.f32.mrb[0].mxu0
          %2229 = vdwg.mxu0
          %2230 = vst [vmem:[#allocation2] sm:$0xff] %v2222
          %2231 = vst [vmem:[#allocation2 + $0x8] sm:$0xff] %v2227
        $region292: #{classifier_forward.1} parent=167 // pred_fallthru
          _
        %v2232 = vld [vmem:[#allocation2] sm:$0xff]
        %v2233 = vld [vmem:[#allocation2 + $0x8] sm:$0xff]
        %v2234 = vld [vmem:[%s1666] sm:$0x1]
        %v2235 = vld [vmem:[%s1674] sm:$0x1]
        %2236 = vadd.xlane.f32.xlu0 %v2232
        %v2237 = vpop.xlane.xlu0 %2236
        %2238 = vadd.xlane.f32.xlu0 %v2233
        %v2239 = vpop.xlane.xlu0 %2238
        %v2240 = vrcp.pop 128.0
        %v2241 = vmul.f32 %v2237, %v2240
        %v2242 = vmul.f32 %v2239, %v2240
        %v2243 = vsub.f32 %v2232, %v2241
        %v2244 = vsub.f32 %v2233, %v2242
        %v2245 = vmul.f32 %v2243, %v2243
        %v2246 = vmul.f32 %v2244, %v2244
        %2247 = vadd.xlane.f32.xlu0 %v2245
        %v2248 = vpop.xlane.xlu0 %2247
        %2249 = vadd.xlane.f32.xlu0 %v2246
        %v2250 = vpop.xlane.xlu0 %2249
        %v2251 = vmul.f32 %v2248, %v2240
        %v2252 = vmul.f32 %v2250, %v2240
        %v2253 = vadd.f32 %v2251, 1e-05
        %v2254 = vadd.f32 %v2252, 1e-05
        %v2255 = vrsqrt.pop %v2253
        %v2256 = vrsqrt.pop %v2254
        %v2257 = vmul.f32 %v2243, %v2255
        %v2258 = vmul.f32 %v2244, %v2256
        %v2260 = vlaneseq
        %v2261 = vshrl.u32 %v2260, 7
        %v2262 = vsub.s32 0, %v2261
        %v2263 = vrot.slane %v2234, %v2262
        %v2265 = vmul.f32 %v2257, %v2263
        %v2266 = vmul.f32 %v2258, %v2263
        %v2268 = vlaneseq
        %v2269 = vshrl.u32 %v2268, 7
        %v2270 = vsub.s32 0, %v2269
        %v2271 = vrot.slane %v2235, %v2270
        %v2273 = vadd.f32 %v2265, %v2271
        %v2274 = vadd.f32 %v2266, %v2271
        %v2275 = vld [vmem:[%s2124] sm:$0xff]
        %v2276 = vld [vmem:[%s2124 + $0x8] sm:$0xff]
        %v2277 = vld [vmem:[%s2124 + $0x10] sm:$0xff]
        %v2278 = vld [vmem:[%s2124 + $0x18] sm:$0xff]
        %v2279 = vld [vmem:[%s2124 + $0x20] sm:$0xff]
        %v2280 = vld [vmem:[%s2124 + $0x28] sm:$0xff]
        %v2281 = vld [vmem:[%s2124 + $0x30] sm:$0xff]
        %v2282 = vld [vmem:[%s2124 + $0x38] sm:$0xff]
        %v2283 = vld [vmem:[%s2124 + $0x40] sm:$0xff]
        %v2284 = vld [vmem:[%s2124 + $0x48] sm:$0xff]
        %v2285 = vld [vmem:[%s2124 + $0x50] sm:$0xff]
        %v2286 = vld [vmem:[%s2124 + $0x58] sm:$0xff]
        %v2287 = vld [vmem:[%s2124 + $0x60] sm:$0xff]
        %v2288 = vld [vmem:[%s2124 + $0x68] sm:$0xff]
        %v2289 = vld [vmem:[%s2124 + $0x70] sm:$0xff]
        %v2290 = vld [vmem:[%s2124 + $0x78] sm:$0xff]
        %v2291 = vpack.c.bf16 %v2274, %v2273
        %v2292 = vld [vmem:[%s1683] sm:$0x3]
        %v2294 = vlaneseq
        %v2295 = vshrl.u32 %v2294, 7
        %v2296 = vsub.s32 0, %v2295
        %v2297 = vrot.slane %v2292, %v2296
        %v2298 = vlaneseq
        %v2299 = vshrl.u32 %v2298, 7
        %v2300 = vsub.s32 1, %v2299
        %v2301 = vrot.slane %v2292, %v2300
        %v2320 = vunpack.c.l.b16 %v2275
        %v2321 = vunpack.c.h.b16 %v2275
        %v2322 = vunpack.c.l.b16 %v2276
        %v2323 = vunpack.c.h.b16 %v2276
        %v2324 = vunpack.c.l.b16 %v2277
        %v2325 = vunpack.c.h.b16 %v2277
        %v2326 = vunpack.c.l.b16 %v2278
        %v2327 = vunpack.c.h.b16 %v2278
        %v2328 = vunpack.c.l.b16 %v2279
        %v2329 = vunpack.c.h.b16 %v2279
        %v2330 = vunpack.c.l.b16 %v2280
        %v2331 = vunpack.c.h.b16 %v2280
        %v2332 = vunpack.c.l.b16 %v2281
        %v2333 = vunpack.c.h.b16 %v2281
        %v2334 = vunpack.c.l.b16 %v2282
        %v2335 = vunpack.c.h.b16 %v2282
        %v2336 = vunpack.c.l.b16 %v2283
        %v2337 = vunpack.c.h.b16 %v2283
        %v2338 = vunpack.c.l.b16 %v2284
        %v2339 = vunpack.c.h.b16 %v2284
        %v2340 = vunpack.c.l.b16 %v2285
        %v2341 = vunpack.c.h.b16 %v2285
        %v2342 = vunpack.c.l.b16 %v2286
        %v2343 = vunpack.c.h.b16 %v2286
        %v2344 = vunpack.c.l.b16 %v2287
        %v2345 = vunpack.c.h.b16 %v2287
        %v2346 = vunpack.c.l.b16 %v2288
        %v2347 = vunpack.c.h.b16 %v2288
        %v2348 = vunpack.c.l.b16 %v2289
        %v2349 = vunpack.c.h.b16 %v2289
        %v2350 = vunpack.c.l.b16 %v2290
        %v2351 = vunpack.c.h.b16 %v2290
        %v2352 = vpack.c.b16 %v2322, %v2320
        %v2353 = vpack.c.b16 %v2323, %v2321
        %v2354 = vpack.c.b16 %v2326, %v2324
        %v2355 = vpack.c.b16 %v2327, %v2325
        %v2356 = vpack.c.b16 %v2330, %v2328
        %v2357 = vpack.c.b16 %v2331, %v2329
        %v2358 = vpack.c.b16 %v2334, %v2332
        %v2359 = vpack.c.b16 %v2335, %v2333
        %v2360 = vpack.c.b16 %v2338, %v2336
        %v2361 = vpack.c.b16 %v2339, %v2337
        %v2362 = vpack.c.b16 %v2342, %v2340
        %v2363 = vpack.c.b16 %v2343, %v2341
        %v2364 = vpack.c.b16 %v2346, %v2344
        %v2365 = vpack.c.b16 %v2347, %v2345
        %v2366 = vpack.c.b16 %v2350, %v2348
        %v2367 = vpack.c.b16 %v2351, %v2349
        %2384 = vmatprep.subr.bf16.mxu0 %v2353
        %2385 = vmatpush1.bf16.msra.mxu0 %v2352
        %2386 = vmatprep.subr.bf16.mxu0 %v2355
        %2387 = vmatpush1.bf16.msra.mxu0 %v2354
        %2388 = vmatprep.subr.bf16.mxu0 %v2357
        %2389 = vmatpush1.bf16.msra.mxu0 %v2356
        %2390 = vmatprep.subr.bf16.mxu0 %v2359
        %2391 = vmatpush1.bf16.msra.mxu0 %v2358
        %2392 = vmatprep.subr.bf16.mxu0 %v2361
        %2393 = vmatpush1.bf16.msra.mxu0 %v2360
        %2394 = vmatprep.subr.bf16.mxu0 %v2363
        %2395 = vmatpush1.bf16.msra.mxu0 %v2362
        %2396 = vmatprep.subr.bf16.mxu0 %v2365
        %2397 = vmatpush1.bf16.msra.mxu0 %v2364
        %2398 = vmatprep.subr.bf16.mxu0 %v2367
        %2399 = vmatpush1.bf16.msra.mxu0 %v2366
        %2400 = vmatprep.subr.bf16.mxu0 0
        %2401 = vmatpush1.bf16.msra.mxu0 0
        %2402 = vmatprep.subr.bf16.mxu0 0
        %2403 = vmatpush1.bf16.msra.mxu0 0
        %2404 = vmatprep.subr.bf16.mxu0 0
        %2405 = vmatpush1.bf16.msra.mxu0 0
        %2406 = vmatprep.subr.bf16.mxu0 0
        %2407 = vmatpush1.bf16.msra.mxu0 0
        %2408 = vmatprep.subr.bf16.mxu0 0
        %2409 = vmatpush1.bf16.msra.mxu0 0
        %2410 = vmatprep.subr.bf16.mxu0 0
        %2411 = vmatpush1.bf16.msra.mxu0 0
        %2412 = vmatprep.subr.bf16.mxu0 0
        %2413 = vmatpush1.bf16.msra.mxu0 0
        %2414 = vmatprep.subr.bf16.mxu0 0
        %2415 = vmatpush1.bf16.msra.mxu0 0
        %2416 = vmatprep.mubr.bf16.mxu0 0
        %2417 = vmatmul.mubr.bf16.gmra.mrb[0].mxu0 %v2291
        %v2418 = vpop.f32.mrb[0].mxu0
        %v2419 = vadd.f32 %v2297, %v2418
        %v2420 = vpop.f32.mrb[0].mxu0
        %v2421 = vadd.f32 %v2301, %v2420
        %v2422 = vpop.f32.mrb[0].mxu0
        %v2423 = vadd.f32 %v2297, %v2422
        %v2424 = vpop.f32.mrb[0].mxu0
        %v2425 = vadd.f32 %v2301, %v2424
        %2426 = vdwg.mxu0
        %v2427 = vsub.f32 0.0, %v2419
        %v2428 = vsub.f32 0.0, %v2421
        %v2429 = vsub.f32 0.0, %v2423
        %v2430 = vsub.f32 0.0, %v2425
        %v2431 = vmul.f32 %v2427, 1.442695
        %v2432 = vpow.pop %v2431
        %v2433 = vmul.f32 %v2428, 1.442695
        %v2434 = vpow.pop %v2433
        %v2435 = vmul.f32 %v2429, 1.442695
        %v2436 = vpow.pop %v2435
        %v2437 = vmul.f32 %v2430, 1.442695
        %v2438 = vpow.pop %v2437
        %v2439 = vadd.f32 %v2432, 1.0
        %v2440 = vadd.f32 %v2434, 1.0
        %v2441 = vadd.f32 %v2436, 1.0
        %v2442 = vadd.f32 %v2438, 1.0
        %v2443 = vrcp.pop %v2439
        %v2444 = vrcp.pop %v2440
        %v2445 = vrcp.pop %v2441
        %v2446 = vrcp.pop %v2442
        %v2447 = vmul.f32 %v2419, %v2443
        %v2448 = vmul.f32 %v2421, %v2444
        %v2449 = vmul.f32 %v2423, %v2445
        %v2450 = vmul.f32 %v2425, %v2446
        %v2451 = vld [vmem:[%s1692] sm:$0xf]
        %v2452 = vld [vmem:[%s1692 + $0x4] sm:$0xf]
        %v2453 = vld [vmem:[%s1692 + $0x8] sm:$0xf]
        %v2454 = vld [vmem:[%s1692 + $0xc] sm:$0xf]
        %v2455 = vld [vmem:[%s1692 + $0x10] sm:$0xf]
        %v2456 = vld [vmem:[%s1692 + $0x14] sm:$0xf]
        %v2457 = vld [vmem:[%s1692 + $0x18] sm:$0xf]
        %v2458 = vld [vmem:[%s1692 + $0x1c] sm:$0xf]
        %v2459 = vld [vmem:[%s1692 + $0x20] sm:$0xf]
        %v2460 = vld [vmem:[%s1692 + $0x24] sm:$0xf]
        %v2461 = vld [vmem:[%s1692 + $0x28] sm:$0xf]
        %v2462 = vld [vmem:[%s1692 + $0x2c] sm:$0xf]
        %v2463 = vld [vmem:[%s1692 + $0x30] sm:$0xf]
        %v2464 = vld [vmem:[%s1692 + $0x34] sm:$0xf]
        %v2465 = vld [vmem:[%s1692 + $0x38] sm:$0xf]
        %v2466 = vld [vmem:[%s1692 + $0x3c] sm:$0xf]
        %v2467 = vld [vmem:[%s1692 + $0x40] sm:$0xf]
        %v2468 = vld [vmem:[%s1692 + $0x44] sm:$0xf]
        %v2469 = vld [vmem:[%s1692 + $0x48] sm:$0xf]
        %v2470 = vld [vmem:[%s1692 + $0x4c] sm:$0xf]
        %v2471 = vld [vmem:[%s1692 + $0x50] sm:$0xf]
        %v2472 = vld [vmem:[%s1692 + $0x54] sm:$0xf]
        %v2473 = vld [vmem:[%s1692 + $0x58] sm:$0xf]
        %v2474 = vld [vmem:[%s1692 + $0x5c] sm:$0xf]
        %v2475 = vld [vmem:[%s1692 + $0x60] sm:$0xf]
        %v2476 = vld [vmem:[%s1692 + $0x64] sm:$0xf]
        %v2477 = vld [vmem:[%s1692 + $0x68] sm:$0xf]
        %v2478 = vld [vmem:[%s1692 + $0x6c] sm:$0xf]
        %v2479 = vld [vmem:[%s1692 + $0x70] sm:$0xf]
        %v2480 = vld [vmem:[%s1692 + $0x74] sm:$0xf]
        %v2481 = vld [vmem:[%s1692 + $0x78] sm:$0xf]
        %v2482 = vld [vmem:[%s1692 + $0x7c] sm:$0xf]
        %v2483 = vpack.c.bf16 %v2449, %v2447
        %v2484 = vpack.c.bf16 %v2450, %v2448
        %v2485 = vld [vmem:[%s1700] sm:$0x1]
        %v2487 = vlaneseq
        %v2488 = vshrl.u32 %v2487, 7
        %v2489 = vsub.s32 0, %v2488
        %v2490 = vrot.slane %v2485, %v2489
        %v2524 = vunpack.c.l.b16 %v2451
        %v2525 = vunpack.c.l.b16 %v2452
        %v2526 = vunpack.c.l.b16 %v2453
        %v2527 = vunpack.c.l.b16 %v2454
        %v2528 = vunpack.c.l.b16 %v2455
        %v2529 = vunpack.c.l.b16 %v2456
        %v2530 = vunpack.c.l.b16 %v2457
        %v2531 = vunpack.c.l.b16 %v2458
        %v2532 = vunpack.c.l.b16 %v2459
        %v2533 = vunpack.c.l.b16 %v2460
        %v2534 = vunpack.c.l.b16 %v2461
        %v2535 = vunpack.c.l.b16 %v2462
        %v2536 = vunpack.c.l.b16 %v2463
        %v2537 = vunpack.c.l.b16 %v2464
        %v2538 = vunpack.c.l.b16 %v2465
        %v2539 = vunpack.c.l.b16 %v2466
        %v2540 = vunpack.c.l.b16 %v2467
        %v2541 = vunpack.c.l.b16 %v2468
        %v2542 = vunpack.c.l.b16 %v2469
        %v2543 = vunpack.c.l.b16 %v2470
        %v2544 = vunpack.c.l.b16 %v2471
        %v2545 = vunpack.c.l.b16 %v2472
        %v2546 = vunpack.c.l.b16 %v2473
        %v2547 = vunpack.c.l.b16 %v2474
        %v2548 = vunpack.c.l.b16 %v2475
        %v2549 = vunpack.c.l.b16 %v2476
        %v2550 = vunpack.c.l.b16 %v2477
        %v2551 = vunpack.c.l.b16 %v2478
        %v2552 = vunpack.c.l.b16 %v2479
        %v2553 = vunpack.c.l.b16 %v2480
        %v2554 = vunpack.c.l.b16 %v2481
        %v2555 = vunpack.c.l.b16 %v2482
        %v2556 = vpack.c.b16 %v2525, %v2524
        %v2557 = vpack.c.b16 %v2527, %v2526
        %v2558 = vpack.c.b16 %v2529, %v2528
        %v2559 = vpack.c.b16 %v2531, %v2530
        %v2560 = vpack.c.b16 %v2533, %v2532
        %v2561 = vpack.c.b16 %v2535, %v2534
        %v2562 = vpack.c.b16 %v2537, %v2536
        %v2563 = vpack.c.b16 %v2539, %v2538
        %v2564 = vpack.c.b16 %v2541, %v2540
        %v2565 = vpack.c.b16 %v2543, %v2542
        %v2566 = vpack.c.b16 %v2545, %v2544
        %v2567 = vpack.c.b16 %v2547, %v2546
        %v2568 = vpack.c.b16 %v2549, %v2548
        %v2569 = vpack.c.b16 %v2551, %v2550
        %v2570 = vpack.c.b16 %v2553, %v2552
        %v2571 = vpack.c.b16 %v2555, %v2554
        %2588 = vmatprep.subr.bf16.mxu0 0
        %2589 = vmatpush1.bf16.msra.mxu0 %v2556
        %2590 = vmatprep.subr.bf16.mxu0 0
        %2591 = vmatpush1.bf16.msra.mxu0 %v2557
        %2592 = vmatprep.subr.bf16.mxu0 0
        %2593 = vmatpush1.bf16.msra.mxu0 %v2558
        %2594 = vmatprep.subr.bf16.mxu0 0
        %2595 = vmatpush1.bf16.msra.mxu0 %v2559
        %2596 = vmatprep.subr.bf16.mxu0 0
        %2597 = vmatpush1.bf16.msra.mxu0 %v2560
        %2598 = vmatprep.subr.bf16.mxu0 0
        %2599 = vmatpush1.bf16.msra.mxu0 %v2561
        %2600 = vmatprep.subr.bf16.mxu0 0
        %2601 = vmatpush1.bf16.msra.mxu0 %v2562
        %2602 = vmatprep.subr.bf16.mxu0 0
        %2603 = vmatpush1.bf16.msra.mxu0 %v2563
        %2604 = vmatprep.subr.bf16.mxu0 0
        %2605 = vmatpush1.bf16.msra.mxu0 %v2564
        %2606 = vmatprep.subr.bf16.mxu0 0
        %2607 = vmatpush1.bf16.msra.mxu0 %v2565
        %2608 = vmatprep.subr.bf16.mxu0 0
        %2609 = vmatpush1.bf16.msra.mxu0 %v2566
        %2610 = vmatprep.subr.bf16.mxu0 0
        %2611 = vmatpush1.bf16.msra.mxu0 %v2567
        %2612 = vmatprep.subr.bf16.mxu0 0
        %2613 = vmatpush1.bf16.msra.mxu0 %v2568
        %2614 = vmatprep.subr.bf16.mxu0 0
        %2615 = vmatpush1.bf16.msra.mxu0 %v2569
        %2616 = vmatprep.subr.bf16.mxu0 0
        %2617 = vmatpush1.bf16.msra.mxu0 %v2570
        %2618 = vmatprep.subr.bf16.mxu0 0
        %2619 = vmatpush1.bf16.msra.mxu0 %v2571
        %2620 = vmatprep.mubr.bf16.mxu0 %v2484
        %2621 = vmatmul.mubr.bf16.gmra.mrb[0].mxu0 %v2483
        %v2622 = vpop.f32.mrb[0].mxu0
        %v2623 = vadd.f32 %v2490, %v2622
        %v2624 = vpop.f32.mrb[0].mxu0
        %v2625 = vpop.f32.mrb[0].mxu0
        %v2626 = vadd.f32 %v2490, %v2625
        %v2627 = vpop.f32.mrb[0].mxu0
        %2628 = vdwg.mxu0
        %v2629 = vmul.f32 %v2623, 0.5
        %v2630 = vmul.f32 %v2626, 0.5
        %v2631 = vadd.f32 %v2232, %v2629
        %v2632 = vadd.f32 %v2233, %v2630
        %v2633 = vld [vmem:[%s1708] sm:$0x1]
        %v2634 = vld [vmem:[%s1716] sm:$0x1]
        %2635 = vadd.xlane.f32.xlu0 %v2631
        %v2636 = vpop.xlane.xlu0 %2635
        %2637 = vadd.xlane.f32.xlu0 %v2632
        %v2638 = vpop.xlane.xlu0 %2637
        %v2639 = vmul.f32 %v2636, %v2240
        %v2640 = vmul.f32 %v2638, %v2240
        %v2641 = vsub.f32 %v2631, %v2639
        %v2642 = vsub.f32 %v2632, %v2640
        %v2643 = vmul.f32 %v2641, %v2641
        %v2644 = vmul.f32 %v2642, %v2642
        %2645 = vadd.xlane.f32.xlu0 %v2643
        %v2646 = vpop.xlane.xlu0 %2645
        %2647 = vadd.xlane.f32.xlu0 %v2644
        %v2648 = vpop.xlane.xlu0 %2647
        %v2649 = vmul.f32 %v2646, %v2240
        %v2650 = vmul.f32 %v2648, %v2240
        %v2651 = vadd.f32 %v2649, 1e-05
        %v2652 = vadd.f32 %v2650, 1e-05
        %v2653 = vrsqrt.pop %v2651
        %v2654 = vrsqrt.pop %v2652
        %v2655 = vmul.f32 %v2641, %v2653
        %v2656 = vmul.f32 %v2642, %v2654
        %v2658 = vlaneseq
        %v2659 = vshrl.u32 %v2658, 7
        %v2660 = vsub.s32 0, %v2659
        %v2661 = vrot.slane %v2633, %v2660
        %v2663 = vmul.f32 %v2655, %v2661
        %v2664 = vmul.f32 %v2656, %v2661
        %v2666 = vlaneseq
        %v2667 = vshrl.u32 %v2666, 7
        %v2668 = vsub.s32 0, %v2667
        %v2669 = vrot.slane %v2634, %v2668
        %v2671 = vadd.f32 %v2663, %v2669
        %v2672 = vadd.f32 %v2664, %v2669
        %v2673 = vld [vmem:[%s1725] sm:$0xff]
        %v2674 = vld [vmem:[%s1725 + $0x8] sm:$0xf]
        %v2675 = vld [vmem:[%s1725 + $0xc] sm:$0xff]
        %v2676 = vld [vmem:[%s1725 + $0x14] sm:$0xf]
        %v2677 = vld [vmem:[%s1725 + $0x18] sm:$0xff]
        %v2678 = vld [vmem:[%s1725 + $0x20] sm:$0xf]
        %v2679 = vld [vmem:[%s1725 + $0x24] sm:$0xff]
        %v2680 = vld [vmem:[%s1725 + $0x2c] sm:$0xf]
        %v2681 = vld [vmem:[%s1725 + $0x30] sm:$0xff]
        %v2682 = vld [vmem:[%s1725 + $0x38] sm:$0xf]
        %v2683 = vld [vmem:[%s1725 + $0x3c] sm:$0xff]
        %v2684 = vld [vmem:[%s1725 + $0x44] sm:$0xf]
        %v2685 = vld [vmem:[%s1725 + $0x48] sm:$0xff]
        %v2686 = vld [vmem:[%s1725 + $0x50] sm:$0xf]
        %v2687 = vld [vmem:[%s1725 + $0x54] sm:$0xff]
        %v2688 = vld [vmem:[%s1725 + $0x5c] sm:$0xf]
        %v2689 = vld [vmem:[%s1725 + $0x60] sm:$0xff]
        %v2690 = vld [vmem:[%s1725 + $0x68] sm:$0xf]
        %v2691 = vld [vmem:[%s1725 + $0x6c] sm:$0xff]
        %v2692 = vld [vmem:[%s1725 + $0x74] sm:$0xf]
        %v2693 = vld [vmem:[%s1725 + $0x78] sm:$0xff]
        %v2694 = vld [vmem:[%s1725 + $0x80] sm:$0xf]
        %v2695 = vld [vmem:[%s1725 + $0x84] sm:$0xff]
        %v2696 = vld [vmem:[%s1725 + $0x8c] sm:$0xf]
        %v2697 = vld [vmem:[%s1725 + $0x90] sm:$0xff]
        %v2698 = vld [vmem:[%s1725 + $0x98] sm:$0xf]
        %v2699 = vld [vmem:[%s1725 + $0x9c] sm:$0xff]
        %v2700 = vld [vmem:[%s1725 + $0xa4] sm:$0xf]
        %v2701 = vld [vmem:[%s1725 + $0xa8] sm:$0xff]
        %v2702 = vld [vmem:[%s1725 + $0xb0] sm:$0xf]
        %v2703 = vld [vmem:[%s1725 + $0xb4] sm:$0xff]
        %v2704 = vld [vmem:[%s1725 + $0xbc] sm:$0xf]
        %v2705 = vpack.c.bf16 %v2672, %v2671
        %v2706 = vld [vmem:[%s1734] sm:$0x7]
        %v2708 = vlaneseq
        %v2709 = vshrl.u32 %v2708, 7
        %v2710 = vsub.s32 0, %v2709
        %v2711 = vrot.slane %v2706, %v2710
        %v2712 = vlaneseq
        %v2713 = vshrl.u32 %v2712, 7
        %v2714 = vsub.s32 1, %v2713
        %v2715 = vrot.slane %v2706, %v2714
        %v2716 = vlaneseq
        %v2717 = vshrl.u32 %v2716, 7
        %v2718 = vsub.s32 2, %v2717
        %v2719 = vrot.slane %v2706, %v2718
        %v2755 = vunpack.c.l.b16 %v2673
        %v2756 = vunpack.c.h.b16 %v2673
        %v2757 = vunpack.c.l.b16 %v2674
        %v2758 = vunpack.c.l.b16 %v2675
        %v2759 = vunpack.c.h.b16 %v2675
        %v2760 = vunpack.c.l.b16 %v2676
        %v2761 = vunpack.c.l.b16 %v2677
        %v2762 = vunpack.c.h.b16 %v2677
        %v2763 = vunpack.c.l.b16 %v2678
        %v2764 = vunpack.c.l.b16 %v2679
        %v2765 = vunpack.c.h.b16 %v2679
        %v2766 = vunpack.c.l.b16 %v2680
        %v2767 = vunpack.c.l.b16 %v2681
        %v2768 = vunpack.c.h.b16 %v2681
        %v2769 = vunpack.c.l.b16 %v2682
        %v2770 = vunpack.c.l.b16 %v2683
        %v2771 = vunpack.c.h.b16 %v2683
        %v2772 = vunpack.c.l.b16 %v2684
        %v2773 = vunpack.c.l.b16 %v2685
        %v2774 = vunpack.c.h.b16 %v2685
        %v2775 = vunpack.c.l.b16 %v2686
        %v2776 = vunpack.c.l.b16 %v2687
        %v2777 = vunpack.c.h.b16 %v2687
        %v2778 = vunpack.c.l.b16 %v2688
        %v2779 = vunpack.c.l.b16 %v2689
        %v2780 = vunpack.c.h.b16 %v2689
        %v2781 = vunpack.c.l.b16 %v2690
        %v2782 = vunpack.c.l.b16 %v2691
        %v2783 = vunpack.c.h.b16 %v2691
        %v2784 = vunpack.c.l.b16 %v2692
        %v2785 = vunpack.c.l.b16 %v2693
        %v2786 = vunpack.c.h.b16 %v2693
        %v2787 = vunpack.c.l.b16 %v2694
        %v2788 = vunpack.c.l.b16 %v2695
        %v2789 = vunpack.c.h.b16 %v2695
        %v2790 = vunpack.c.l.b16 %v2696
        %v2791 = vunpack.c.l.b16 %v2697
        %v2792 = vunpack.c.h.b16 %v2697
        %v2793 = vunpack.c.l.b16 %v2698
        %v2794 = vunpack.c.l.b16 %v2699
        %v2795 = vunpack.c.h.b16 %v2699
        %v2796 = vunpack.c.l.b16 %v2700
        %v2797 = vunpack.c.l.b16 %v2701
        %v2798 = vunpack.c.h.b16 %v2701
        %v2799 = vunpack.c.l.b16 %v2702
        %v2800 = vunpack.c.l.b16 %v2703
        %v2801 = vunpack.c.h.b16 %v2703
        %v2802 = vunpack.c.l.b16 %v2704
        %v2803 = vpack.c.b16 %v2758, %v2755
        %v2804 = vpack.c.b16 %v2759, %v2756
        %v2805 = vpack.c.b16 %v2760, %v2757
        %v2806 = vpack.c.b16 %v2764, %v2761
        %v2807 = vpack.c.b16 %v2765, %v2762
        %v2808 = vpack.c.b16 %v2766, %v2763
        %v2809 = vpack.c.b16 %v2770, %v2767
        %v2810 = vpack.c.b16 %v2771, %v2768
        %v2811 = vpack.c.b16 %v2772, %v2769
        %v2812 = vpack.c.b16 %v2776, %v2773
        %v2813 = vpack.c.b16 %v2777, %v2774
        %v2814 = vpack.c.b16 %v2778, %v2775
        %v2815 = vpack.c.b16 %v2782, %v2779
        %v2816 = vpack.c.b16 %v2783, %v2780
        %v2817 = vpack.c.b16 %v2784, %v2781
        %v2818 = vpack.c.b16 %v2788, %v2785
        %v2819 = vpack.c.b16 %v2789, %v2786
        %v2820 = vpack.c.b16 %v2790, %v2787
        %v2821 = vpack.c.b16 %v2794, %v2791
        %v2822 = vpack.c.b16 %v2795, %v2792
        %v2823 = vpack.c.b16 %v2796, %v2793
        %v2824 = vpack.c.b16 %v2800, %v2797
        %v2825 = vpack.c.b16 %v2801, %v2798
        %v2826 = vpack.c.b16 %v2802, %v2799
        %2851 = vmatprep.subr.bf16.mxu0 %v2804
        %2852 = vmatpush1.bf16.msra.mxu0 %v2803
        %2853 = vmatprep.subr.bf16.mxu0 %v2807
        %2854 = vmatpush1.bf16.msra.mxu0 %v2806
        %2855 = vmatprep.subr.bf16.mxu0 %v2810
        %2856 = vmatpush1.bf16.msra.mxu0 %v2809
        %2857 = vmatprep.subr.bf16.mxu0 %v2813
        %2858 = vmatpush1.bf16.msra.mxu0 %v2812
        %2859 = vmatprep.subr.bf16.mxu0 %v2816
        %2860 = vmatpush1.bf16.msra.mxu0 %v2815
        %2861 = vmatprep.subr.bf16.mxu0 %v2819
        %2862 = vmatpush1.bf16.msra.mxu0 %v2818
        %2863 = vmatprep.subr.bf16.mxu0 %v2822
        %2864 = vmatpush1.bf16.msra.mxu0 %v2821
        %2865 = vmatprep.subr.bf16.mxu0 %v2825
        %2866 = vmatpush1.bf16.msra.mxu0 %v2824
        %2867 = vmatprep.subr.bf16.mxu0 0
        %2868 = vmatpush1.bf16.msra.mxu0 0
        %2869 = vmatprep.subr.bf16.mxu0 0
        %2870 = vmatpush1.bf16.msra.mxu0 0
        %2871 = vmatprep.subr.bf16.mxu0 0
        %2872 = vmatpush1.bf16.msra.mxu0 0
        %2873 = vmatprep.subr.bf16.mxu0 0
        %2874 = vmatpush1.bf16.msra.mxu0 0
        %2875 = vmatprep.subr.bf16.mxu0 0
        %2876 = vmatpush1.bf16.msra.mxu0 0
        %2877 = vmatprep.subr.bf16.mxu0 0
        %2878 = vmatpush1.bf16.msra.mxu0 0
        %2879 = vmatprep.subr.bf16.mxu0 0
        %2880 = vmatpush1.bf16.msra.mxu0 0
        %2881 = vmatprep.subr.bf16.mxu0 0
        %2882 = vmatpush1.bf16.msra.mxu0 0
        %2883 = vmatprep.mubr.bf16.mxu0 0
        %2884 = vmatmul.mubr.bf16.gmra.mrb[0].mxu0 %v2705
        %v2885 = vpop.f32.mrb[0].mxu0
        %v2886 = vadd.f32 %v2711, %v2885
        %v2887 = vpop.f32.mrb[0].mxu0
        %v2888 = vadd.f32 %v2715, %v2887
        %v2889 = vpop.f32.mrb[0].mxu0
        %v2890 = vadd.f32 %v2711, %v2889
        %v2891 = vpop.f32.mrb[0].mxu0
        %v2892 = vadd.f32 %v2715, %v2891
        %2893 = vdwg.mxu0
        %2894 = vmatprep.subr.bf16.mxu0 0
        %2895 = vmatpush1.bf16.msra.mxu0 %v2805
        %2896 = vmatprep.subr.bf16.mxu0 0
        %2897 = vmatpush1.bf16.msra.mxu0 %v2808
        %2898 = vmatprep.subr.bf16.mxu0 0
        %2899 = vmatpush1.bf16.msra.mxu0 %v2811
        %2900 = vmatprep.subr.bf16.mxu0 0
        %2901 = vmatpush1.bf16.msra.mxu0 %v2814
        %2902 = vmatprep.subr.bf16.mxu0 0
        %2903 = vmatpush1.bf16.msra.mxu0 %v2817
        %2904 = vmatprep.subr.bf16.mxu0 0
        %2905 = vmatpush1.bf16.msra.mxu0 %v2820
        %2906 = vmatprep.subr.bf16.mxu0 0
        %2907 = vmatpush1.bf16.msra.mxu0 %v2823
        %2908 = vmatprep.subr.bf16.mxu0 0
        %2909 = vmatpush1.bf16.msra.mxu0 %v2826
        %2910 = vmatprep.subr.bf16.mxu0 0
        %2911 = vmatpush1.bf16.msra.mxu0 0
        %2912 = vmatprep.subr.bf16.mxu0 0
        %2913 = vmatpush1.bf16.msra.mxu0 0
        %2914 = vmatprep.subr.bf16.mxu0 0
        %2915 = vmatpush1.bf16.msra.mxu0 0
        %2916 = vmatprep.subr.bf16.mxu0 0
        %2917 = vmatpush1.bf16.msra.mxu0 0
        %2918 = vmatprep.subr.bf16.mxu0 0
        %2919 = vmatpush1.bf16.msra.mxu0 0
        %2920 = vmatprep.subr.bf16.mxu0 0
        %2921 = vmatpush1.bf16.msra.mxu0 0
        %2922 = vmatprep.subr.bf16.mxu0 0
        %2923 = vmatpush1.bf16.msra.mxu0 0
        %2924 = vmatprep.subr.bf16.mxu0 0
        %2925 = vmatpush1.bf16.msra.mxu0 0
        %2926 = vmatprep.mubr.bf16.mxu0 0
        %2927 = vmatmul.mubr.bf16.gmra.mrb[0].mxu0 %v2705
        %v2928 = vpop.f32.mrb[0].mxu0
        %v2929 = vadd.f32 %v2719, %v2928
        %v2930 = vpop.f32.mrb[0].mxu0
        %v2931 = vpop.f32.mrb[0].mxu0
        %v2932 = vadd.f32 %v2719, %v2931
        %v2933 = vpop.f32.mrb[0].mxu0
        %2934 = vdwg.mxu0
        %v2935 = vmul.f32 %v2886, 0.17677669
        %v2936 = vmul.f32 %v2890, 0.17677669
        %vm2937 = vcmask 261120
        %v2939 = vsel %vm2937, %v2935, 0
        %v2942 = vsel %vm2937, %v2936, 0
        %v2945 = vsel %vm2937, %v2888, 0
        %v2948 = vsel %vm2937, %v2892, 0
        %2950 = vmatprep.subr.mxu0 0.0
        %2951 = vmatpush1.xpose.msra.mxu0 %v2945
        %2952 = vmatprep.subr.mxu0 0.0
        %2953 = vmatpush1.xpose.msra.mxu0 %v2948
        %2954 = vmatprep.subr.mxu0 0.0
        %2955 = vmatpush1.xpose.msra.mxu0 0.0
        %2956 = vmatprep.subr.mxu0 0.0
        %2957 = vmatpush1.xpose.msra.mxu0 0.0
        %2958 = vmatprep.subr.mxu0 0.0
        %2959 = vmatpush1.xpose.msra.mxu0 0.0
        %2960 = vmatprep.subr.mxu0 0.0
        %2961 = vmatpush1.xpose.msra.mxu0 0.0
        %2962 = vmatprep.subr.mxu0 0.0
        %2963 = vmatpush1.xpose.msra.mxu0 0.0
        %2964 = vmatprep.subr.mxu0 0.0
        %2965 = vmatpush1.xpose.msra.mxu0 0.0
        %2966 = vmatprep.subr.mxu0 0.0
        %2967 = vmatpush1.xpose.msra.mxu0 0.0
        %2968 = vmatprep.subr.mxu0 0.0
        %2969 = vmatpush1.xpose.msra.mxu0 0.0
        %2970 = vmatprep.subr.mxu0 0.0
        %2971 = vmatpush1.xpose.msra.mxu0 0.0
        %2972 = vmatprep.subr.mxu0 0.0
        %2973 = vmatpush1.xpose.msra.mxu0 0.0
        %2974 = vmatprep.subr.mxu0 0.0
        %2975 = vmatpush1.xpose.msra.mxu0 0.0
        %2976 = vmatprep.subr.mxu0 0.0
        %2977 = vmatpush1.xpose.msra.mxu0 0.0
        %2978 = vmatprep.subr.mxu0 0.0
        %2979 = vmatpush1.xpose.msra.mxu0 0.0
        %2980 = vmatprep.subr.mxu0 0.0
        %2981 = vmatpush1.xpose.msra.mxu0 0.0
        %2982 = vmatprep.subr.mxu0 0.0
        %2983 = vmatpush1.xpose.msra.mxu0 0.0
        %2984 = vmatprep.subr.mxu0 0.0
        %2985 = vmatpush1.xpose.msra.mxu0 0.0
        %2986 = vmatprep.subr.mxu0 0.0
        %2987 = vmatpush1.xpose.msra.mxu0 0.0
        %2988 = vmatprep.subr.mxu0 0.0
        %2989 = vmatpush1.xpose.msra.mxu0 0.0
        %2990 = vmatprep.subr.mxu0 0.0
        %2991 = vmatpush1.xpose.msra.mxu0 0.0
        %2992 = vmatprep.subr.mxu0 0.0
        %2993 = vmatpush1.xpose.msra.mxu0 0.0
        %2994 = vmatprep.subr.mxu0 0.0
        %2995 = vmatpush1.xpose.msra.mxu0 0.0
        %2996 = vmatprep.subr.mxu0 0.0
        %2997 = vmatpush1.xpose.msra.mxu0 0.0
        %2998 = vmatprep.subr.mxu0 0.0
        %2999 = vmatpush1.xpose.msra.mxu0 0.0
        %3000 = vmatprep.subr.mxu0 0.0
        %3001 = vmatpush1.xpose.msra.mxu0 0.0
        %3002 = vmatprep.subr.mxu0 0.0
        %3003 = vmatpush1.xpose.msra.mxu0 0.0
        %3004 = vmatprep.subr.mxu0 0.0
        %3005 = vmatpush1.xpose.msra.mxu0 0.0
        %3006 = vmatprep.subr.mxu0 0.0
        %3007 = vmatpush1.xpose.msra.mxu0 0.0
        %3008 = vmatprep.subr.mxu0 0.0
        %3009 = vmatpush1.xpose.msra.mxu0 0.0
        %3010 = vmatprep.subr.mxu0 0.0
        %3011 = vmatpush1.xpose.msra.mxu0 0.0
        %3012 = vmatprep.subr.mxu0 0.0
        %3013 = vmatpush1.xpose.msra.mxu0 0.0
        %3014 = vmatprep.mubr.f32.mxu0 0.0
        %3015 = vmatmul.mubr.f32.gmra.mrb[0].mxu0 %v2939
        %v3016 = vpop.f32.mrb[0].mxu0
        %v3017 = vadd.f32 0.0, %v3016
        %v3018 = vpop.f32.mrb[0].mxu0
        %3019 = vmatprep.mubr.f32.mxu0 0.0
        %3020 = vmatmul.mubr.f32.gmra.mrb[0].mxu0 %v2942
        %v3021 = vpop.f32.mrb[0].mxu0
        %v3022 = vadd.f32 0.0, %v3021
        %v3023 = vpop.f32.mrb[0].mxu0
        %3024 = vdwg.mxu0
        %vm3025 = vcmask 130048
        %v3026 = vsel %vm3025, %v3017, -inf
        %3027 = vmax.xlane.f32.xlu0 %v3026
        %v3028 = vpop.xlane.xlu0 %3027
        %v3029 = vsel %vm3025, %v3022, -inf
        %3030 = vmax.xlane.f32.xlu0 %v3029
        %v3031 = vpop.xlane.xlu0 %3030
        %v3032 = vsub.f32 %v3017, %v3028
        %v3033 = vsub.f32 %v3022, %v3031
        %v3034 = vmul.f32 %v3032, 1.442695
        %v3035 = vpow.pop %v3034
        %v3036 = vmul.f32 %v3033, 1.442695
        %v3037 = vpow.pop %v3036
        %v3038 = vsel %vm3025, %v3035, 0.0
        %3039 = vadd.xlane.f32.xlu0 %v3038
        %v3040 = vpop.xlane.xlu0 %3039
        %v3041 = vsel %vm3025, %v3037, 0.0
        %3042 = vadd.xlane.f32.xlu0 %v3041
        %v3043 = vpop.xlane.xlu0 %3042
        %v3044 = vrcp.pop %v3040
        %v3045 = vrcp.pop %v3043
        %v3046 = vmul.f32 %v3035, %v3044
        %v3047 = vmul.f32 %v3037, %v3045
        %v3049 = vsel %vm3025, %v3046, 0
        %v3052 = vsel %vm3025, %v3047, 0
        %3054 = vmatprep.subr.mxu0 0.0
        %3055 = vmatpush1.msra.mxu0 %v2929
        %3056 = vmatprep.subr.mxu0 0.0
        %3057 = vmatpush1.msra.mxu0 %v2932
        %3058 = vmatprep.subr.mxu0 0.0
        %3059 = vmatpush1.msra.mxu0 0.0
        %3060 = vmatprep.subr.mxu0 0.0
        %3061 = vmatpush1.msra.mxu0 0.0
        %3062 = vmatprep.subr.mxu0 0.0
        %3063 = vmatpush1.msra.mxu0 0.0
        %3064 = vmatprep.subr.mxu0 0.0
        %3065 = vmatpush1.msra.mxu0 0.0
        %3066 = vmatprep.subr.mxu0 0.0
        %3067 = vmatpush1.msra.mxu0 0.0
        %3068 = vmatprep.subr.mxu0 0.0
        %3069 = vmatpush1.msra.mxu0 0.0
        %3070 = vmatprep.subr.mxu0 0.0
        %3071 = vmatpush1.msra.mxu0 0.0
        %3072 = vmatprep.subr.mxu0 0.0
        %3073 = vmatpush1.msra.mxu0 0.0
        %3074 = vmatprep.subr.mxu0 0.0
        %3075 = vmatpush1.msra.mxu0 0.0
        %3076 = vmatprep.subr.mxu0 0.0
        %3077 = vmatpush1.msra.mxu0 0.0
        %3078 = vmatprep.subr.mxu0 0.0
        %3079 = vmatpush1.msra.mxu0 0.0
        %3080 = vmatprep.subr.mxu0 0.0
        %3081 = vmatpush1.msra.mxu0 0.0
        %3082 = vmatprep.subr.mxu0 0.0
        %3083 = vmatpush1.msra.mxu0 0.0
        %3084 = vmatprep.subr.mxu0 0.0
        %3085 = vmatpush1.msra.mxu0 0.0
        %3086 = vmatprep.subr.mxu0 0.0
        %3087 = vmatpush1.msra.mxu0 0.0
        %3088 = vmatprep.subr.mxu0 0.0
        %3089 = vmatpush1.msra.mxu0 0.0
        %3090 = vmatprep.subr.mxu0 0.0
        %3091 = vmatpush1.msra.mxu0 0.0
        %3092 = vmatprep.subr.mxu0 0.0
        %3093 = vmatpush1.msra.mxu0 0.0
        %3094 = vmatprep.subr.mxu0 0.0
        %3095 = vmatpush1.msra.mxu0 0.0
        %3096 = vmatprep.subr.mxu0 0.0
        %3097 = vmatpush1.msra.mxu0 0.0
        %3098 = vmatprep.subr.mxu0 0.0
        %3099 = vmatpush1.msra.mxu0 0.0
        %3100 = vmatprep.subr.mxu0 0.0
        %3101 = vmatpush1.msra.mxu0 0.0
        %3102 = vmatprep.subr.mxu0 0.0
        %3103 = vmatpush1.msra.mxu0 0.0
        %3104 = vmatprep.subr.mxu0 0.0
        %3105 = vmatpush1.msra.mxu0 0.0
        %3106 = vmatprep.subr.mxu0 0.0
        %3107 = vmatpush1.msra.mxu0 0.0
        %3108 = vmatprep.subr.mxu0 0.0
        %3109 = vmatpush1.msra.mxu0 0.0
        %3110 = vmatprep.subr.mxu0 0.0
        %3111 = vmatpush1.msra.mxu0 0.0
        %3112 = vmatprep.subr.mxu0 0.0
        %3113 = vmatpush1.msra.mxu0 0.0
        %3114 = vmatprep.subr.mxu0 0.0
        %3115 = vmatpush1.msra.mxu0 0.0
        %3116 = vmatprep.subr.mxu0 0.0
        %3117 = vmatpush1.msra.mxu0 0.0
        %3118 = vmatprep.mubr.f32.mxu0 0.0
        %3119 = vmatmul.mubr.f32.gmra.mrb[0].mxu0 %v3049
        %v3120 = vpop.f32.mrb[0].mxu0
        %v3121 = vadd.f32 0.0, %v3120
        %v3122 = vpop.f32.mrb[0].mxu0
        %3123 = vmatprep.mubr.f32.mxu0 0.0
        %3124 = vmatmul.mubr.f32.gmra.mrb[0].mxu0 %v3052
        %v3125 = vpop.f32.mrb[0].mxu0
        %v3126 = vadd.f32 0.0, %v3125
        %v3127 = vpop.f32.mrb[0].mxu0
        %3128 = vdwg.mxu0
        %3129 = vrot.lane.b32.xlu0 %v2935, 96
        %v3130 = vpop.permute.xlu0 %3129
        %3131 = vrot.lane.b32.xlu0 %v2936, 96
        %v3132 = vpop.permute.xlu0 %3131
        %3133 = vrot.lane.b32.xlu0 %v2888, 96
        %v3134 = vpop.permute.xlu0 %3133
        %3135 = vrot.lane.b32.xlu0 %v2892, 96
        %v3136 = vpop.permute.xlu0 %3135
        %v3137 = vsel %vm2937, %v3130, 0
        %v3139 = vsel %vm2937, %v3132, 0
        %v3141 = vsel %vm2937, %v3134, 0
        %v3143 = vsel %vm2937, %v3136, 0
        %3145 = vmatprep.subr.mxu0 0.0
        %3146 = vmatpush1.xpose.msra.mxu0 %v3141
        %3147 = vmatprep.subr.mxu0 0.0
        %3148 = vmatpush1.xpose.msra.mxu0 %v3143
        %3149 = vmatprep.subr.mxu0 0.0
        %3150 = vmatpush1.xpose.msra.mxu0 0.0
        %3151 = vmatprep.subr.mxu0 0.0
        %3152 = vmatpush1.xpose.msra.mxu0 0.0
        %3153 = vmatprep.subr.mxu0 0.0
        %3154 = vmatpush1.xpose.msra.mxu0 0.0
        %3155 = vmatprep.subr.mxu0 0.0
        %3156 = vmatpush1.xpose.msra.mxu0 0.0
        %3157 = vmatprep.subr.mxu0 0.0
        %3158 = vmatpush1.xpose.msra.mxu0 0.0
        %3159 = vmatprep.subr.mxu0 0.0
        %3160 = vmatpush1.xpose.msra.mxu0 0.0
        %3161 = vmatprep.subr.mxu0 0.0
        %3162 = vmatpush1.xpose.msra.mxu0 0.0
        %3163 = vmatprep.subr.mxu0 0.0
        %3164 = vmatpush1.xpose.msra.mxu0 0.0
        %3165 = vmatprep.subr.mxu0 0.0
        %3166 = vmatpush1.xpose.msra.mxu0 0.0
        %3167 = vmatprep.subr.mxu0 0.0
        %3168 = vmatpush1.xpose.msra.mxu0 0.0
        %3169 = vmatprep.subr.mxu0 0.0
        %3170 = vmatpush1.xpose.msra.mxu0 0.0
        %3171 = vmatprep.subr.mxu0 0.0
        %3172 = vmatpush1.xpose.msra.mxu0 0.0
        %3173 = vmatprep.subr.mxu0 0.0
        %3174 = vmatpush1.xpose.msra.mxu0 0.0
        %3175 = vmatprep.subr.mxu0 0.0
        %3176 = vmatpush1.xpose.msra.mxu0 0.0
        %3177 = vmatprep.subr.mxu0 0.0
        %3178 = vmatpush1.xpose.msra.mxu0 0.0
        %3179 = vmatprep.subr.mxu0 0.0
        %3180 = vmatpush1.xpose.msra.mxu0 0.0
        %3181 = vmatprep.subr.mxu0 0.0
        %3182 = vmatpush1.xpose.msra.mxu0 0.0
        %3183 = vmatprep.subr.mxu0 0.0
        %3184 = vmatpush1.xpose.msra.mxu0 0.0
        %3185 = vmatprep.subr.mxu0 0.0
        %3186 = vmatpush1.xpose.msra.mxu0 0.0
        %3187 = vmatprep.subr.mxu0 0.0
        %3188 = vmatpush1.xpose.msra.mxu0 0.0
        %3189 = vmatprep.subr.mxu0 0.0
        %3190 = vmatpush1.xpose.msra.mxu0 0.0
        %3191 = vmatprep.subr.mxu0 0.0
        %3192 = vmatpush1.xpose.msra.mxu0 0.0
        %3193 = vmatprep.subr.mxu0 0.0
        %3194 = vmatpush1.xpose.msra.mxu0 0.0
        %3195 = vmatprep.subr.mxu0 0.0
        %3196 = vmatpush1.xpose.msra.mxu0 0.0
        %3197 = vmatprep.subr.mxu0 0.0
        %3198 = vmatpush1.xpose.msra.mxu0 0.0
        %3199 = vmatprep.subr.mxu0 0.0
        %3200 = vmatpush1.xpose.msra.mxu0 0.0
        %3201 = vmatprep.subr.mxu0 0.0
        %3202 = vmatpush1.xpose.msra.mxu0 0.0
        %3203 = vmatprep.subr.mxu0 0.0
        %3204 = vmatpush1.xpose.msra.mxu0 0.0
        %3205 = vmatprep.subr.mxu0 0.0
        %3206 = vmatpush1.xpose.msra.mxu0 0.0
        %3207 = vmatprep.subr.mxu0 0.0
        %3208 = vmatpush1.xpose.msra.mxu0 0.0
        %3209 = vmatprep.mubr.f32.mxu0 0.0
        %3210 = vmatmul.mubr.f32.gmra.mrb[0].mxu0 %v3137
        %v3211 = vpop.f32.mrb[0].mxu0
        %v3212 = vadd.f32 0.0, %v3211
        %v3213 = vpop.f32.mrb[0].mxu0
        %3214 = vmatprep.mubr.f32.mxu0 0.0
        %3215 = vmatmul.mubr.f32.gmra.mrb[0].mxu0 %v3139
        %v3216 = vpop.f32.mrb[0].mxu0
        %v3217 = vadd.f32 0.0, %v3216
        %v3218 = vpop.f32.mrb[0].mxu0
        %3219 = vdwg.mxu0
        %v3220 = vsel %vm3025, %v3212, -inf
        %3221 = vmax.xlane.f32.xlu0 %v3220
        %v3222 = vpop.xlane.xlu0 %3221
        %v3223 = vsel %vm3025, %v3217, -inf
        %3224 = vmax.xlane.f32.xlu0 %v3223
        %v3225 = vpop.xlane.xlu0 %3224
        %v3226 = vsub.f32 %v3212, %v3222
        %v3227 = vsub.f32 %v3217, %v3225
        %v3228 = vmul.f32 %v3226, 1.442695
        %v3229 = vpow.pop %v3228
        %v3230 = vmul.f32 %v3227, 1.442695
        %v3231 = vpow.pop %v3230
        %v3232 = vsel %vm3025, %v3229, 0.0
        %3233 = vadd.xlane.f32.xlu0 %v3232
        %v3234 = vpop.xlane.xlu0 %3233
        %v3235 = vsel %vm3025, %v3231, 0.0
        %3236 = vadd.xlane.f32.xlu0 %v3235
        %v3237 = vpop.xlane.xlu0 %3236
        %v3238 = vrcp.pop %v3234
        %v3239 = vrcp.pop %v3237
        %v3240 = vmul.f32 %v3229, %v3238
        %v3241 = vmul.f32 %v3231, %v3239
        %3244 = vrot.lane.b32.xlu0 %v2929, 96
        %v3245 = vpop.permute.xlu0 %3244
        %3246 = vrot.lane.b32.xlu0 %v2932, 96
        %v3247 = vpop.permute.xlu0 %3246
        %v3251 = vsel %vm3025, %v3240, 0
        %v3254 = vsel %vm3025, %v3241, 0
        %3256 = vmatprep.subr.mxu0 0.0
        %3257 = vmatpush1.msra.mxu0 %v3245
        %3258 = vmatprep.subr.mxu0 0.0
        %3259 = vmatpush1.msra.mxu0 %v3247
        %3260 = vmatprep.subr.mxu0 0.0
        %3261 = vmatpush1.msra.mxu0 0.0
        %3262 = vmatprep.subr.mxu0 0.0
        %3263 = vmatpush1.msra.mxu0 0.0
        %3264 = vmatprep.subr.mxu0 0.0
        %3265 = vmatpush1.msra.mxu0 0.0
        %3266 = vmatprep.subr.mxu0 0.0
        %3267 = vmatpush1.msra.mxu0 0.0
        %3268 = vmatprep.subr.mxu0 0.0
        %3269 = vmatpush1.msra.mxu0 0.0
        %3270 = vmatprep.subr.mxu0 0.0
        %3271 = vmatpush1.msra.mxu0 0.0
        %3272 = vmatprep.subr.mxu0 0.0
        %3273 = vmatpush1.msra.mxu0 0.0
        %3274 = vmatprep.subr.mxu0 0.0
        %3275 = vmatpush1.msra.mxu0 0.0
        %3276 = vmatprep.subr.mxu0 0.0
        %3277 = vmatpush1.msra.mxu0 0.0
        %3278 = vmatprep.subr.mxu0 0.0
        %3279 = vmatpush1.msra.mxu0 0.0
        %3280 = vmatprep.subr.mxu0 0.0
        %3281 = vmatpush1.msra.mxu0 0.0
        %3282 = vmatprep.subr.mxu0 0.0
        %3283 = vmatpush1.msra.mxu0 0.0
        %3284 = vmatprep.subr.mxu0 0.0
        %3285 = vmatpush1.msra.mxu0 0.0
        %3286 = vmatprep.subr.mxu0 0.0
        %3287 = vmatpush1.msra.mxu0 0.0
        %3288 = vmatprep.subr.mxu0 0.0
        %3289 = vmatpush1.msra.mxu0 0.0
        %3290 = vmatprep.subr.mxu0 0.0
        %3291 = vmatpush1.msra.mxu0 0.0
        %3292 = vmatprep.subr.mxu0 0.0
        %3293 = vmatpush1.msra.mxu0 0.0
        %3294 = vmatprep.subr.mxu0 0.0
        %3295 = vmatpush1.msra.mxu0 0.0
        %3296 = vmatprep.subr.mxu0 0.0
        %3297 = vmatpush1.msra.mxu0 0.0
        %3298 = vmatprep.subr.mxu0 0.0
        %3299 = vmatpush1.msra.mxu0 0.0
        %3300 = vmatprep.subr.mxu0 0.0
        %3301 = vmatpush1.msra.mxu0 0.0
        %3302 = vmatprep.subr.mxu0 0.0
        %3303 = vmatpush1.msra.mxu0 0.0
        %3304 = vmatprep.subr.mxu0 0.0
        %3305 = vmatpush1.msra.mxu0 0.0
        %3306 = vmatprep.subr.mxu0 0.0
        %3307 = vmatpush1.msra.mxu0 0.0
        %3308 = vmatprep.subr.mxu0 0.0
        %3309 = vmatpush1.msra.mxu0 0.0
        %3310 = vmatprep.subr.mxu0 0.0
        %3311 = vmatpush1.msra.mxu0 0.0
        %3312 = vmatprep.subr.mxu0 0.0
        %3313 = vmatpush1.msra.mxu0 0.0
        %3314 = vmatprep.subr.mxu0 0.0
        %3315 = vmatpush1.msra.mxu0 0.0
        %3316 = vmatprep.subr.mxu0 0.0
        %3317 = vmatpush1.msra.mxu0 0.0
        %3318 = vmatprep.subr.mxu0 0.0
        %3319 = vmatpush1.msra.mxu0 0.0
        %3320 = vmatprep.mubr.f32.mxu0 0.0
        %3321 = vmatmul.mubr.f32.gmra.mrb[0].mxu0 %v3251
        %v3322 = vpop.f32.mrb[0].mxu0
        %v3323 = vadd.f32 0.0, %v3322
        %v3324 = vpop.f32.mrb[0].mxu0
        %3325 = vmatprep.mubr.f32.mxu0 0.0
        %3326 = vmatmul.mubr.f32.gmra.mrb[0].mxu0 %v3254
        %v3327 = vpop.f32.mrb[0].mxu0
        %v3328 = vadd.f32 0.0, %v3327
        %v3329 = vpop.f32.mrb[0].mxu0
        %3330 = vdwg.mxu0
        %3331 = vrot.lane.b32.xlu0 %v2935, 64
        %v3332 = vpop.permute.xlu0 %3331
        %3333 = vrot.lane.b32.xlu0 %v2936, 64
        %v3334 = vpop.permute.xlu0 %3333
        %3335 = vrot.lane.b32.xlu0 %v2888, 64
        %v3336 = vpop.permute.xlu0 %3335
        %3337 = vrot.lane.b32.xlu0 %v2892, 64
        %v3338 = vpop.permute.xlu0 %3337
        %v3339 = vsel %vm2937, %v3332, 0
        %v3341 = vsel %vm2937, %v3334, 0
        %v3343 = vsel %vm2937, %v3336, 0
        %v3345 = vsel %vm2937, %v3338, 0
        %3347 = vmatprep.subr.mxu0 0.0
        %3348 = vmatpush1.xpose.msra.mxu0 %v3343
        %3349 = vmatprep.subr.mxu0 0.0
        %3350 = vmatpush1.xpose.msra.mxu0 %v3345
        %3351 = vmatprep.subr.mxu0 0.0
        %3352 = vmatpush1.xpose.msra.mxu0 0.0
        %3353 = vmatprep.subr.mxu0 0.0
        %3354 = vmatpush1.xpose.msra.mxu0 0.0
        %3355 = vmatprep.subr.mxu0 0.0
        %3356 = vmatpush1.xpose.msra.mxu0 0.0
        %3357 = vmatprep.subr.mxu0 0.0
        %3358 = vmatpush1.xpose.msra.mxu0 0.0
        %3359 = vmatprep.subr.mxu0 0.0
        %3360 = vmatpush1.xpose.msra.mxu0 0.0
        %3361 = vmatprep.subr.mxu0 0.0
        %3362 = vmatpush1.xpose.msra.mxu0 0.0
        %3363 = vmatprep.subr.mxu0 0.0
        %3364 = vmatpush1.xpose.msra.mxu0 0.0
        %3365 = vmatprep.subr.mxu0 0.0
        %3366 = vmatpush1.xpose.msra.mxu0 0.0
        %3367 = vmatprep.subr.mxu0 0.0
        %3368 = vmatpush1.xpose.msra.mxu0 0.0
        %3369 = vmatprep.subr.mxu0 0.0
        %3370 = vmatpush1.xpose.msra.mxu0 0.0
        %3371 = vmatprep.subr.mxu0 0.0
        %3372 = vmatpush1.xpose.msra.mxu0 0.0
        %3373 = vmatprep.subr.mxu0 0.0
        %3374 = vmatpush1.xpose.msra.mxu0 0.0
        %3375 = vmatprep.subr.mxu0 0.0
        %3376 = vmatpush1.xpose.msra.mxu0 0.0
        %3377 = vmatprep.subr.mxu0 0.0
        %3378 = vmatpush1.xpose.msra.mxu0 0.0
        %3379 = vmatprep.subr.mxu0 0.0
        %3380 = vmatpush1.xpose.msra.mxu0 0.0
        %3381 = vmatprep.subr.mxu0 0.0
        %3382 = vmatpush1.xpose.msra.mxu0 0.0
        %3383 = vmatprep.subr.mxu0 0.0
        %3384 = vmatpush1.xpose.msra.mxu0 0.0
        %3385 = vmatprep.subr.mxu0 0.0
        %3386 = vmatpush1.xpose.msra.mxu0 0.0
        %3387 = vmatprep.subr.mxu0 0.0
        %3388 = vmatpush1.xpose.msra.mxu0 0.0
        %3389 = vmatprep.subr.mxu0 0.0
        %3390 = vmatpush1.xpose.msra.mxu0 0.0
        %3391 = vmatprep.subr.mxu0 0.0
        %3392 = vmatpush1.xpose.msra.mxu0 0.0
        %3393 = vmatprep.subr.mxu0 0.0
        %3394 = vmatpush1.xpose.msra.mxu0 0.0
        %3395 = vmatprep.subr.mxu0 0.0
        %3396 = vmatpush1.xpose.msra.mxu0 0.0
        %3397 = vmatprep.subr.mxu0 0.0
        %3398 = vmatpush1.xpose.msra.mxu0 0.0
        %3399 = vmatprep.subr.mxu0 0.0
        %3400 = vmatpush1.xpose.msra.mxu0 0.0
        %3401 = vmatprep.subr.mxu0 0.0
        %3402 = vmatpush1.xpose.msra.mxu0 0.0
        %3403 = vmatprep.subr.mxu0 0.0
        %3404 = vmatpush1.xpose.msra.mxu0 0.0
        %3405 = vmatprep.subr.mxu0 0.0
        %3406 = vmatpush1.xpose.msra.mxu0 0.0
        %3407 = vmatprep.subr.mxu0 0.0
        %3408 = vmatpush1.xpose.msra.mxu0 0.0
        %3409 = vmatprep.subr.mxu0 0.0
        %3410 = vmatpush1.xpose.msra.mxu0 0.0
        %3411 = vmatprep.mubr.f32.mxu0 0.0
        %3412 = vmatmul.mubr.f32.gmra.mrb[0].mxu0 %v3339
        %v3413 = vpop.f32.mrb[0].mxu0
        %v3414 = vadd.f32 0.0, %v3413
        %v3415 = vpop.f32.mrb[0].mxu0
        %3416 = vmatprep.mubr.f32.mxu0 0.0
        %3417 = vmatmul.mubr.f32.gmra.mrb[0].mxu0 %v3341
        %v3418 = vpop.f32.mrb[0].mxu0
        %v3419 = vadd.f32 0.0, %v3418
        %v3420 = vpop.f32.mrb[0].mxu0
        %3421 = vdwg.mxu0
        %v3422 = vsel %vm3025, %v3414, -inf
        %3423 = vmax.xlane.f32.xlu0 %v3422
        %v3424 = vpop.xlane.xlu0 %3423
        %v3425 = vsel %vm3025, %v3419, -inf
        %3426 = vmax.xlane.f32.xlu0 %v3425
        %v3427 = vpop.xlane.xlu0 %3426
        %v3428 = vsub.f32 %v3414, %v3424
        %v3429 = vsub.f32 %v3419, %v3427
        %v3430 = vmul.f32 %v3428, 1.442695
        %v3431 = vpow.pop %v3430
        %v3432 = vmul.f32 %v3429, 1.442695
        %v3433 = vpow.pop %v3432
        %v3434 = vsel %vm3025, %v3431, 0.0
        %3435 = vadd.xlane.f32.xlu0 %v3434
        %v3436 = vpop.xlane.xlu0 %3435
        %v3437 = vsel %vm3025, %v3433, 0.0
        %3438 = vadd.xlane.f32.xlu0 %v3437
        %v3439 = vpop.xlane.xlu0 %3438
        %v3440 = vrcp.pop %v3436
        %v3441 = vrcp.pop %v3439
        %v3442 = vmul.f32 %v3431, %v3440
        %v3443 = vmul.f32 %v3433, %v3441
        %3444 = vrot.lane.b32.xlu0 %v2929, 64
        %v3445 = vpop.permute.xlu0 %3444
        %3446 = vrot.lane.b32.xlu0 %v2932, 64
        %v3447 = vpop.permute.xlu0 %3446
        %v3451 = vsel %vm3025, %v3442, 0
        %v3454 = vsel %vm3025, %v3443, 0
        %3456 = vmatprep.subr.mxu0 0.0
        %3457 = vmatpush1.msra.mxu0 %v3445
        %3458 = vmatprep.subr.mxu0 0.0
        %3459 = vmatpush1.msra.mxu0 %v3447
        %3460 = vmatprep.subr.mxu0 0.0
        %3461 = vmatpush1.msra.mxu0 0.0
        %3462 = vmatprep.subr.mxu0 0.0
        %3463 = vmatpush1.msra.mxu0 0.0
        %3464 = vmatprep.subr.mxu0 0.0
        %3465 = vmatpush1.msra.mxu0 0.0
        %3466 = vmatprep.subr.mxu0 0.0
        %3467 = vmatpush1.msra.mxu0 0.0
        %3468 = vmatprep.subr.mxu0 0.0
        %3469 = vmatpush1.msra.mxu0 0.0
        %3470 = vmatprep.subr.mxu0 0.0
        %3471 = vmatpush1.msra.mxu0 0.0
        %3472 = vmatprep.subr.mxu0 0.0
        %3473 = vmatpush1.msra.mxu0 0.0
        %3474 = vmatprep.subr.mxu0 0.0
        %3475 = vmatpush1.msra.mxu0 0.0
        %3476 = vmatprep.subr.mxu0 0.0
        %3477 = vmatpush1.msra.mxu0 0.0
        %3478 = vmatprep.subr.mxu0 0.0
        %3479 = vmatpush1.msra.mxu0 0.0
        %3480 = vmatprep.subr.mxu0 0.0
        %3481 = vmatpush1.msra.mxu0 0.0
        %3482 = vmatprep.subr.mxu0 0.0
        %3483 = vmatpush1.msra.mxu0 0.0
        %3484 = vmatprep.subr.mxu0 0.0
        %3485 = vmatpush1.msra.mxu0 0.0
        %3486 = vmatprep.subr.mxu0 0.0
        %3487 = vmatpush1.msra.mxu0 0.0
        %3488 = vmatprep.subr.mxu0 0.0
        %3489 = vmatpush1.msra.mxu0 0.0
        %3490 = vmatprep.subr.mxu0 0.0
        %3491 = vmatpush1.msra.mxu0 0.0
        %3492 = vmatprep.subr.mxu0 0.0
        %3493 = vmatpush1.msra.mxu0 0.0
        %3494 = vmatprep.subr.mxu0 0.0
        %3495 = vmatpush1.msra.mxu0 0.0
        %3496 = vmatprep.subr.mxu0 0.0
        %3497 = vmatpush1.msra.mxu0 0.0
        %3498 = vmatprep.subr.mxu0 0.0
        %3499 = vmatpush1.msra.mxu0 0.0
        %3500 = vmatprep.subr.mxu0 0.0
        %3501 = vmatpush1.msra.mxu0 0.0
        %3502 = vmatprep.subr.mxu0 0.0
        %3503 = vmatpush1.msra.mxu0 0.0
        %3504 = vmatprep.subr.mxu0 0.0
        %3505 = vmatpush1.msra.mxu0 0.0
        %3506 = vmatprep.subr.mxu0 0.0
        %3507 = vmatpush1.msra.mxu0 0.0
        %3508 = vmatprep.subr.mxu0 0.0
        %3509 = vmatpush1.msra.mxu0 0.0
        %3510 = vmatprep.subr.mxu0 0.0
        %3511 = vmatpush1.msra.mxu0 0.0
        %3512 = vmatprep.subr.mxu0 0.0
        %3513 = vmatpush1.msra.mxu0 0.0
        %3514 = vmatprep.subr.mxu0 0.0
        %3515 = vmatpush1.msra.mxu0 0.0
        %3516 = vmatprep.subr.mxu0 0.0
        %3517 = vmatpush1.msra.mxu0 0.0
        %3518 = vmatprep.subr.mxu0 0.0
        %3519 = vmatpush1.msra.mxu0 0.0
        %3520 = vmatprep.mubr.f32.mxu0 0.0
        %3521 = vmatmul.mubr.f32.gmra.mrb[0].mxu0 %v3451
        %v3522 = vpop.f32.mrb[0].mxu0
        %v3523 = vadd.f32 0.0, %v3522
        %v3524 = vpop.f32.mrb[0].mxu0
        %3525 = vmatprep.mubr.f32.mxu0 0.0
        %3526 = vmatmul.mubr.f32.gmra.mrb[0].mxu0 %v3454
        %v3527 = vpop.f32.mrb[0].mxu0
        %v3528 = vadd.f32 0.0, %v3527
        %v3529 = vpop.f32.mrb[0].mxu0
        %3530 = vdwg.mxu0
        %3531 = vrot.lane.b32.xlu0 %v2935, 32
        %v3532 = vpop.permute.xlu0 %3531
        %3533 = vrot.lane.b32.xlu0 %v2936, 32
        %v3534 = vpop.permute.xlu0 %3533
        %3535 = vrot.lane.b32.xlu0 %v2888, 32
        %v3536 = vpop.permute.xlu0 %3535
        %3537 = vrot.lane.b32.xlu0 %v2892, 32
        %v3538 = vpop.permute.xlu0 %3537
        %v3539 = vsel %vm2937, %v3532, 0
        %v3541 = vsel %vm2937, %v3534, 0
        %v3543 = vsel %vm2937, %v3536, 0
        %v3545 = vsel %vm2937, %v3538, 0
        %3547 = vmatprep.subr.mxu0 0.0
        %3548 = vmatpush1.xpose.msra.mxu0 %v3543
        %3549 = vmatprep.subr.mxu0 0.0
        %3550 = vmatpush1.xpose.msra.mxu0 %v3545
        %3551 = vmatprep.subr.mxu0 0.0
        %3552 = vmatpush1.xpose.msra.mxu0 0.0
        %3553 = vmatprep.subr.mxu0 0.0
        %3554 = vmatpush1.xpose.msra.mxu0 0.0
        %3555 = vmatprep.subr.mxu0 0.0
        %3556 = vmatpush1.xpose.msra.mxu0 0.0
        %3557 = vmatprep.subr.mxu0 0.0
        %3558 = vmatpush1.xpose.msra.mxu0 0.0
        %3559 = vmatprep.subr.mxu0 0.0
        %3560 = vmatpush1.xpose.msra.mxu0 0.0
        %3561 = vmatprep.subr.mxu0 0.0
        %3562 = vmatpush1.xpose.msra.mxu0 0.0
        %3563 = vmatprep.subr.mxu0 0.0
        %3564 = vmatpush1.xpose.msra.mxu0 0.0
        %3565 = vmatprep.subr.mxu0 0.0
        %3566 = vmatpush1.xpose.msra.mxu0 0.0
        %3567 = vmatprep.subr.mxu0 0.0
        %3568 = vmatpush1.xpose.msra.mxu0 0.0
        %3569 = vmatprep.subr.mxu0 0.0
        %3570 = vmatpush1.xpose.msra.mxu0 0.0
        %3571 = vmatprep.subr.mxu0 0.0
        %3572 = vmatpush1.xpose.msra.mxu0 0.0
        %3573 = vmatprep.subr.mxu0 0.0
        %3574 = vmatpush1.xpose.msra.mxu0 0.0
        %3575 = vmatprep.subr.mxu0 0.0
        %3576 = vmatpush1.xpose.msra.mxu0 0.0
        %3577 = vmatprep.subr.mxu0 0.0
        %3578 = vmatpush1.xpose.msra.mxu0 0.0
        %3579 = vmatprep.subr.mxu0 0.0
        %3580 = vmatpush1.xpose.msra.mxu0 0.0
        %3581 = vmatprep.subr.mxu0 0.0
        %3582 = vmatpush1.xpose.msra.mxu0 0.0
        %3583 = vmatprep.subr.mxu0 0.0
        %3584 = vmatpush1.xpose.msra.mxu0 0.0
        %3585 = vmatprep.subr.mxu0 0.0
        %3586 = vmatpush1.xpose.msra.mxu0 0.0
        %3587 = vmatprep.subr.mxu0 0.0
        %3588 = vmatpush1.xpose.msra.mxu0 0.0
        %3589 = vmatprep.subr.mxu0 0.0
        %3590 = vmatpush1.xpose.msra.mxu0 0.0
        %3591 = vmatprep.subr.mxu0 0.0
        %3592 = vmatpush1.xpose.msra.mxu0 0.0
        %3593 = vmatprep.subr.mxu0 0.0
        %3594 = vmatpush1.xpose.msra.mxu0 0.0
        %3595 = vmatprep.subr.mxu0 0.0
        %3596 = vmatpush1.xpose.msra.mxu0 0.0
        %3597 = vmatprep.subr.mxu0 0.0
        %3598 = vmatpush1.xpose.msra.mxu0 0.0
        %3599 = vmatprep.subr.mxu0 0.0
        %3600 = vmatpush1.xpose.msra.mxu0 0.0
        %3601 = vmatprep.subr.mxu0 0.0
        %3602 = vmatpush1.xpose.msra.mxu0 0.0
        %3603 = vmatprep.subr.mxu0 0.0
        %3604 = vmatpush1.xpose.msra.mxu0 0.0
        %3605 = vmatprep.subr.mxu0 0.0
        %3606 = vmatpush1.xpose.msra.mxu0 0.0
        %3607 = vmatprep.subr.mxu0 0.0
        %3608 = vmatpush1.xpose.msra.mxu0 0.0
        %3609 = vmatprep.subr.mxu0 0.0
        %3610 = vmatpush1.xpose.msra.mxu0 0.0
        %3611 = vmatprep.mubr.f32.mxu0 0.0
        %3612 = vmatmul.mubr.f32.gmra.mrb[0].mxu0 %v3539
        %v3613 = vpop.f32.mrb[0].mxu0
        %v3614 = vadd.f32 0.0, %v3613
        %v3615 = vpop.f32.mrb[0].mxu0
        %3616 = vmatprep.mubr.f32.mxu0 0.0
        %3617 = vmatmul.mubr.f32.gmra.mrb[0].mxu0 %v3541
        %v3618 = vpop.f32.mrb[0].mxu0
        %v3619 = vadd.f32 0.0, %v3618
        %v3620 = vpop.f32.mrb[0].mxu0
        %3621 = vdwg.mxu0
        %v3622 = vsel %vm3025, %v3614, -inf
        %3623 = vmax.xlane.f32.xlu0 %v3622
        %v3624 = vpop.xlane.xlu0 %3623
        %v3625 = vsel %vm3025, %v3619, -inf
        %3626 = vmax.xlane.f32.xlu0 %v3625
        %v3627 = vpop.xlane.xlu0 %3626
        %v3628 = vsub.f32 %v3614, %v3624
        %v3629 = vsub.f32 %v3619, %v3627
        %v3630 = vmul.f32 %v3628, 1.442695
        %v3631 = vpow.pop %v3630
        %v3632 = vmul.f32 %v3629, 1.442695
        %v3633 = vpow.pop %v3632
        %v3634 = vsel %vm3025, %v3631, 0.0
        %3635 = vadd.xlane.f32.xlu0 %v3634
        %v3636 = vpop.xlane.xlu0 %3635
        %v3637 = vsel %vm3025, %v3633, 0.0
        %3638 = vadd.xlane.f32.xlu0 %v3637
        %v3639 = vpop.xlane.xlu0 %3638
        %v3640 = vrcp.pop %v3636
        %v3641 = vrcp.pop %v3639
        %v3642 = vmul.f32 %v3631, %v3640
        %v3643 = vmul.f32 %v3633, %v3641
        %3644 = vrot.lane.b32.xlu0 %v2929, 32
        %v3645 = vpop.permute.xlu0 %3644
        %3646 = vrot.lane.b32.xlu0 %v2932, 32
        %v3647 = vpop.permute.xlu0 %3646
        %v3651 = vsel %vm3025, %v3642, 0
        %v3654 = vsel %vm3025, %v3643, 0
        %3656 = vmatprep.subr.mxu0 0.0
        %3657 = vmatpush1.msra.mxu0 %v3645
        %3658 = vmatprep.subr.mxu0 0.0
        %3659 = vmatpush1.msra.mxu0 %v3647
        %3660 = vmatprep.subr.mxu0 0.0
        %3661 = vmatpush1.msra.mxu0 0.0
        %3662 = vmatprep.subr.mxu0 0.0
        %3663 = vmatpush1.msra.mxu0 0.0
        %3664 = vmatprep.subr.mxu0 0.0
        %3665 = vmatpush1.msra.mxu0 0.0
        %3666 = vmatprep.subr.mxu0 0.0
        %3667 = vmatpush1.msra.mxu0 0.0
        %3668 = vmatprep.subr.mxu0 0.0
        %3669 = vmatpush1.msra.mxu0 0.0
        %3670 = vmatprep.subr.mxu0 0.0
        %3671 = vmatpush1.msra.mxu0 0.0
        %3672 = vmatprep.subr.mxu0 0.0
        %3673 = vmatpush1.msra.mxu0 0.0
        %3674 = vmatprep.subr.mxu0 0.0
        %3675 = vmatpush1.msra.mxu0 0.0
        %3676 = vmatprep.subr.mxu0 0.0
        %3677 = vmatpush1.msra.mxu0 0.0
        %3678 = vmatprep.subr.mxu0 0.0
        %3679 = vmatpush1.msra.mxu0 0.0
        %3680 = vmatprep.subr.mxu0 0.0
        %3681 = vmatpush1.msra.mxu0 0.0
        %3682 = vmatprep.subr.mxu0 0.0
        %3683 = vmatpush1.msra.mxu0 0.0
        %3684 = vmatprep.subr.mxu0 0.0
        %3685 = vmatpush1.msra.mxu0 0.0
        %3686 = vmatprep.subr.mxu0 0.0
        %3687 = vmatpush1.msra.mxu0 0.0
        %3688 = vmatprep.subr.mxu0 0.0
        %3689 = vmatpush1.msra.mxu0 0.0
        %3690 = vmatprep.subr.mxu0 0.0
        %3691 = vmatpush1.msra.mxu0 0.0
        %3692 = vmatprep.subr.mxu0 0.0
        %3693 = vmatpush1.msra.mxu0 0.0
        %3694 = vmatprep.subr.mxu0 0.0
        %3695 = vmatpush1.msra.mxu0 0.0
        %3696 = vmatprep.subr.mxu0 0.0
        %3697 = vmatpush1.msra.mxu0 0.0
        %3698 = vmatprep.subr.mxu0 0.0
        %3699 = vmatpush1.msra.mxu0 0.0
        %3700 = vmatprep.subr.mxu0 0.0
        %3701 = vmatpush1.msra.mxu0 0.0
        %3702 = vmatprep.subr.mxu0 0.0
        %3703 = vmatpush1.msra.mxu0 0.0
        %3704 = vmatprep.subr.mxu0 0.0
        %3705 = vmatpush1.msra.mxu0 0.0
        %3706 = vmatprep.subr.mxu0 0.0
        %3707 = vmatpush1.msra.mxu0 0.0
        %3708 = vmatprep.subr.mxu0 0.0
        %3709 = vmatpush1.msra.mxu0 0.0
        %3710 = vmatprep.subr.mxu0 0.0
        %3711 = vmatpush1.msra.mxu0 0.0
        %3712 = vmatprep.subr.mxu0 0.0
        %3713 = vmatpush1.msra.mxu0 0.0
        %3714 = vmatprep.subr.mxu0 0.0
        %3715 = vmatpush1.msra.mxu0 0.0
        %3716 = vmatprep.subr.mxu0 0.0
        %3717 = vmatpush1.msra.mxu0 0.0
        %3718 = vmatprep.subr.mxu0 0.0
        %3719 = vmatpush1.msra.mxu0 0.0
        %3720 = vmatprep.mubr.f32.mxu0 0.0
        %3721 = vmatmul.mubr.f32.gmra.mrb[0].mxu0 %v3651
        %v3722 = vpop.f32.mrb[0].mxu0
        %v3723 = vadd.f32 0.0, %v3722
        %v3724 = vpop.f32.mrb[0].mxu0
        %3725 = vmatprep.mubr.f32.mxu0 0.0
        %3726 = vmatmul.mubr.f32.gmra.mrb[0].mxu0 %v3654
        %v3727 = vpop.f32.mrb[0].mxu0
        %v3728 = vadd.f32 0.0, %v3727
        %v3729 = vpop.f32.mrb[0].mxu0
        %3730 = vdwg.mxu0
        %3733 = vrot.lane.b32.xlu0 %v3323, 32
        %v3734 = vpop.permute.xlu0 %3733
        %3735 = vrot.lane.b32.xlu0 %v3328, 32
        %v3736 = vpop.permute.xlu0 %3735
        %3741 = vrot.lane.b32.xlu0 %v3523, 64
        %v3742 = vpop.permute.xlu0 %3741
        %3743 = vrot.lane.b32.xlu0 %v3528, 64
        %v3744 = vpop.permute.xlu0 %3743
        %3749 = vrot.lane.b32.xlu0 %v3723, 96
        %v3750 = vpop.permute.xlu0 %3749
        %3751 = vrot.lane.b32.xlu0 %v3728, 96
        %v3752 = vpop.permute.xlu0 %3751
        %v3755 = vsel %vm2937, %v3121, %v3734
        %v3756 = vsel %vm2937, %v3126, %v3736
        %vm3757 = vcmask 523264
        %v3758 = vsel %vm3757, %v3755, %v3742
        %v3759 = vsel %vm3757, %v3756, %v3744
        %vm3760 = vcmask 785408
        %v3761 = vsel %vm3760, %v3758, %v3750
        %v3762 = vsel %vm3760, %v3759, %v3752
        %v3763 = vld [vmem:[%s1743] sm:$0xf]
        %v3764 = vld [vmem:[%s1743 + $0x4] sm:$0xf]
        %v3765 = vld [vmem:[%s1743 + $0x8] sm:$0xf]
        %v3766 = vld [vmem:[%s1743 + $0xc] sm:$0xf]
        %v3767 = vld [vmem:[%s1743 + $0x10] sm:$0xf]
        %v3768 = vld [vmem:[%s1743 + $0x14] sm:$0xf]
        %v3769 = vld [vmem:[%s1743 + $0x18] sm:$0xf]
        %v3770 = vld [vmem:[%s1743 + $0x1c] sm:$0xf]
        %v3771 = vld [vmem:[%s1743 + $0x20] sm:$0xf]
        %v3772 = vld [vmem:[%s1743 + $0x24] sm:$0xf]
        %v3773 = vld [vmem:[%s1743 + $0x28] sm:$0xf]
        %v3774 = vld [vmem:[%s1743 + $0x2c] sm:$0xf]
        %v3775 = vld [vmem:[%s1743 + $0x30] sm:$0xf]
        %v3776 = vld [vmem:[%s1743 + $0x34] sm:$0xf]
        %v3777 = vld [vmem:[%s1743 + $0x38] sm:$0xf]
        %v3778 = vld [vmem:[%s1743 + $0x3c] sm:$0xf]
        %v3779 = vpack.c.bf16 %v3762, %v3761
        %v3796 = vunpack.c.l.b16 %v3763
        %v3797 = vunpack.c.l.b16 %v3764
        %v3798 = vunpack.c.l.b16 %v3765
        %v3799 = vunpack.c.l.b16 %v3766
        %v3800 = vunpack.c.l.b16 %v3767
        %v3801 = vunpack.c.l.b16 %v3768
        %v3802 = vunpack.c.l.b16 %v3769
        %v3803 = vunpack.c.l.b16 %v3770
        %v3804 = vunpack.c.l.b16 %v3771
        %v3805 = vunpack.c.l.b16 %v3772
        %v3806 = vunpack.c.l.b16 %v3773
        %v3807 = vunpack.c.l.b16 %v3774
        %v3808 = vunpack.c.l.b16 %v3775
        %v3809 = vunpack.c.l.b16 %v3776
        %v3810 = vunpack.c.l.b16 %v3777
        %v3811 = vunpack.c.l.b16 %v3778
        %v3812 = vpack.c.b16 %v3797, %v3796
        %v3813 = vpack.c.b16 %v3799, %v3798
        %v3814 = vpack.c.b16 %v3801, %v3800
        %v3815 = vpack.c.b16 %v3803, %v3802
        %v3816 = vpack.c.b16 %v3805, %v3804
        %v3817 = vpack.c.b16 %v3807, %v3806
        %v3818 = vpack.c.b16 %v3809, %v3808
        %v3819 = vpack.c.b16 %v3811, %v3810
        %3828 = vmatprep.subr.bf16.mxu0 0
        %3829 = vmatpush1.bf16.msra.mxu0 %v3812
        %3830 = vmatprep.subr.bf16.mxu0 0
        %3831 = vmatpush1.bf16.msra.mxu0 %v3813
        %3832 = vmatprep.subr.bf16.mxu0 0
        %3833 = vmatpush1.bf16.msra.mxu0 %v3814
        %3834 = vmatprep.subr.bf16.mxu0 0
        %3835 = vmatpush1.bf16.msra.mxu0 %v3815
        %3836 = vmatprep.subr.bf16.mxu0 0
        %3837 = vmatpush1.bf16.msra.mxu0 %v3816
        %3838 = vmatprep.subr.bf16.mxu0 0
        %3839 = vmatpush1.bf16.msra.mxu0 %v3817
        %3840 = vmatprep.subr.bf16.mxu0 0
        %3841 = vmatpush1.bf16.msra.mxu0 %v3818
        %3842 = vmatprep.subr.bf16.mxu0 0
        %3843 = vmatpush1.bf16.msra.mxu0 %v3819
        %3844 = vmatprep.subr.bf16.mxu0 0
        %3845 = vmatpush1.bf16.msra.mxu0 0
        %3846 = vmatprep.subr.bf16.mxu0 0
        %3847 = vmatpush1.bf16.msra.mxu0 0
        %3848 = vmatprep.subr.bf16.mxu0 0
        %3849 = vmatpush1.bf16.msra.mxu0 0
        %3850 = vmatprep.subr.bf16.mxu0 0
        %3851 = vmatpush1.bf16.msra.mxu0 0
        %3852 = vmatprep.subr.bf16.mxu0 0
        %3853 = vmatpush1.bf16.msra.mxu0 0
        %3854 = vmatprep.subr.bf16.mxu0 0
        %3855 = vmatpush1.bf16.msra.mxu0 0
        %3856 = vmatprep.subr.bf16.mxu0 0
        %3857 = vmatpush1.bf16.msra.mxu0 0
        %3858 = vmatprep.subr.bf16.mxu0 0
        %3859 = vmatpush1.bf16.msra.mxu0 0
        %3860 = vmatprep.mubr.bf16.mxu0 0
        %3861 = vmatmul.mubr.bf16.gmra.mrb[0].mxu0 %v3779
        %v3862 = vpop.f32.mrb[0].mxu0
        %v3863 = vadd.f32 0.0, %v3862
        %v3864 = vpop.f32.mrb[0].mxu0
        %v3865 = vpop.f32.mrb[0].mxu0
        %v3866 = vadd.f32 0.0, %v3865
        %v3867 = vpop.f32.mrb[0].mxu0
        %3868 = vdwg.mxu0
        %v3869 = vadd.f32 %v2631, %v3863
        %v3870 = vadd.f32 %v2632, %v3866
        %v3871 = vld [vmem:[%s1751] sm:$0x1]
        %v3873 = vlaneseq
        %v3874 = vshrl.u32 %v3873, 7
        %v3875 = vsub.s32 0, %v3874
        %v3876 = vrot.slane %v3871, %v3875
        %v3878 = vadd.f32 %v3869, %v3876
        %v3879 = vadd.f32 %v3870, %v3876
        %v3880 = vld [vmem:[%s1759] sm:$0x1]
        %v3881 = vld [vmem:[%s1767] sm:$0x1]
        %3882 = vadd.xlane.f32.xlu0 %v3878
        %v3883 = vpop.xlane.xlu0 %3882
        %3884 = vadd.xlane.f32.xlu0 %v3879
        %v3885 = vpop.xlane.xlu0 %3884
        %v3886 = vmul.f32 %v3883, %v2240
        %v3887 = vmul.f32 %v3885, %v2240
        %v3888 = vsub.f32 %v3878, %v3886
        %v3889 = vsub.f32 %v3879, %v3887
        %v3890 = vmul.f32 %v3888, %v3888
        %v3891 = vmul.f32 %v3889, %v3889
        %3892 = vadd.xlane.f32.xlu0 %v3890
        %v3893 = vpop.xlane.xlu0 %3892
        %3894 = vadd.xlane.f32.xlu0 %v3891
        %v3895 = vpop.xlane.xlu0 %3894
        %v3896 = vmul.f32 %v3893, %v2240
        %v3897 = vmul.f32 %v3895, %v2240
        %v3898 = vadd.f32 %v3896, 1e-05
        %v3899 = vadd.f32 %v3897, 1e-05
        %v3900 = vrsqrt.pop %v3898
        %v3901 = vrsqrt.pop %v3899
        %v3902 = vmul.f32 %v3888, %v3900
        %v3903 = vmul.f32 %v3889, %v3901
        %v3905 = vlaneseq
        %v3906 = vshrl.u32 %v3905, 7
        %v3907 = vsub.s32 0, %v3906
        %v3908 = vrot.slane %v3880, %v3907
        %v3910 = vmul.f32 %v3902, %v3908
        %v3911 = vmul.f32 %v3903, %v3908
        %v3913 = vlaneseq
        %v3914 = vshrl.u32 %v3913, 7
        %v3915 = vsub.s32 0, %v3914
        %v3916 = vrot.slane %v3881, %v3915
        %v3918 = vadd.f32 %v3910, %v3916
        %v3919 = vadd.f32 %v3911, %v3916
        %v3920 = vld [vmem:[%s1776] sm:$0xff]
        %v3921 = vld [vmem:[%s1776 + $0x8] sm:$0xff]
        %v3922 = vld [vmem:[%s1776 + $0x10] sm:$0xff]
        %v3923 = vld [vmem:[%s1776 + $0x18] sm:$0xff]
        %v3924 = vld [vmem:[%s1776 + $0x20] sm:$0xff]
        %v3925 = vld [vmem:[%s1776 + $0x28] sm:$0xff]
        %v3926 = vld [vmem:[%s1776 + $0x30] sm:$0xff]
        %v3927 = vld [vmem:[%s1776 + $0x38] sm:$0xff]
        %v3928 = vld [vmem:[%s1776 + $0x40] sm:$0xff]
        %v3929 = vld [vmem:[%s1776 + $0x48] sm:$0xff]
        %v3930 = vld [vmem:[%s1776 + $0x50] sm:$0xff]
        %v3931 = vld [vmem:[%s1776 + $0x58] sm:$0xff]
        %v3932 = vld [vmem:[%s1776 + $0x60] sm:$0xff]
        %v3933 = vld [vmem:[%s1776 + $0x68] sm:$0xff]
        %v3934 = vld [vmem:[%s1776 + $0x70] sm:$0xff]
        %v3935 = vld [vmem:[%s1776 + $0x78] sm:$0xff]
        %v3936 = vpack.c.bf16 %v3919, %v3918
        %v3937 = vld [vmem:[%s1785] sm:$0x3]
        %v3939 = vlaneseq
        %v3940 = vshrl.u32 %v3939, 7
        %v3941 = vsub.s32 0, %v3940
        %v3942 = vrot.slane %v3937, %v3941
        %v3943 = vlaneseq
        %v3944 = vshrl.u32 %v3943, 7
        %v3945 = vsub.s32 1, %v3944
        %v3946 = vrot.slane %v3937, %v3945
        %v3965 = vunpack.c.l.b16 %v3920
        %v3966 = vunpack.c.h.b16 %v3920
        %v3967 = vunpack.c.l.b16 %v3921
        %v3968 = vunpack.c.h.b16 %v3921
        %v3969 = vunpack.c.l.b16 %v3922
        %v3970 = vunpack.c.h.b16 %v3922
        %v3971 = vunpack.c.l.b16 %v3923
        %v3972 = vunpack.c.h.b16 %v3923
        %v3973 = vunpack.c.l.b16 %v3924
        %v3974 = vunpack.c.h.b16 %v3924
        %v3975 = vunpack.c.l.b16 %v3925
        %v3976 = vunpack.c.h.b16 %v3925
        %v3977 = vunpack.c.l.b16 %v3926
        %v3978 = vunpack.c.h.b16 %v3926
        %v3979 = vunpack.c.l.b16 %v3927
        %v3980 = vunpack.c.h.b16 %v3927
        %v3981 = vunpack.c.l.b16 %v3928
        %v3982 = vunpack.c.h.b16 %v3928
        %v3983 = vunpack.c.l.b16 %v3929
        %v3984 = vunpack.c.h.b16 %v3929
        %v3985 = vunpack.c.l.b16 %v3930
        %v3986 = vunpack.c.h.b16 %v3930
        %v3987 = vunpack.c.l.b16 %v3931
        %v3988 = vunpack.c.h.b16 %v3931
        %v3989 = vunpack.c.l.b16 %v3932
        %v3990 = vunpack.c.h.b16 %v3932
        %v3991 = vunpack.c.l.b16 %v3933
        %v3992 = vunpack.c.h.b16 %v3933
        %v3993 = vunpack.c.l.b16 %v3934
        %v3994 = vunpack.c.h.b16 %v3934
        %v3995 = vunpack.c.l.b16 %v3935
        %v3996 = vunpack.c.h.b16 %v3935
        %v3997 = vpack.c.b16 %v3967, %v3965
        %v3998 = vpack.c.b16 %v3968, %v3966
        %v3999 = vpack.c.b16 %v3971, %v3969
        %v4000 = vpack.c.b16 %v3972, %v3970
        %v4001 = vpack.c.b16 %v3975, %v3973
        %v4002 = vpack.c.b16 %v3976, %v3974
        %v4003 = vpack.c.b16 %v3979, %v3977
        %v4004 = vpack.c.b16 %v3980, %v3978
        %v4005 = vpack.c.b16 %v3983, %v3981
        %v4006 = vpack.c.b16 %v3984, %v3982
        %v4007 = vpack.c.b16 %v3987, %v3985
        %v4008 = vpack.c.b16 %v3988, %v3986
        %v4009 = vpack.c.b16 %v3991, %v3989
        %v4010 = vpack.c.b16 %v3992, %v3990
        %v4011 = vpack.c.b16 %v3995, %v3993
        %v4012 = vpack.c.b16 %v3996, %v3994
        %4029 = vmatprep.subr.bf16.mxu0 %v3998
        %4030 = vmatpush1.bf16.msra.mxu0 %v3997
        %4031 = vmatprep.subr.bf16.mxu0 %v4000
        %4032 = vmatpush1.bf16.msra.mxu0 %v3999
        %4033 = vmatprep.subr.bf16.mxu0 %v4002
        %4034 = vmatpush1.bf16.msra.mxu0 %v4001
        %4035 = vmatprep.subr.bf16.mxu0 %v4004
        %4036 = vmatpush1.bf16.msra.mxu0 %v4003
        %4037 = vmatprep.subr.bf16.mxu0 %v4006
        %4038 = vmatpush1.bf16.msra.mxu0 %v4005
        %4039 = vmatprep.subr.bf16.mxu0 %v4008
        %4040 = vmatpush1.bf16.msra.mxu0 %v4007
        %4041 = vmatprep.subr.bf16.mxu0 %v4010
        %4042 = vmatpush1.bf16.msra.mxu0 %v4009
        %4043 = vmatprep.subr.bf16.mxu0 %v4012
        %4044 = vmatpush1.bf16.msra.mxu0 %v4011
        %4045 = vmatprep.subr.bf16.mxu0 0
        %4046 = vmatpush1.bf16.msra.mxu0 0
        %4047 = vmatprep.subr.bf16.mxu0 0
        %4048 = vmatpush1.bf16.msra.mxu0 0
        %4049 = vmatprep.subr.bf16.mxu0 0
        %4050 = vmatpush1.bf16.msra.mxu0 0
        %4051 = vmatprep.subr.bf16.mxu0 0
        %4052 = vmatpush1.bf16.msra.mxu0 0
        %4053 = vmatprep.subr.bf16.mxu0 0
        %4054 = vmatpush1.bf16.msra.mxu0 0
        %4055 = vmatprep.subr.bf16.mxu0 0
        %4056 = vmatpush1.bf16.msra.mxu0 0
        %4057 = vmatprep.subr.bf16.mxu0 0
        %4058 = vmatpush1.bf16.msra.mxu0 0
        %4059 = vmatprep.subr.bf16.mxu0 0
        %4060 = vmatpush1.bf16.msra.mxu0 0
        %4061 = vmatprep.mubr.bf16.mxu0 0
        %4062 = vmatmul.mubr.bf16.gmra.mrb[0].mxu0 %v3936
        %v4063 = vpop.f32.mrb[0].mxu0
        %v4064 = vadd.f32 %v3942, %v4063
        %v4065 = vpop.f32.mrb[0].mxu0
        %v4066 = vadd.f32 %v3946, %v4065
        %v4067 = vpop.f32.mrb[0].mxu0
        %v4068 = vadd.f32 %v3942, %v4067
        %v4069 = vpop.f32.mrb[0].mxu0
        %v4070 = vadd.f32 %v3946, %v4069
        %4071 = vdwg.mxu0
        %v4072 = vsub.f32 0.0, %v4066
        %v4073 = vsub.f32 0.0, %v4070
        %v4074 = vmul.f32 %v4072, 1.442695
        %v4075 = vpow.pop %v4074
        %v4076 = vmul.f32 %v4073, 1.442695
        %v4077 = vpow.pop %v4076
        %v4078 = vadd.f32 %v4075, 1.0
        %v4079 = vadd.f32 %v4077, 1.0
        %v4080 = vrcp.pop %v4078
        %v4081 = vrcp.pop %v4079
        %v4082 = vmul.f32 %v4064, %v4080
        %v4083 = vmul.f32 %v4068, %v4081
        %v4084 = vlaneseq
        %v4085 = vshrl.u32 %v4084, 7
        %v4086 = vadd.s32 %v4085, 8
        %v4087 = vrot.slane %v4082, 4
        %v4088 = vrot.slane %v4083, 4
        %vm4089 = vcmp.lt.s32.totalorder %v4085, 4
        %v4090 = vsel %vm4089, %v4087, %v4088
        %v4091 = vsel %vm4089, %v4088, %v4087
        %vm4092 = vcmp.ge.s32.totalorder %v4085, 4
        %vm4093 = vcmp.ge.s32.totalorder %v4086, 4
        %vm4094 = vcmp.lt.s32.totalorder %v4085, 20
        %vm4095 = vcmp.lt.s32.totalorder %v4086, 20
        %vm4096 = vmand %vm4092, %vm4094
        %vm4097 = vmand %vm4093, %vm4095
        %v4098 = vsel %vm4096, 1, 0
        %v4099 = vsel %vm4097, 1, 0
        %vm4100 = vcmp.eq.s32.totalorder %v4098, 1
        %vm4101 = vcmp.eq.s32.totalorder %v4099, 1
        %v4102 = vsel %vm4100, %v4091, 0.0
        %v4103 = vsel %vm4101, %v4090, 0.0
        %v4104 = vld [vmem:[%s2128] sm:$0x1]
        %v4106 = vlaneseq
        %v4107 = vshrl.u32 %v4106, 7
        %v4108 = vsub.s32 0, %v4107
        %v4109 = vrot.slane %v4104, %v4108
        %v4111 = vmul.f32 %v4102, %v4109
        %v4112 = vmul.f32 %v4103, %v4109
        %v4113 = vadd.f32 %v4111, 0.0
        %v4114 = vadd.f32 %v4112, 0.0
        %v4115 = vrot.slane %v4082, 5
        %v4116 = vrot.slane %v4083, 5
        %vm4117 = vcmp.lt.s32.totalorder %v4085, 3
        %v4118 = vsel %vm4117, %v4115, %v4116
        %v4119 = vsel %vm4117, %v4116, %v4115
        %vm4120 = vcmp.ge.s32.totalorder %v4085, 3
        %vm4121 = vcmp.ge.s32.totalorder %v4086, 3
        %vm4122 = vcmp.lt.s32.totalorder %v4085, 19
        %vm4123 = vcmp.lt.s32.totalorder %v4086, 19
        %vm4124 = vmand %vm4120, %vm4122
        %vm4125 = vmand %vm4121, %vm4123
        %v4126 = vsel %vm4124, 1, 0
        %v4127 = vsel %vm4125, 1, 0
        %vm4128 = vcmp.eq.s32.totalorder %v4126, 1
        %vm4129 = vcmp.eq.s32.totalorder %v4127, 1
        %v4130 = vsel %vm4128, %v4119, 0.0
        %v4131 = vsel %vm4129, %v4118, 0.0
        %s4132 = scalar_lea.vmem %s2128, 1
        %v4133 = vld [vmem:[%s4132] sm:$0x1]
        %v4135 = vlaneseq
        %v4136 = vshrl.u32 %v4135, 7
        %v4137 = vsub.s32 0, %v4136
        %v4138 = vrot.slane %v4133, %v4137
        %v4140 = vmul.f32 %v4130, %v4138
        %v4141 = vmul.f32 %v4131, %v4138
        %v4142 = vadd.f32 %v4113, %v4140
        %v4143 = vadd.f32 %v4114, %v4141
        %v4144 = vrot.slane %v4082, 6
        %v4145 = vrot.slane %v4083, 6
        %vm4146 = vcmp.lt.s32.totalorder %v4085, 2
        %v4147 = vsel %vm4146, %v4144, %v4145
        %v4148 = vsel %vm4146, %v4145, %v4144
        %vm4149 = vcmp.ge.s32.totalorder %v4085, 2
        %vm4150 = vcmp.ge.s32.totalorder %v4086, 2
        %vm4151 = vcmp.lt.s32.totalorder %v4085, 18
        %vm4152 = vcmp.lt.s32.totalorder %v4086, 18
        %vm4153 = vmand %vm4149, %vm4151
        %vm4154 = vmand %vm4150, %vm4152
        %v4155 = vsel %vm4153, 1, 0
        %v4156 = vsel %vm4154, 1, 0
        %vm4157 = vcmp.eq.s32.totalorder %v4155, 1
        %vm4158 = vcmp.eq.s32.totalorder %v4156, 1
        %v4159 = vsel %vm4157, %v4148, 0.0
        %v4160 = vsel %vm4158, %v4147, 0.0
        %s4161 = scalar_lea.vmem %s2128, 2
        %v4162 = vld [vmem:[%s4161] sm:$0x1]
        %v4164 = vlaneseq
        %v4165 = vshrl.u32 %v4164, 7
        %v4166 = vsub.s32 0, %v4165
        %v4167 = vrot.slane %v4162, %v4166
        %v4169 = vmul.f32 %v4159, %v4167
        %v4170 = vmul.f32 %v4160, %v4167
        %v4171 = vadd.f32 %v4142, %v4169
        %v4172 = vadd.f32 %v4143, %v4170
        %v4173 = vrot.slane %v4082, 7
        %v4174 = vrot.slane %v4083, 7
        %vm4175 = vcmp.lt.s32.totalorder %v4085, 1
        %v4176 = vsel %vm4175, %v4173, %v4174
        %v4177 = vsel %vm4175, %v4174, %v4173
        %vm4178 = vcmp.ge.s32.totalorder %v4085, 1
        %vm4179 = vcmp.ge.s32.totalorder %v4086, 1
        %vm4180 = vcmp.lt.s32.totalorder %v4085, 17
        %vm4181 = vcmp.lt.s32.totalorder %v4086, 17
        %vm4182 = vmand %vm4178, %vm4180
        %vm4183 = vmand %vm4179, %vm4181
        %v4184 = vsel %vm4182, 1, 0
        %v4185 = vsel %vm4183, 1, 0
        %vm4186 = vcmp.eq.s32.totalorder %v4184, 1
        %vm4187 = vcmp.eq.s32.totalorder %v4185, 1
        %v4188 = vsel %vm4186, %v4177, 0.0
        %v4189 = vsel %vm4187, %v4176, 0.0
        %s4190 = scalar_lea.vmem %s2128, 3
        %v4191 = vld [vmem:[%s4190] sm:$0x1]
        %v4193 = vlaneseq
        %v4194 = vshrl.u32 %v4193, 7
        %v4195 = vsub.s32 0, %v4194
        %v4196 = vrot.slane %v4191, %v4195
        %v4198 = vmul.f32 %v4188, %v4196
        %v4199 = vmul.f32 %v4189, %v4196
        %v4200 = vadd.f32 %v4171, %v4198
        %v4201 = vadd.f32 %v4172, %v4199
        %vm4202 = vcmp.ge.s32.totalorder %v4085, 0
        %vm4203 = vcmp.ge.s32.totalorder %v4086, 0
        %vm4204 = vcmp.lt.s32.totalorder %v4085, 16
        %vm4205 = vcmp.lt.s32.totalorder %v4086, 16
        %vm4206 = vmand %vm4202, %vm4204
        %vm4207 = vmand %vm4203, %vm4205
        %v4208 = vsel %vm4206, 1, 0
        %v4209 = vsel %vm4207, 1, 0
        %vm4210 = vcmp.eq.s32.totalorder %v4208, 1
        %vm4211 = vcmp.eq.s32.totalorder %v4209, 1
        %v4212 = vsel %vm4210, %v4082, 0.0
        %v4213 = vsel %vm4211, %v4083, 0.0
        %s4214 = scalar_lea.vmem %s2128, 4
        %v4215 = vld [vmem:[%s4214] sm:$0x1]
        %v4217 = vlaneseq
        %v4218 = vshrl.u32 %v4217, 7
        %v4219 = vsub.s32 0, %v4218
        %v4220 = vrot.slane %v4215, %v4219
        %v4222 = vmul.f32 %v4212, %v4220
        %v4223 = vmul.f32 %v4213, %v4220
        %v4224 = vadd.f32 %v4200, %v4222
        %v4225 = vadd.f32 %v4201, %v4223
        %v4226 = vrot.slane %v4082, 1
        %v4227 = vrot.slane %v4083, 1
        %vm4228 = vcmp.lt.s32.totalorder %v4085, 7
        %v4229 = vsel %vm4228, %v4226, %v4227
        %v4230 = vsel %vm4228, %v4227, %v4226
        %vm4231 = vcmp.ge.s32.totalorder %v4085, 4294967295
        %vm4232 = vcmp.ge.s32.totalorder %v4086, 4294967295
        %vm4233 = vcmp.lt.s32.totalorder %v4085, 15
        %vm4234 = vcmp.lt.s32.totalorder %v4086, 15
        %vm4235 = vmand %vm4231, %vm4233
        %vm4236 = vmand %vm4232, %vm4234
        %v4237 = vsel %vm4235, 1, 0
        %v4238 = vsel %vm4236, 1, 0
        %vm4239 = vcmp.eq.s32.totalorder %v4237, 1
        %vm4240 = vcmp.eq.s32.totalorder %v4238, 1
        %v4241 = vsel %vm4239, %v4229, 0.0
        %v4242 = vsel %vm4240, %v4230, 0.0
        %s4243 = scalar_lea.vmem %s2128, 5
        %v4244 = vld [vmem:[%s4243] sm:$0x1]
        %v4246 = vlaneseq
        %v4247 = vshrl.u32 %v4246, 7
        %v4248 = vsub.s32 0, %v4247
        %v4249 = vrot.slane %v4244, %v4248
        %v4251 = vmul.f32 %v4241, %v4249
        %v4252 = vmul.f32 %v4242, %v4249
        %v4253 = vadd.f32 %v4224, %v4251
        %v4254 = vadd.f32 %v4225, %v4252
        %v4255 = vrot.slane %v4082, 2
        %v4256 = vrot.slane %v4083, 2
        %vm4257 = vcmp.lt.s32.totalorder %v4085, 6
        %v4258 = vsel %vm4257, %v4255, %v4256
        %v4259 = vsel %vm4257, %v4256, %v4255
        %vm4260 = vcmp.ge.s32.totalorder %v4085, 4294967294
        %vm4261 = vcmp.ge.s32.totalorder %v4086, 4294967294
        %vm4262 = vcmp.lt.s32.totalorder %v4085, 14
        %vm4263 = vcmp.lt.s32.totalorder %v4086, 14
        %vm4264 = vmand %vm4260, %vm4262
        %vm4265 = vmand %vm4261, %vm4263
        %v4266 = vsel %vm4264, 1, 0
        %v4267 = vsel %vm4265, 1, 0
        %vm4268 = vcmp.eq.s32.totalorder %v4266, 1
        %vm4269 = vcmp.eq.s32.totalorder %v4267, 1
        %v4270 = vsel %vm4268, %v4258, 0.0
        %v4271 = vsel %vm4269, %v4259, 0.0
        %s4272 = scalar_lea.vmem %s2128, 6
        %v4273 = vld [vmem:[%s4272] sm:$0x1]
        %v4275 = vlaneseq
        %v4276 = vshrl.u32 %v4275, 7
        %v4277 = vsub.s32 0, %v4276
        %v4278 = vrot.slane %v4273, %v4277
        %v4280 = vmul.f32 %v4270, %v4278
        %v4281 = vmul.f32 %v4271, %v4278
        %v4282 = vadd.f32 %v4253, %v4280
        %v4283 = vadd.f32 %v4254, %v4281
        %v4284 = vrot.slane %v4082, 3
        %v4285 = vrot.slane %v4083, 3
        %vm4286 = vcmp.lt.s32.totalorder %v4085, 5
        %v4287 = vsel %vm4286, %v4284, %v4285
        %v4288 = vsel %vm4286, %v4285, %v4284
        %vm4289 = vcmp.ge.s32.totalorder %v4085, 4294967293
        %vm4290 = vcmp.ge.s32.totalorder %v4086, 4294967293
        %vm4291 = vcmp.lt.s32.totalorder %v4085, 13
        %vm4292 = vcmp.lt.s32.totalorder %v4086, 13
        %vm4293 = vmand %vm4289, %vm4291
        %vm4294 = vmand %vm4290, %vm4292
        %v4295 = vsel %vm4293, 1, 0
        %v4296 = vsel %vm4294, 1, 0
        %vm4297 = vcmp.eq.s32.totalorder %v4295, 1
        %vm4298 = vcmp.eq.s32.totalorder %v4296, 1
        %v4299 = vsel %vm4297, %v4287, 0.0
        %v4300 = vsel %vm4298, %v4288, 0.0
        %s4301 = scalar_lea.vmem %s2128, 7
        %v4302 = vld [vmem:[%s4301] sm:$0x1]
        %v4304 = vlaneseq
        %v4305 = vshrl.u32 %v4304, 7
        %v4306 = vsub.s32 0, %v4305
        %v4307 = vrot.slane %v4302, %v4306
        %v4309 = vmul.f32 %v4299, %v4307
        %v4310 = vmul.f32 %v4300, %v4307
        %v4311 = vadd.f32 %v4282, %v4309
        %v4312 = vadd.f32 %v4283, %v4310
        %vm4313 = vcmp.ge.s32.totalorder %v4085, 4294967292
        %vm4314 = vcmp.ge.s32.totalorder %v4086, 4294967292
        %vm4315 = vcmp.lt.s32.totalorder %v4085, 12
        %vm4316 = vcmp.lt.s32.totalorder %v4086, 12
        %vm4317 = vmand %vm4313, %vm4315
        %vm4318 = vmand %vm4314, %vm4316
        %v4319 = vsel %vm4317, 1, 0
        %v4320 = vsel %vm4318, 1, 0
        %vm4321 = vcmp.eq.s32.totalorder %v4319, 1
        %vm4322 = vcmp.eq.s32.totalorder %v4320, 1
        %v4323 = vsel %vm4321, %v4090, 0.0
        %v4324 = vsel %vm4322, %v4091, 0.0
        %s4325 = scalar_lea.vmem %s2128, 8
        %v4326 = vld [vmem:[%s4325] sm:$0x1]
        %v4328 = vlaneseq
        %v4329 = vshrl.u32 %v4328, 7
        %v4330 = vsub.s32 0, %v4329
        %v4331 = vrot.slane %v4326, %v4330
        %v4333 = vmul.f32 %v4323, %v4331
        %v4334 = vmul.f32 %v4324, %v4331
        %v4335 = vadd.f32 %v4311, %v4333
        %v4336 = vadd.f32 %v4312, %v4334
        %v4337 = vld [vmem:[%s1793] sm:$0x1]
        %v4339 = vlaneseq
        %v4340 = vshrl.u32 %v4339, 7
        %v4341 = vsub.s32 0, %v4340
        %v4342 = vrot.slane %v4337, %v4341
        %v4344 = vadd.f32 %v4335, %v4342
        %v4345 = vadd.f32 %v4336, %v4342
        %v4346 = vld [vmem:[%s1801] sm:$0x1]
        %v4348 = vlaneseq
        %v4349 = vshrl.u32 %v4348, 7
        %v4350 = vsub.s32 0, %v4349
        %v4351 = vrot.slane %v4346, %v4350
        %v4353 = vmul.f32 %v4344, %v4351
        %v4354 = vmul.f32 %v4345, %v4351
        %v4355 = vld [vmem:[%s1809] sm:$0x1]
        %v4357 = vlaneseq
        %v4358 = vshrl.u32 %v4357, 7
        %v4359 = vsub.s32 0, %v4358
        %v4360 = vrot.slane %v4355, %v4359
        %v4362 = vadd.f32 %v4353, %v4360
        %v4363 = vadd.f32 %v4354, %v4360
        %v4364 = vsub.f32 0.0, %v4362
        %v4365 = vsub.f32 0.0, %v4363
        %v4366 = vmul.f32 %v4364, 1.442695
        %v4367 = vpow.pop %v4366
        %v4368 = vmul.f32 %v4365, 1.442695
        %v4369 = vpow.pop %v4368
        %v4370 = vadd.f32 %v4367, 1.0
        %v4371 = vadd.f32 %v4369, 1.0
        %v4372 = vrcp.pop %v4370
        %v4373 = vrcp.pop %v4371
        %v4374 = vmul.f32 %v4362, %v4372
        %v4375 = vmul.f32 %v4363, %v4373
        %v4376 = vld [vmem:[%s1818] sm:$0xf]
        %v4377 = vld [vmem:[%s1818 + $0x4] sm:$0xf]
        %v4378 = vld [vmem:[%s1818 + $0x8] sm:$0xf]
        %v4379 = vld [vmem:[%s1818 + $0xc] sm:$0xf]
        %v4380 = vld [vmem:[%s1818 + $0x10] sm:$0xf]
        %v4381 = vld [vmem:[%s1818 + $0x14] sm:$0xf]
        %v4382 = vld [vmem:[%s1818 + $0x18] sm:$0xf]
        %v4383 = vld [vmem:[%s1818 + $0x1c] sm:$0xf]
        %v4384 = vld [vmem:[%s1818 + $0x20] sm:$0xf]
        %v4385 = vld [vmem:[%s1818 + $0x24] sm:$0xf]
        %v4386 = vld [vmem:[%s1818 + $0x28] sm:$0xf]
        %v4387 = vld [vmem:[%s1818 + $0x2c] sm:$0xf]
        %v4388 = vld [vmem:[%s1818 + $0x30] sm:$0xf]
        %v4389 = vld [vmem:[%s1818 + $0x34] sm:$0xf]
        %v4390 = vld [vmem:[%s1818 + $0x38] sm:$0xf]
        %v4391 = vld [vmem:[%s1818 + $0x3c] sm:$0xf]
        %v4392 = vpack.c.bf16 %v4375, %v4374
        %v4409 = vunpack.c.l.b16 %v4376
        %v4410 = vunpack.c.l.b16 %v4377
        %v4411 = vunpack.c.l.b16 %v4378
        %v4412 = vunpack.c.l.b16 %v4379
        %v4413 = vunpack.c.l.b16 %v4380
        %v4414 = vunpack.c.l.b16 %v4381
        %v4415 = vunpack.c.l.b16 %v4382
        %v4416 = vunpack.c.l.b16 %v4383
        %v4417 = vunpack.c.l.b16 %v4384
        %v4418 = vunpack.c.l.b16 %v4385
        %v4419 = vunpack.c.l.b16 %v4386
        %v4420 = vunpack.c.l.b16 %v4387
        %v4421 = vunpack.c.l.b16 %v4388
        %v4422 = vunpack.c.l.b16 %v4389
        %v4423 = vunpack.c.l.b16 %v4390
        %v4424 = vunpack.c.l.b16 %v4391
        %v4425 = vpack.c.b16 %v4410, %v4409
        %v4426 = vpack.c.b16 %v4412, %v4411
        %v4427 = vpack.c.b16 %v4414, %v4413
        %v4428 = vpack.c.b16 %v4416, %v4415
        %v4429 = vpack.c.b16 %v4418, %v4417
        %v4430 = vpack.c.b16 %v4420, %v4419
        %v4431 = vpack.c.b16 %v4422, %v4421
        %v4432 = vpack.c.b16 %v4424, %v4423
        %4441 = vmatprep.subr.bf16.mxu0 0
        %4442 = vmatpush1.bf16.msra.mxu0 %v4425
        %4443 = vmatprep.subr.bf16.mxu0 0
        %4444 = vmatpush1.bf16.msra.mxu0 %v4426
        %4445 = vmatprep.subr.bf16.mxu0 0
        %4446 = vmatpush1.bf16.msra.mxu0 %v4427
        %4447 = vmatprep.subr.bf16.mxu0 0
        %4448 = vmatpush1.bf16.msra.mxu0 %v4428
        %4449 = vmatprep.subr.bf16.mxu0 0
        %4450 = vmatpush1.bf16.msra.mxu0 %v4429
        %4451 = vmatprep.subr.bf16.mxu0 0
        %4452 = vmatpush1.bf16.msra.mxu0 %v4430
        %4453 = vmatprep.subr.bf16.mxu0 0
        %4454 = vmatpush1.bf16.msra.mxu0 %v4431
        %4455 = vmatprep.subr.bf16.mxu0 0
        %4456 = vmatpush1.bf16.msra.mxu0 %v4432
        %4457 = vmatprep.subr.bf16.mxu0 0
        %4458 = vmatpush1.bf16.msra.mxu0 0
        %4459 = vmatprep.subr.bf16.mxu0 0
        %4460 = vmatpush1.bf16.msra.mxu0 0
        %4461 = vmatprep.subr.bf16.mxu0 0
        %4462 = vmatpush1.bf16.msra.mxu0 0
        %4463 = vmatprep.subr.bf16.mxu0 0
        %4464 = vmatpush1.bf16.msra.mxu0 0
        %4465 = vmatprep.subr.bf16.mxu0 0
        %4466 = vmatpush1.bf16.msra.mxu0 0
        %4467 = vmatprep.subr.bf16.mxu0 0
        %4468 = vmatpush1.bf16.msra.mxu0 0
        %4469 = vmatprep.subr.bf16.mxu0 0
        %4470 = vmatpush1.bf16.msra.mxu0 0
        %4471 = vmatprep.subr.bf16.mxu0 0
        %4472 = vmatpush1.bf16.msra.mxu0 0
        %4473 = vmatprep.mubr.bf16.mxu0 0
        %4474 = vmatmul.mubr.bf16.gmra.mrb[0].mxu0 %v4392
        %v4475 = vpop.f32.mrb[0].mxu0
        %v4476 = vadd.f32 0.0, %v4475
        %v4477 = vpop.f32.mrb[0].mxu0
        %v4478 = vpop.f32.mrb[0].mxu0
        %v4479 = vadd.f32 0.0, %v4478
        %v4480 = vpop.f32.mrb[0].mxu0
        %4481 = vdwg.mxu0
        %v4482 = vadd.f32 %v3878, %v4476
        %v4483 = vadd.f32 %v3879, %v4479
        %v4484 = vld [vmem:[%s1826] sm:$0x1]
        %v4486 = vlaneseq
        %v4487 = vshrl.u32 %v4486, 7
        %v4488 = vsub.s32 0, %v4487
        %v4489 = vrot.slane %v4484, %v4488
        %v4491 = vadd.f32 %v4482, %v4489
        %v4492 = vadd.f32 %v4483, %v4489
        %v4493 = vld [vmem:[%s1834] sm:$0x1]
        %v4494 = vld [vmem:[%s1842] sm:$0x1]
        %4495 = vadd.xlane.f32.xlu0 %v4491
        %v4496 = vpop.xlane.xlu0 %4495
        %4497 = vadd.xlane.f32.xlu0 %v4492
        %v4498 = vpop.xlane.xlu0 %4497
        %v4499 = vmul.f32 %v4496, %v2240
        %v4500 = vmul.f32 %v4498, %v2240
        %v4501 = vsub.f32 %v4491, %v4499
        %v4502 = vsub.f32 %v4492, %v4500
        %v4503 = vmul.f32 %v4501, %v4501
        %v4504 = vmul.f32 %v4502, %v4502
        %4505 = vadd.xlane.f32.xlu0 %v4503
        %v4506 = vpop.xlane.xlu0 %4505
        %4507 = vadd.xlane.f32.xlu0 %v4504
        %v4508 = vpop.xlane.xlu0 %4507
        %v4509 = vmul.f32 %v4506, %v2240
        %v4510 = vmul.f32 %v4508, %v2240
        %v4511 = vadd.f32 %v4509, 1e-05
        %v4512 = vadd.f32 %v4510, 1e-05
        %v4513 = vrsqrt.pop %v4511
        %v4514 = vrsqrt.pop %v4512
        %v4515 = vmul.f32 %v4501, %v4513
        %v4516 = vmul.f32 %v4502, %v4514
        %v4518 = vlaneseq
        %v4519 = vshrl.u32 %v4518, 7
        %v4520 = vsub.s32 0, %v4519
        %v4521 = vrot.slane %v4493, %v4520
        %v4523 = vmul.f32 %v4515, %v4521
        %v4524 = vmul.f32 %v4516, %v4521
        %v4526 = vlaneseq
        %v4527 = vshrl.u32 %v4526, 7
        %v4528 = vsub.s32 0, %v4527
        %v4529 = vrot.slane %v4494, %v4528
        %v4531 = vadd.f32 %v4523, %v4529
        %v4532 = vadd.f32 %v4524, %v4529
        %v4533 = vld [vmem:[%s1851] sm:$0xff]
        %v4534 = vld [vmem:[%s1851 + $0x8] sm:$0xff]
        %v4535 = vld [vmem:[%s1851 + $0x10] sm:$0xff]
        %v4536 = vld [vmem:[%s1851 + $0x18] sm:$0xff]
        %v4537 = vld [vmem:[%s1851 + $0x20] sm:$0xff]
        %v4538 = vld [vmem:[%s1851 + $0x28] sm:$0xff]
        %v4539 = vld [vmem:[%s1851 + $0x30] sm:$0xff]
        %v4540 = vld [vmem:[%s1851 + $0x38] sm:$0xff]
        %v4541 = vld [vmem:[%s1851 + $0x40] sm:$0xff]
        %v4542 = vld [vmem:[%s1851 + $0x48] sm:$0xff]
        %v4543 = vld [vmem:[%s1851 + $0x50] sm:$0xff]
        %v4544 = vld [vmem:[%s1851 + $0x58] sm:$0xff]
        %v4545 = vld [vmem:[%s1851 + $0x60] sm:$0xff]
        %v4546 = vld [vmem:[%s1851 + $0x68] sm:$0xff]
        %v4547 = vld [vmem:[%s1851 + $0x70] sm:$0xff]
        %v4548 = vld [vmem:[%s1851 + $0x78] sm:$0xff]
        %v4549 = vpack.c.bf16 %v4532, %v4531
        %v4550 = vld [vmem:[%s1860] sm:$0x3]
        %v4552 = vlaneseq
        %v4553 = vshrl.u32 %v4552, 7
        %v4554 = vsub.s32 0, %v4553
        %v4555 = vrot.slane %v4550, %v4554
        %v4556 = vlaneseq
        %v4557 = vshrl.u32 %v4556, 7
        %v4558 = vsub.s32 1, %v4557
        %v4559 = vrot.slane %v4550, %v4558
        %v4578 = vunpack.c.l.b16 %v4533
        %v4579 = vunpack.c.h.b16 %v4533
        %v4580 = vunpack.c.l.b16 %v4534
        %v4581 = vunpack.c.h.b16 %v4534
        %v4582 = vunpack.c.l.b16 %v4535
        %v4583 = vunpack.c.h.b16 %v4535
        %v4584 = vunpack.c.l.b16 %v4536
        %v4585 = vunpack.c.h.b16 %v4536
        %v4586 = vunpack.c.l.b16 %v4537
        %v4587 = vunpack.c.h.b16 %v4537
        %v4588 = vunpack.c.l.b16 %v4538
        %v4589 = vunpack.c.h.b16 %v4538
        %v4590 = vunpack.c.l.b16 %v4539
        %v4591 = vunpack.c.h.b16 %v4539
        %v4592 = vunpack.c.l.b16 %v4540
        %v4593 = vunpack.c.h.b16 %v4540
        %v4594 = vunpack.c.l.b16 %v4541
        %v4595 = vunpack.c.h.b16 %v4541
        %v4596 = vunpack.c.l.b16 %v4542
        %v4597 = vunpack.c.h.b16 %v4542
        %v4598 = vunpack.c.l.b16 %v4543
        %v4599 = vunpack.c.h.b16 %v4543
        %v4600 = vunpack.c.l.b16 %v4544
        %v4601 = vunpack.c.h.b16 %v4544
        %v4602 = vunpack.c.l.b16 %v4545
        %v4603 = vunpack.c.h.b16 %v4545
        %v4604 = vunpack.c.l.b16 %v4546
        %v4605 = vunpack.c.h.b16 %v4546
        %v4606 = vunpack.c.l.b16 %v4547
        %v4607 = vunpack.c.h.b16 %v4547
        %v4608 = vunpack.c.l.b16 %v4548
        %v4609 = vunpack.c.h.b16 %v4548
        %v4610 = vpack.c.b16 %v4580, %v4578
        %v4611 = vpack.c.b16 %v4581, %v4579
        %v4612 = vpack.c.b16 %v4584, %v4582
        %v4613 = vpack.c.b16 %v4585, %v4583
        %v4614 = vpack.c.b16 %v4588, %v4586
        %v4615 = vpack.c.b16 %v4589, %v4587
        %v4616 = vpack.c.b16 %v4592, %v4590
        %v4617 = vpack.c.b16 %v4593, %v4591
        %v4618 = vpack.c.b16 %v4596, %v4594
        %v4619 = vpack.c.b16 %v4597, %v4595
        %v4620 = vpack.c.b16 %v4600, %v4598
        %v4621 = vpack.c.b16 %v4601, %v4599
        %v4622 = vpack.c.b16 %v4604, %v4602
        %v4623 = vpack.c.b16 %v4605, %v4603
        %v4624 = vpack.c.b16 %v4608, %v4606
        %v4625 = vpack.c.b16 %v4609, %v4607
        %4642 = vmatprep.subr.bf16.mxu0 %v4611
        %4643 = vmatpush1.bf16.msra.mxu0 %v4610
        %4644 = vmatprep.subr.bf16.mxu0 %v4613
        %4645 = vmatpush1.bf16.msra.mxu0 %v4612
        %4646 = vmatprep.subr.bf16.mxu0 %v4615
        %4647 = vmatpush1.bf16.msra.mxu0 %v4614
        %4648 = vmatprep.subr.bf16.mxu0 %v4617
        %4649 = vmatpush1.bf16.msra.mxu0 %v4616
        %4650 = vmatprep.subr.bf16.mxu0 %v4619
        %4651 = vmatpush1.bf16.msra.mxu0 %v4618
        %4652 = vmatprep.subr.bf16.mxu0 %v4621
        %4653 = vmatpush1.bf16.msra.mxu0 %v4620
        %4654 = vmatprep.subr.bf16.mxu0 %v4623
        %4655 = vmatpush1.bf16.msra.mxu0 %v4622
        %4656 = vmatprep.subr.bf16.mxu0 %v4625
        %4657 = vmatpush1.bf16.msra.mxu0 %v4624
        %4658 = vmatprep.subr.bf16.mxu0 0
        %4659 = vmatpush1.bf16.msra.mxu0 0
        %4660 = vmatprep.subr.bf16.mxu0 0
        %4661 = vmatpush1.bf16.msra.mxu0 0
        %4662 = vmatprep.subr.bf16.mxu0 0
        %4663 = vmatpush1.bf16.msra.mxu0 0
        %4664 = vmatprep.subr.bf16.mxu0 0
        %4665 = vmatpush1.bf16.msra.mxu0 0
        %4666 = vmatprep.subr.bf16.mxu0 0
        %4667 = vmatpush1.bf16.msra.mxu0 0
        %4668 = vmatprep.subr.bf16.mxu0 0
        %4669 = vmatpush1.bf16.msra.mxu0 0
        %4670 = vmatprep.subr.bf16.mxu0 0
        %4671 = vmatpush1.bf16.msra.mxu0 0
        %4672 = vmatprep.subr.bf16.mxu0 0
        %4673 = vmatpush1.bf16.msra.mxu0 0
        %4674 = vmatprep.mubr.bf16.mxu0 0
        %4675 = vmatmul.mubr.bf16.gmra.mrb[0].mxu0 %v4549
        %v4676 = vpop.f32.mrb[0].mxu0
        %v4677 = vadd.f32 %v4555, %v4676
        %v4678 = vpop.f32.mrb[0].mxu0
        %v4679 = vadd.f32 %v4559, %v4678
        %v4680 = vpop.f32.mrb[0].mxu0
        %v4681 = vadd.f32 %v4555, %v4680
        %v4682 = vpop.f32.mrb[0].mxu0
        %v4683 = vadd.f32 %v4559, %v4682
        %4684 = vdwg.mxu0
        %v4685 = vsub.f32 0.0, %v4677
        %v4686 = vsub.f32 0.0, %v4679
        %v4687 = vsub.f32 0.0, %v4681
        %v4688 = vsub.f32 0.0, %v4683
        %v4689 = vmul.f32 %v4685, 1.442695
        %v4690 = vpow.pop %v4689
        %v4691 = vmul.f32 %v4686, 1.442695
        %v4692 = vpow.pop %v4691
        %v4693 = vmul.f32 %v4687, 1.442695
        %v4694 = vpow.pop %v4693
        %v4695 = vmul.f32 %v4688, 1.442695
        %v4696 = vpow.pop %v4695
        %v4697 = vadd.f32 %v4690, 1.0
        %v4698 = vadd.f32 %v4692, 1.0
        %v4699 = vadd.f32 %v4694, 1.0
        %v4700 = vadd.f32 %v4696, 1.0
        %v4701 = vrcp.pop %v4697
        %v4702 = vrcp.pop %v4698
        %v4703 = vrcp.pop %v4699
        %v4704 = vrcp.pop %v4700
        %v4705 = vmul.f32 %v4677, %v4701
        %v4706 = vmul.f32 %v4679, %v4702
        %v4707 = vmul.f32 %v4681, %v4703
        %v4708 = vmul.f32 %v4683, %v4704
        %v4709 = vld [vmem:[%s1869] sm:$0xf]
        %v4710 = vld [vmem:[%s1869 + $0x4] sm:$0xf]
        %v4711 = vld [vmem:[%s1869 + $0x8] sm:$0xf]
        %v4712 = vld [vmem:[%s1869 + $0xc] sm:$0xf]
        %v4713 = vld [vmem:[%s1869 + $0x10] sm:$0xf]
        %v4714 = vld [vmem:[%s1869 + $0x14] sm:$0xf]
        %v4715 = vld [vmem:[%s1869 + $0x18] sm:$0xf]
        %v4716 = vld [vmem:[%s1869 + $0x1c] sm:$0xf]
        %v4717 = vld [vmem:[%s1869 + $0x20] sm:$0xf]
        %v4718 = vld [vmem:[%s1869 + $0x24] sm:$0xf]
        %v4719 = vld [vmem:[%s1869 + $0x28] sm:$0xf]
        %v4720 = vld [vmem:[%s1869 + $0x2c] sm:$0xf]
        %v4721 = vld [vmem:[%s1869 + $0x30] sm:$0xf]
        %v4722 = vld [vmem:[%s1869 + $0x34] sm:$0xf]
        %v4723 = vld [vmem:[%s1869 + $0x38] sm:$0xf]
        %v4724 = vld [vmem:[%s1869 + $0x3c] sm:$0xf]
        %v4725 = vld [vmem:[%s1869 + $0x40] sm:$0xf]
        %v4726 = vld [vmem:[%s1869 + $0x44] sm:$0xf]
        %v4727 = vld [vmem:[%s1869 + $0x48] sm:$0xf]
        %v4728 = vld [vmem:[%s1869 + $0x4c] sm:$0xf]
        %v4729 = vld [vmem:[%s1869 + $0x50] sm:$0xf]
        %v4730 = vld [vmem:[%s1869 + $0x54] sm:$0xf]
        %v4731 = vld [vmem:[%s1869 + $0x58] sm:$0xf]
        %v4732 = vld [vmem:[%s1869 + $0x5c] sm:$0xf]
        %v4733 = vld [vmem:[%s1869 + $0x60] sm:$0xf]
        %v4734 = vld [vmem:[%s1869 + $0x64] sm:$0xf]
        %v4735 = vld [vmem:[%s1869 + $0x68] sm:$0xf]
        %v4736 = vld [vmem:[%s1869 + $0x6c] sm:$0xf]
        %v4737 = vld [vmem:[%s1869 + $0x70] sm:$0xf]
        %v4738 = vld [vmem:[%s1869 + $0x74] sm:$0xf]
        %v4739 = vld [vmem:[%s1869 + $0x78] sm:$0xf]
        %v4740 = vld [vmem:[%s1869 + $0x7c] sm:$0xf]
        %v4741 = vpack.c.bf16 %v4707, %v4705
        %v4742 = vpack.c.bf16 %v4708, %v4706
        %v4743 = vld [vmem:[%s1877] sm:$0x1]
        %v4745 = vlaneseq
        %v4746 = vshrl.u32 %v4745, 7
        %v4747 = vsub.s32 0, %v4746
        %v4748 = vrot.slane %v4743, %v4747
        %v4782 = vunpack.c.l.b16 %v4709
        %v4783 = vunpack.c.l.b16 %v4710
        %v4784 = vunpack.c.l.b16 %v4711
        %v4785 = vunpack.c.l.b16 %v4712
        %v4786 = vunpack.c.l.b16 %v4713
        %v4787 = vunpack.c.l.b16 %v4714
        %v4788 = vunpack.c.l.b16 %v4715
        %v4789 = vunpack.c.l.b16 %v4716
        %v4790 = vunpack.c.l.b16 %v4717
        %v4791 = vunpack.c.l.b16 %v4718
        %v4792 = vunpack.c.l.b16 %v4719
        %v4793 = vunpack.c.l.b16 %v4720
        %v4794 = vunpack.c.l.b16 %v4721
        %v4795 = vunpack.c.l.b16 %v4722
        %v4796 = vunpack.c.l.b16 %v4723
        %v4797 = vunpack.c.l.b16 %v4724
        %v4798 = vunpack.c.l.b16 %v4725
        %v4799 = vunpack.c.l.b16 %v4726
        %v4800 = vunpack.c.l.b16 %v4727
        %v4801 = vunpack.c.l.b16 %v4728
        %v4802 = vunpack.c.l.b16 %v4729
        %v4803 = vunpack.c.l.b16 %v4730
        %v4804 = vunpack.c.l.b16 %v4731
        %v4805 = vunpack.c.l.b16 %v4732
        %v4806 = vunpack.c.l.b16 %v4733
        %v4807 = vunpack.c.l.b16 %v4734
        %v4808 = vunpack.c.l.b16 %v4735
        %v4809 = vunpack.c.l.b16 %v4736
        %v4810 = vunpack.c.l.b16 %v4737
        %v4811 = vunpack.c.l.b16 %v4738
        %v4812 = vunpack.c.l.b16 %v4739
        %v4813 = vunpack.c.l.b16 %v4740
        %v4814 = vpack.c.b16 %v4783, %v4782
        %v4815 = vpack.c.b16 %v4785, %v4784
        %v4816 = vpack.c.b16 %v4787, %v4786
        %v4817 = vpack.c.b16 %v4789, %v4788
        %v4818 = vpack.c.b16 %v4791, %v4790
        %v4819 = vpack.c.b16 %v4793, %v4792
        %v4820 = vpack.c.b16 %v4795, %v4794
        %v4821 = vpack.c.b16 %v4797, %v4796
        %v4822 = vpack.c.b16 %v4799, %v4798
        %v4823 = vpack.c.b16 %v4801, %v4800
        %v4824 = vpack.c.b16 %v4803, %v4802
        %v4825 = vpack.c.b16 %v4805, %v4804
        %v4826 = vpack.c.b16 %v4807, %v4806
        %v4827 = vpack.c.b16 %v4809, %v4808
        %v4828 = vpack.c.b16 %v4811, %v4810
        %v4829 = vpack.c.b16 %v4813, %v4812
        %4846 = vmatprep.subr.bf16.mxu0 0
        %4847 = vmatpush1.bf16.msra.mxu0 %v4814
        %4848 = vmatprep.subr.bf16.mxu0 0
        %4849 = vmatpush1.bf16.msra.mxu0 %v4815
        %4850 = vmatprep.subr.bf16.mxu0 0
        %4851 = vmatpush1.bf16.msra.mxu0 %v4816
        %4852 = vmatprep.subr.bf16.mxu0 0
        %4853 = vmatpush1.bf16.msra.mxu0 %v4817
        %4854 = vmatprep.subr.bf16.mxu0 0
        %4855 = vmatpush1.bf16.msra.mxu0 %v4818
        %4856 = vmatprep.subr.bf16.mxu0 0
        %4857 = vmatpush1.bf16.msra.mxu0 %v4819
        %4858 = vmatprep.subr.bf16.mxu0 0
        %4859 = vmatpush1.bf16.msra.mxu0 %v4820
        %4860 = vmatprep.subr.bf16.mxu0 0
        %4861 = vmatpush1.bf16.msra.mxu0 %v4821
        %4862 = vmatprep.subr.bf16.mxu0 0
        %4863 = vmatpush1.bf16.msra.mxu0 %v4822
        %4864 = vmatprep.subr.bf16.mxu0 0
        %4865 = vmatpush1.bf16.msra.mxu0 %v4823
        %4866 = vmatprep.subr.bf16.mxu0 0
        %4867 = vmatpush1.bf16.msra.mxu0 %v4824
        %4868 = vmatprep.subr.bf16.mxu0 0
        %4869 = vmatpush1.bf16.msra.mxu0 %v4825
        %4870 = vmatprep.subr.bf16.mxu0 0
        %4871 = vmatpush1.bf16.msra.mxu0 %v4826
        %4872 = vmatprep.subr.bf16.mxu0 0
        %4873 = vmatpush1.bf16.msra.mxu0 %v4827
        %4874 = vmatprep.subr.bf16.mxu0 0
        %4875 = vmatpush1.bf16.msra.mxu0 %v4828
        %4876 = vmatprep.subr.bf16.mxu0 0
        %4877 = vmatpush1.bf16.msra.mxu0 %v4829
        %4878 = vmatprep.mubr.bf16.mxu0 %v4742
        %4879 = vmatmul.mubr.bf16.gmra.mrb[0].mxu0 %v4741
        %v4880 = vpop.f32.mrb[0].mxu0
        %v4881 = vadd.f32 %v4748, %v4880
        %v4882 = vpop.f32.mrb[0].mxu0
        %v4883 = vpop.f32.mrb[0].mxu0
        %v4884 = vadd.f32 %v4748, %v4883
        %v4885 = vpop.f32.mrb[0].mxu0
        %4886 = vdwg.mxu0
        %v4887 = vmul.f32 %v4881, 0.5
        %v4888 = vmul.f32 %v4884, 0.5
        %v4889 = vadd.f32 %v4491, %v4887
        %v4890 = vadd.f32 %v4492, %v4888
        %v4891 = vld [vmem:[%s1885] sm:$0x1]
        %v4892 = vld [vmem:[%s1893] sm:$0x1]
        %4893 = vadd.xlane.f32.xlu0 %v4889
        %v4894 = vpop.xlane.xlu0 %4893
        %4895 = vadd.xlane.f32.xlu0 %v4890
        %v4896 = vpop.xlane.xlu0 %4895
        %v4897 = vmul.f32 %v4894, %v2240
        %v4898 = vmul.f32 %v4896, %v2240
        %v4899 = vsub.f32 %v4889, %v4897
        %v4900 = vsub.f32 %v4890, %v4898
        %v4901 = vmul.f32 %v4899, %v4899
        %v4902 = vmul.f32 %v4900, %v4900
        %4903 = vadd.xlane.f32.xlu0 %v4901
        %v4904 = vpop.xlane.xlu0 %4903
        %4905 = vadd.xlane.f32.xlu0 %v4902
        %v4906 = vpop.xlane.xlu0 %4905
        %v4907 = vmul.f32 %v4904, %v2240
        %v4908 = vmul.f32 %v4906, %v2240
        %v4909 = vadd.f32 %v4907, 1e-05
        %v4910 = vadd.f32 %v4908, 1e-05
        %v4911 = vrsqrt.pop %v4909
        %v4912 = vrsqrt.pop %v4910
        %v4913 = vmul.f32 %v4899, %v4911
        %v4914 = vmul.f32 %v4900, %v4912
        %v4916 = vlaneseq
        %v4917 = vshrl.u32 %v4916, 7
        %v4918 = vsub.s32 0, %v4917
        %v4919 = vrot.slane %v4891, %v4918
        %v4921 = vmul.f32 %v4913, %v4919
        %v4922 = vmul.f32 %v4914, %v4919
        %v4924 = vlaneseq
        %v4925 = vshrl.u32 %v4924, 7
        %v4926 = vsub.s32 0, %v4925
        %v4927 = vrot.slane %v4892, %v4926
        %v4929 = vadd.f32 %v4921, %v4927
        %v4930 = vadd.f32 %v4922, %v4927
        %4931 = vst [vmem:[#allocation2] sm:$0xff] %v4929
        %4932 = vst [vmem:[#allocation2 + $0x8] sm:$0xff] %v4930
        %p4933 = scmp.eq.s32.totalorder %s98, 4
        // Predicated region
        $region293: #{classifier_forward.1} parent=167 // pred_check
          %p4934 = pneg %p4933
        $region294: #{classifier_forward.1} parent=167 // pred_check_branch
          %4936 = sbr.rel (%p4934) target = $region296
        $region295: #{classifier_forward.1} parent=167 // pred_region
          %v4937 = vld [vmem:[%s7] sm:$0xff]
          %v4938 = vld [vmem:[%s7 + $0x8] sm:$0xff]
          %v4939 = vld [vmem:[%s7 + $0x10] sm:$0xff]
          %v4940 = vld [vmem:[%s7 + $0x18] sm:$0xff]
          %v4941 = vld [vmem:[%s7 + $0x20] sm:$0xff]
          %v4942 = vld [vmem:[%s7 + $0x28] sm:$0xff]
          %v4943 = vld [vmem:[%s7 + $0x30] sm:$0xff]
          %v4944 = vld [vmem:[%s7 + $0x38] sm:$0xff]
          %v4945 = vld [vmem:[%s7 + $0x40] sm:$0xff]
          %v4946 = vld [vmem:[%s7 + $0x48] sm:$0xff]
          %v4947 = vld [vmem:[%s7 + $0x50] sm:$0xff]
          %v4948 = vld [vmem:[%s7 + $0x58] sm:$0xff]
          %v4949 = vld [vmem:[%s7 + $0x60] sm:$0xff]
          %v4950 = vld [vmem:[%s7 + $0x68] sm:$0xff]
          %v4951 = vld [vmem:[%s7 + $0x70] sm:$0xff]
          %v4952 = vld [vmem:[%s7 + $0x78] sm:$0xff]
          %v4953 = vld [vmem:[#allocation3] sm:$0x1]
          %v4955 = vlaneseq
          %v4956 = vshrl.u32 %v4955, 7
          %v4957 = vsub.s32 0, %v4956
          %v4958 = vrot.slane %v4953, %v4957
          %4960 = vmatprep.subr.mxu0 0.0
          %4961 = vmatpush1.msra.mxu0 %v4937
          %4962 = vmatprep.subr.mxu0 0.0
          %4963 = vmatpush1.msra.mxu0 %v4938
          %4964 = vmatprep.subr.mxu0 0.0
          %4965 = vmatpush1.msra.mxu0 %v4939
          %4966 = vmatprep.subr.mxu0 0.0
          %4967 = vmatpush1.msra.mxu0 %v4940
          %4968 = vmatprep.subr.mxu0 0.0
          %4969 = vmatpush1.msra.mxu0 %v4941
          %4970 = vmatprep.subr.mxu0 0.0
          %4971 = vmatpush1.msra.mxu0 %v4942
          %4972 = vmatprep.subr.mxu0 0.0
          %4973 = vmatpush1.msra.mxu0 %v4943
          %4974 = vmatprep.subr.mxu0 0.0
          %4975 = vmatpush1.msra.mxu0 %v4944
          %4976 = vmatprep.subr.mxu0 0.0
          %4977 = vmatpush1.msra.mxu0 %v4945
          %4978 = vmatprep.subr.mxu0 0.0
          %4979 = vmatpush1.msra.mxu0 %v4946
          %4980 = vmatprep.subr.mxu0 0.0
          %4981 = vmatpush1.msra.mxu0 %v4947
          %4982 = vmatprep.subr.mxu0 0.0
          %4983 = vmatpush1.msra.mxu0 %v4948
          %4984 = vmatprep.subr.mxu0 0.0
          %4985 = vmatpush1.msra.mxu0 %v4949
          %4986 = vmatprep.subr.mxu0 0.0
          %4987 = vmatpush1.msra.mxu0 %v4950
          %4988 = vmatprep.subr.mxu0 0.0
          %4989 = vmatpush1.msra.mxu0 %v4951
          %4990 = vmatprep.subr.mxu0 0.0
          %4991 = vmatpush1.msra.mxu0 %v4952
          %4992 = vmatprep.subr.mxu0 0.0
          %4993 = vmatpush1.msra.mxu0 0.0
          %4994 = vmatprep.subr.mxu0 0.0
          %4995 = vmatpush1.msra.mxu0 0.0
          %4996 = vmatprep.subr.mxu0 0.0
          %4997 = vmatpush1.msra.mxu0 0.0
          %4998 = vmatprep.subr.mxu0 0.0
          %4999 = vmatpush1.msra.mxu0 0.0
          %5000 = vmatprep.subr.mxu0 0.0
          %5001 = vmatpush1.msra.mxu0 0.0
          %5002 = vmatprep.subr.mxu0 0.0
          %5003 = vmatpush1.msra.mxu0 0.0
          %5004 = vmatprep.subr.mxu0 0.0
          %5005 = vmatpush1.msra.mxu0 0.0
          %5006 = vmatprep.subr.mxu0 0.0
          %5007 = vmatpush1.msra.mxu0 0.0
          %5008 = vmatprep.subr.mxu0 0.0
          %5009 = vmatpush1.msra.mxu0 0.0
          %5010 = vmatprep.subr.mxu0 0.0
          %5011 = vmatpush1.msra.mxu0 0.0
          %5012 = vmatprep.subr.mxu0 0.0
          %5013 = vmatpush1.msra.mxu0 0.0
          %5014 = vmatprep.subr.mxu0 0.0
          %5015 = vmatpush1.msra.mxu0 0.0
          %5016 = vmatprep.subr.mxu0 0.0
          %5017 = vmatpush1.msra.mxu0 0.0
          %5018 = vmatprep.subr.mxu0 0.0
          %5019 = vmatpush1.msra.mxu0 0.0
          %5020 = vmatprep.subr.mxu0 0.0
          %5021 = vmatpush1.msra.mxu0 0.0
          %5022 = vmatprep.subr.mxu0 0.0
          %5023 = vmatpush1.msra.mxu0 0.0
          %5024 = vmatprep.mubr.f32.mxu0 0.0
          %5025 = vmatmul.mubr.f32.gmra.mrb[0].mxu0 %v4929
          %v5026 = vpop.f32.mrb[0].mxu0
          %v5027 = vadd.f32 %v4958, %v5026
          %v5028 = vpop.f32.mrb[0].mxu0
          %5029 = vmatprep.mubr.f32.mxu0 0.0
          %5030 = vmatmul.mubr.f32.gmra.mrb[0].mxu0 %v4930
          %v5031 = vpop.f32.mrb[0].mxu0
          %v5032 = vadd.f32 %v4958, %v5031
          %v5033 = vpop.f32.mrb[0].mxu0
          %5034 = vdwg.mxu0
          %vm5035 = vcmask 7168
          %v5036 = vsel %vm5035, %v5027, -inf
          %v5037 = vsel %vm5035, %v5032, -inf
          %v5038 = vmax.f32 %v5036, %v5037
          %v5039 = vrot.slane %v5038, 4
          %v5040 = vmax.f32 %v5038, %v5039
          %v5041 = vrot.slane %v5040, 2
          %v5042 = vmax.f32 %v5040, %v5041
          %v5043 = vrot.slane %v5042, 1
          %v5044 = vmax.f32 %v5042, %v5043
          %v5045 = vsub.f32 %v5027, %v5044
          %v5046 = vsub.f32 %v5032, %v5044
          %v5047 = vmul.f32 %v5045, 1.442695
          %v5048 = vpow.pop %v5047
          %v5049 = vmul.f32 %v5046, 1.442695
          %v5050 = vpow.pop %v5049
          %v5051 = vsel %vm5035, %v5048, 0.0
          %v5052 = vsel %vm5035, %v5050, 0.0
          %v5053 = vadd.f32 %v5051, %v5052
          %v5054 = vrot.slane %v5053, 4
          %v5055 = vadd.f32 %v5053, %v5054
          %v5056 = vrot.slane %v5055, 2
          %v5057 = vadd.f32 %v5055, %v5056
          %v5058 = vrot.slane %v5057, 1
          %v5059 = vadd.f32 %v5057, %v5058
          %v5060 = vrcp.pop %v5059
          %v5061 = vmul.f32 %v5048, %v5060
          %v5062 = vmul.f32 %v5050, %v5060
          %5064 = vset.pattern.permute.xlu0 0
          %5065 = vperm.xlu0 %5064, %v5061
          %v5066 = vpop.permute.xlu0 %5065
          %5069 = vset.pattern.permute.xlu0 0
          %5070 = vperm.xlu0 %5069, %v5062
          %v5071 = vpop.permute.xlu0 %5070
          %v5073 = vmul.f32 %v4929, %v5066
          %v5074 = vmul.f32 %v4930, %v5071
          %v5075 = vadd.f32 %v5073, %v5074
          %v5076 = vrot.slane %v5075, 4
          %v5077 = vadd.f32 %v5075, %v5076
          %v5078 = vrot.slane %v5077, 2
          %v5079 = vadd.f32 %v5077, %v5078
          %v5080 = vrot.slane %v5079, 1
          %v5081 = vadd.f32 %v5079, %v5080
          %v5082 = vld [vmem:[%s11] sm:$0xff]
          %v5083 = vld [vmem:[%s11 + $0x8] sm:$0xff]
          %v5084 = vld [vmem:[%s11 + $0x10] sm:$0xff]
          %v5085 = vld [vmem:[%s11 + $0x18] sm:$0xff]
          %v5086 = vld [vmem:[%s11 + $0x20] sm:$0xff]
          %v5087 = vld [vmem:[%s11 + $0x28] sm:$0xff]
          %v5088 = vld [vmem:[%s11 + $0x30] sm:$0xff]
          %v5089 = vld [vmem:[%s11 + $0x38] sm:$0xff]
          %v5090 = vld [vmem:[%s11 + $0x40] sm:$0xff]
          %v5091 = vld [vmem:[%s11 + $0x48] sm:$0xff]
          %v5092 = vld [vmem:[%s11 + $0x50] sm:$0xff]
          %v5093 = vld [vmem:[%s11 + $0x58] sm:$0xff]
          %v5094 = vld [vmem:[%s11 + $0x60] sm:$0xff]
          %v5095 = vld [vmem:[%s11 + $0x68] sm:$0xff]
          %v5096 = vld [vmem:[%s11 + $0x70] sm:$0xff]
          %v5097 = vld [vmem:[%s11 + $0x78] sm:$0xff]
          %v5098 = vld [vmem:[%s13] sm:$0x1]
          %5099 = vmatprep.subr.mxu0 0.0
          %5100 = vmatpush1.msra.mxu0 %v5082
          %5101 = vmatprep.subr.mxu0 0.0
          %5102 = vmatpush1.msra.mxu0 %v5083
          %5103 = vmatprep.subr.mxu0 0.0
          %5104 = vmatpush1.msra.mxu0 %v5084
          %5105 = vmatprep.subr.mxu0 0.0
          %5106 = vmatpush1.msra.mxu0 %v5085
          %5107 = vmatprep.subr.mxu0 0.0
          %5108 = vmatpush1.msra.mxu0 %v5086
          %5109 = vmatprep.subr.mxu0 0.0
          %5110 = vmatpush1.msra.mxu0 %v5087
          %5111 = vmatprep.subr.mxu0 0.0
          %5112 = vmatpush1.msra.mxu0 %v5088
          %5113 = vmatprep.subr.mxu0 0.0
          %5114 = vmatpush1.msra.mxu0 %v5089
          %5115 = vmatprep.subr.mxu0 0.0
          %5116 = vmatpush1.msra.mxu0 %v5090
          %5117 = vmatprep.subr.mxu0 0.0
          %5118 = vmatpush1.msra.mxu0 %v5091
          %5119 = vmatprep.subr.mxu0 0.0
          %5120 = vmatpush1.msra.mxu0 %v5092
          %5121 = vmatprep.subr.mxu0 0.0
          %5122 = vmatpush1.msra.mxu0 %v5093
          %5123 = vmatprep.subr.mxu0 0.0
          %5124 = vmatpush1.msra.mxu0 %v5094
          %5125 = vmatprep.subr.mxu0 0.0
          %5126 = vmatpush1.msra.mxu0 %v5095
          %5127 = vmatprep.subr.mxu0 0.0
          %5128 = vmatpush1.msra.mxu0 %v5096
          %5129 = vmatprep.subr.mxu0 0.0
          %5130 = vmatpush1.msra.mxu0 %v5097
          %5131 = vmatprep.subr.mxu0 0.0
          %5132 = vmatpush1.msra.mxu0 0.0
          %5133 = vmatprep.subr.mxu0 0.0
          %5134 = vmatpush1.msra.mxu0 0.0
          %5135 = vmatprep.subr.mxu0 0.0
          %5136 = vmatpush1.msra.mxu0 0.0
          %5137 = vmatprep.subr.mxu0 0.0
          %5138 = vmatpush1.msra.mxu0 0.0
          %5139 = vmatprep.subr.mxu0 0.0
          %5140 = vmatpush1.msra.mxu0 0.0
          %5141 = vmatprep.subr.mxu0 0.0
          %5142 = vmatpush1.msra.mxu0 0.0
          %5143 = vmatprep.subr.mxu0 0.0
          %5144 = vmatpush1.msra.mxu0 0.0
          %5145 = vmatprep.subr.mxu0 0.0
          %5146 = vmatpush1.msra.mxu0 0.0
          %5147 = vmatprep.subr.mxu0 0.0
          %5148 = vmatpush1.msra.mxu0 0.0
          %5149 = vmatprep.subr.mxu0 0.0
          %5150 = vmatpush1.msra.mxu0 0.0
          %5151 = vmatprep.subr.mxu0 0.0
          %5152 = vmatpush1.msra.mxu0 0.0
          %5153 = vmatprep.subr.mxu0 0.0
          %5154 = vmatpush1.msra.mxu0 0.0
          %5155 = vmatprep.subr.mxu0 0.0
          %5156 = vmatpush1.msra.mxu0 0.0
          %5157 = vmatprep.subr.mxu0 0.0
          %5158 = vmatpush1.msra.mxu0 0.0
          %5159 = vmatprep.subr.mxu0 0.0
          %5160 = vmatpush1.msra.mxu0 0.0
          %5161 = vmatprep.subr.mxu0 0.0
          %5162 = vmatpush1.msra.mxu0 0.0
          %5163 = vmatprep.mubr.f32.mxu0 0.0
          %5164 = vmatmul.mubr.f32.gmra.mrb[0].mxu0 %v5081
          %v5165 = vpop.f32.mrb[0].mxu0
          %v5166 = vadd.f32 %v5098, %v5165
          %v5167 = vpop.f32.mrb[0].mxu0
          %5168 = vdwg.mxu0
          %v5169 = vmax.f32 %v5166, 0.0
          %vm5170 = vcmask 516096
          %5171 = vst.msk [vmem:[%s2114] sm:$0x1] %vm5170, %v5169
        $region296: #{classifier_forward.1} parent=167 // pred_fallthru
          _
        %s5172 = sand.u32 %s1045, 1
        %s5173 = scalar_lea.sflag [#allocation6], %s5172
        %s5174 = sand.u32 %s1045, 1
        %s5175 = scalar_lea.vmem [#allocation37], %s5174
        // Predicated region
        $region297: #{classifier_forward.1} parent=167 // pred_check
          %p5176 = pneg %p1055
        $region298: #{classifier_forward.1} parent=167 // pred_check_branch
          %5178 = sbr.rel (%p5176) target = $region300
        $region299: #{classifier_forward.1} parent=167 // pred_region
          %s5180 = ssub.s32 16, 16
          %5181 = vsyncadd %s5173, %s5180
          %s5182 = smul.addr %s97, 16
          %s5183 = scalar_lea.hbm %s75, %s5182
          %s5185 = sshll.u32 %s5175, 4
          %s5186 = int_to_ptr.vmem [resolvable:$true] %s5185
          %5188 = dma.vmem_to_hbm [thread:$0]  %s5186, 16, %s5183, %s5173
        $region300: #{classifier_forward.1} parent=167 // pred_fallthru
          _
      $region168: #{classifier_forward.1} parent=5 // pred_fallthru
        _
      %p5189 = scmp.le.s32.totalorder 2, %s88
      // Predicated region
      $region301: #{classifier_forward.1} parent=5 // pred_check
        %p5190 = pneg %p5189
      $region302: #{classifier_forward.1} parent=5 // pred_check_branch
        %5192 = sbr.rel (%p5190) target = $region304
      $region303: #{classifier_forward.1} parent=5 // pred_region
        %s5193 = ssub.s32 %s88, 2
        // Predicated region
        $region305: #{classifier_forward.1} parent=303 // pred_check
          %p5194 = pneg %p1061
        $region306: #{classifier_forward.1} parent=303 // pred_check_branch
          %5196 = sbr.rel (%p5194) target = $region308
        $region307: #{classifier_forward.1} parent=303 // pred_region
          %s5197 = sand.u32 %s1046, 1
          %s5198 = scalar_lea.sflag [#allocation6], %s5197
          %s5199 = sand.u32 %s1046, 1
          %s5200 = scalar_lea.vmem [#allocation37], %s5199
          %5201 = dma.done %s5198, 16
        $region308: #{classifier_forward.1} parent=303 // pred_fallthru
          _
      $region304: #{classifier_forward.1} parent=5 // pred_fallthru
        _
    $region6: #{classifier_forward.1} parent=1 // loop_footer
      %s92 = sadd.s32 1, %s88
    $region7: #{classifier_forward.1} parent=1 // loop_footer_branch
      %87 = sbr.rel target = $region3
    $region8: #{classifier_forward.1} parent=1 // loop_exit
      _
    %5202 = vsyncpa [#allocation5], 1
    %s5203 = scalar_lea.sflag [#allocation5], 1
    %5204 = vsyncpa %s5203, 1
    %5205 = vsyncpa [#allocation8], 1
    %5206 = vsyncpa [#allocation6], 1
    %s5207 = scalar_lea.sflag [#allocation6], 1
    %5208 = vsyncpa %s5207, 1

</llo_original>
